<compile_context>
chip_gen: v7x
topology: tpu7x:2x2x1
jax: 0.10.0
libtpu: 0.0.40
codegen_flags: <defaults>
</compile_context>

<pallas_src>
import jax
import jax.numpy as jnp
from jax import lax
from jax.experimental import pallas as pl
from jax.experimental.pallas import tpu as pltpu


K_TABLE = 64          # reference-energy samples in the (synthetic) NIST-style table
LANES = 128           # vreg lane width
SUB_ROWS = 32         # rows per inner-loop step: 4 vregs/array -> ~30 live vregs, no spill
MAX_ROW_TILE = 1024   # 1024 x 128 x 4 B = 512 KiB/block; x2 arrays x2 buffers = 2 MiB VMEM


def _round_up(x, m):
    return ((x + m - 1) // m) * m


def _multi_tensorcore():
    """True on chips where a 'parallel' grid axis is sharded across >1 TensorCore (v4/v5p/v7x)."""
    try:
        kind = jax.devices()[0].device_kind.lower()
    except Exception:
        return False
    if "lite" in kind or "v5e" in kind or "v6" in kind:
        return False
    return any(tag in kind for tag in ("v7", "v4", "v5p"))


# ----------------------------------------------------------------------------- kernel
def _scint_kernel(scal_ref, tbl_ref, e_ref, o_ref):
    """scal_ref:(4,) SMEM [th, E0, 1/dE, dE].
    tbl_ref:(4, K-1) SMEM packed per-segment coeffs [mu0; mu_slope; mu_en0; mu_en_slope].
    e_ref / o_ref:(row_tile, LANES) VMEM."""
    th = scal_ref[0]
    e0 = scal_ref[1]
    inv_de = scal_ref[2]
    de = scal_ref[3]

    k_seg = tbl_ref.shape[1]             # number of table segments (static)
    n_sub = e_ref.shape[0] // SUB_ROWS   # inner steps over 32-row sub-blocks (static)

    def sub_block(g, carry):
        r0 = pl.multiple_of(g * SUB_ROWS, SUB_ROWS)
        e = e_ref[pl.ds(r0, SUB_ROWS), :]                        # (32, 128) f32

        # Analytic segment index on the uniform grid (replaces searchsorted).
        # Clamp the FLOAT before the int cast so out-of-range inputs cannot overflow int32.
        u = jnp.clip((e - e0) * inv_de, 0.0, jnp.float32(k_seg - 1))
        idx = u.astype(jnp.int32)                                # in [0, k_seg-1]
        dx = e - (e0 + idx.astype(jnp.float32) * de)

        # Gather per-segment [value, slope] pairs with an unrolled select sweep.
        # Accumulators start from segment 0, so the sweep starts at k=1 (review item 2).
        mu0 = jnp.broadcast_to(tbl_ref[0, 0], e.shape)
        smu = jnp.broadcast_to(tbl_ref[1, 0], e.shape)
        men0 = jnp.broadcast_to(tbl_ref[2, 0], e.shape)
        sen = jnp.broadcast_to(tbl_ref[3, 0], e.shape)
        for k in range(1, k_seg):                                # unrolled; 1 cmp + 4 selects / k
            sel = idx == k
            mu0 = jnp.where(sel, tbl_ref[0, k], mu0)
            smu = jnp.where(sel, tbl_ref[1, k], smu)
            men0 = jnp.where(sel, tbl_ref[2, k], men0)
            sen = jnp.where(sel, tbl_ref[3, k], sen)

        # Linear interpolation (same formula as xcal.linear_interp).
        mu = mu0 + smu * dx                                      # linear attenuation coeff [1/cm]
        mu_en = men0 + sen * dx                                  # linear energy-absorption coeff

        # Beer's-law scintillator conversion (exact f32 divide; exp on the EUP).
        o_ref[pl.ds(r0, SUB_ROWS), :] = (mu_en / mu) * e * (1.0 - jnp.exp(-mu * th))
        return carry

    lax.fori_loop(0, n_sub, sub_block, 0)


# ----------------------------------------------------------------------------- wrapper
@jax.jit
def scintillator_response(energies, thickness, ref_E, mu_table, mu_en_table):
    """energies: (N,) f32 keV.  Returns (N,) f32 scintillator response."""
    n = energies.shape[0]
    k = ref_E.shape[0]

    # --- one-time table prep (plain JAX): uniform-grid resample + precomputed slopes ---
    # TODO(synk): real NIST tables (K-edges, duplicated energies) should be resampled onto a much
    # finer uniform grid (K >> 64) here; the synthetic demo table is already uniform so this is exact.
    ref_E = ref_E.astype(jnp.float32)
    e0 = ref_E[0]
    de = (ref_E[-1] - e0) / jnp.float32(k - 1)
    inv_de = 1.0 / de
    xg = e0 + de * jnp.arange(k, dtype=jnp.float32)              # == ref_E when already uniform
    mu_u = jnp.interp(xg, ref_E, mu_table.astype(jnp.float32))
    men_u = jnp.interp(xg, ref_E, mu_en_table.astype(jnp.float32))
    tbl = jnp.stack([
        mu_u[:-1],                                               # per-segment base values
        (mu_u[1:] - mu_u[:-1]) * inv_de,                         # per-segment slopes
        men_u[:-1],
        (men_u[1:] - men_u[:-1]) * inv_de,
    ]).astype(jnp.float32)                                       # (4, K-1) packed SMEM table

    th = jnp.asarray(thickness, jnp.float32).reshape(())
    scalars = jnp.stack([th, e0, inv_de, de]).astype(jnp.float32)   # (4,) SMEM

    # --- chip-aware grid shaping (review items 4-6) ---
    rows_sub = _round_up(max(1, pl.cdiv(n, LANES)), SUB_ROWS)
    grid = pl.cdiv(rows_sub, MAX_ROW_TILE)
    if _multi_tensorcore():
        grid = max(2, grid)
        grid += grid % 2          # even tile count so both TensorCores stay busy
    row_tile = min(MAX_ROW_TILE, _round_up(pl.cdiv(rows_sub, grid), SUB_ROWS))
    rows = row_tile * grid

    # Pad the tail with a valid table energy so dead lanes never extrapolate wildly.
    n_pad = rows * LANES
    e_pad = jnp.full((n_pad,), e0, jnp.float32).at[:n].set(energies.astype(jnp.float32))
    e2d = e_pad.reshape(rows, LANES)

    cost = pl.CostEstimate(
        flops=n_pad * (5 * (k - 2) + 30),
        transcendentals=n_pad,
        bytes_accessed=n_pad * 8 + tbl.size * 4,
    )

    out2d = pl.pallas_call(
        _scint_kernel,
        out_shape=jax.ShapeDtypeStruct((rows, LANES), jnp.float32),
        grid=(grid,),
        in_specs=[
            pl.BlockSpec(memory_space=pltpu.MemorySpace.SMEM),   # scalars (4,)
            pl.BlockSpec(memory_space=pltpu.MemorySpace.SMEM),   # packed coefficient table (4, K-1)
            pl.BlockSpec((row_tile, LANES), lambda i: (i, 0)),   # energies tile
        ],
        out_specs=pl.BlockSpec((row_tile, LANES), lambda i: (i, 0)),
        compiler_params=pltpu.CompilerParams(dimension_semantics=("parallel",)),
        cost_estimate=cost,
    )(scalars, tbl, e2d)

    return out2d.reshape(-1)[:n]


# ------------------------------------------------------------------- parameter glue (plain JAX)
def normalize_param(init, lb, ub):
    # mirrors normalize_tuple_as_parameter for lb != ub
    return jnp.float32((init - lb) / (ub - lb))


def denormalize_and_clamp(norm, lb, ub):
    # mirrors denormalize_parameter_as_tuple + clamp_with_grad
    return jnp.clip(norm * (ub - lb) + lb, lb, ub)


def make_synthetic_material_tables(density):
    """Deterministic NIST-style linear attenuation / energy-absorption tables."""
    ref_E = jnp.linspace(5.0, 200.0, K_TABLE, dtype=jnp.float32)       # keV
    mass_att = 24.0 * (ref_E / 10.0) ** (-2.8) + 0.18                  # cm^2/g
    mass_en = 22.0 * (ref_E / 10.0) ** (-2.9) + 0.03                   # cm^2/g
    return ref_E, density * mass_att, density * mass_en                # -> 1/cm


# --------------------------------------------------------------------- pure-JAX reference
def reference_response(energies, thickness, ref_E, mu_table, mu_en_table):
    def interp(x, xp, fp):
        idx = jnp.clip(jnp.searchsorted(xp, x) - 1, 0, xp.shape[0] - 2)
        slope = (fp[idx + 1] - fp[idx]) / (xp[idx + 1] - xp[idx])
        return fp[idx] + slope * (x - xp[idx])

    mu = interp(energies, ref_E, mu_table)
    mu_en = interp(energies, ref_E, mu_en_table)
    return (mu_en / mu) * energies * (1.0 - jnp.exp(-mu * thickness))


# ----------------------------------------------------------------------------- main
if __name__ == "__main__":
    key = jax.random.PRNGKey(0)

    # Scintillator.__init__: thickness tuple + materials (first material is the estimate).
    thickness_tuple = (0.033, 0.001, 0.1)            # cm (init, lower, upper)  e.g. CsI-ish
    csi_density = 4.51                               # g/cm^3 (material glue; formula unused here)

    norm_th = normalize_param(*thickness_tuple)      # deterministic "Parameter" init
    th = denormalize_and_clamp(norm_th, thickness_tuple[1], thickness_tuple[2])

    ref_E, mu_tab, mu_en_tab = make_synthetic_material_tables(csi_density)

    # forward input: 1-D X-ray energies in keV
    n_energies = 300
    energies = jnp.sort(
        jax.random.uniform(key, (n_energies,), minval=10.0, maxval=150.0, dtype=jnp.float32))

    out = scintillator_response(energies, th, ref_E, mu_tab, mu_en_tab)
    out = jax.block_until_ready(out)

    expected = reference_response(energies, th, ref_E, mu_tab, mu_en_tab)
    assert out.shape == (n_energies,)
    assert jnp.allclose(out, expected, rtol=1e-5, atol=1e-5), "mismatch vs JAX reference"

    print("KERNEL_OK")
</pallas_src>

<mosaic_0001>
module attributes {stable_mosaic.version = 11 : i64} {
  func.func @_scint_kernel(%arg0: i32, %arg1: memref<4xf32, #tpu.memory_space<smem>>, %arg2: memref<4x63xf32, #tpu.memory_space<smem>>, %arg3: memref<32x128xf32, #tpu.memory_space<vmem>>, %arg4: memref<32x128xf32, #tpu.memory_space<vmem>>) attributes {dimension_semantics = [#tpu.dimension_semantics<parallel>], iteration_bounds = array<i64: 1>, scalar_prefetch = 0 : i64, scratch_operands = 0 : i64, tpu.core_type = #tpu.core_type<tc>, window_params = [{transform_indices = @transform_0, window_bounds = array<i64: 4>}, {transform_indices = @transform_1, window_bounds = array<i64: 4, 63>}, {transform_indices = @transform_2, window_bounds = array<i64: 32, 128>}, {transform_indices = @transform_3, window_bounds = array<i64: 32, 128>}]} {
    %c0 = arith.constant 0 : index
    %0 = memref.load %arg1[%c0] : memref<4xf32, #tpu.memory_space<smem>>
    %c1 = arith.constant 1 : index
    %1 = memref.load %arg1[%c1] : memref<4xf32, #tpu.memory_space<smem>>
    %c2 = arith.constant 2 : index
    %2 = memref.load %arg1[%c2] : memref<4xf32, #tpu.memory_space<smem>>
    %c3 = arith.constant 3 : index
    %3 = memref.load %arg1[%c3] : memref<4xf32, #tpu.memory_space<smem>>
    %c0_i32 = arith.constant 0 : i32
    %c32_i32 = arith.constant 32 : i32
    %4 = arith.muli %c0_i32, %c32_i32 : i32
    %5 = tpu.assume_multiple %4, 32 : i32
    %6 = arith.index_cast %5 : i32 to index
    %c0_0 = arith.constant 0 : index
    %7 = vector.load %arg3[%6, %c0_0] : memref<32x128xf32, #tpu.memory_space<vmem>>, vector<32x128xf32>
    %8 = vector.broadcast %1 : f32 to vector<32x128xf32>
    %9 = arith.subf %7, %8 : vector<32x128xf32>
    %10 = vector.broadcast %2 : f32 to vector<32x128xf32>
    %11 = arith.mulf %9, %10 : vector<32x128xf32>
    %cst = arith.constant 0.000000e+00 : f32
    %cst_1 = arith.constant 6.200000e+01 : f32
    %12 = vector.broadcast %cst : f32 to vector<32x128xf32>
    %13 = arith.maximumf %12, %11 : vector<32x128xf32>
    %14 = vector.broadcast %cst_1 : f32 to vector<32x128xf32>
    %15 = arith.minimumf %14, %13 : vector<32x128xf32>
    %16 = arith.fptosi %15 : vector<32x128xf32> to vector<32x128xi32>
    %17 = arith.sitofp %16 : vector<32x128xi32> to vector<32x128xf32>
    %18 = vector.broadcast %3 : f32 to vector<32x128xf32>
    %19 = arith.mulf %17, %18 : vector<32x128xf32>
    %20 = vector.broadcast %1 : f32 to vector<32x128xf32>
    %21 = arith.addf %20, %19 : vector<32x128xf32>
    %22 = arith.subf %7, %21 : vector<32x128xf32>
    %c0_2 = arith.constant 0 : index
    %c0_3 = arith.constant 0 : index
    %23 = memref.load %arg2[%c0_2, %c0_3] : memref<4x63xf32, #tpu.memory_space<smem>>
    %24 = vector.broadcast %23 : f32 to vector<32x128xf32>
    %c1_4 = arith.constant 1 : index
    %c0_5 = arith.constant 0 : index
    %25 = memref.load %arg2[%c1_4, %c0_5] : memref<4x63xf32, #tpu.memory_space<smem>>
    %26 = vector.broadcast %25 : f32 to vector<32x128xf32>
    %c2_6 = arith.constant 2 : index
    %c0_7 = arith.constant 0 : index
    %27 = memref.load %arg2[%c2_6, %c0_7] : memref<4x63xf32, #tpu.memory_space<smem>>
    %28 = vector.broadcast %27 : f32 to vector<32x128xf32>
    %c3_8 = arith.constant 3 : index
    %c0_9 = arith.constant 0 : index
    %29 = memref.load %arg2[%c3_8, %c0_9] : memref<4x63xf32, #tpu.memory_space<smem>>
    %30 = vector.broadcast %29 : f32 to vector<32x128xf32>
    %c1_i32 = arith.constant 1 : i32
    %31 = vector.broadcast %c1_i32 : i32 to vector<32x128xi32>
    %32 = arith.cmpi eq, %16, %31 : vector<32x128xi32>
    %c0_10 = arith.constant 0 : index
    %c1_11 = arith.constant 1 : index
    %33 = memref.load %arg2[%c0_10, %c1_11] : memref<4x63xf32, #tpu.memory_space<smem>>
    %34 = vector.broadcast %33 : f32 to vector<32x128xf32>
    %35 = arith.select %32, %34, %24 : vector<32x128xi1>, vector<32x128xf32>
    %c1_12 = arith.constant 1 : index
    %c1_13 = arith.constant 1 : index
    %36 = memref.load %arg2[%c1_12, %c1_13] : memref<4x63xf32, #tpu.memory_space<smem>>
    %37 = vector.broadcast %36 : f32 to vector<32x128xf32>
    %38 = arith.select %32, %37, %26 : vector<32x128xi1>, vector<32x128xf32>
    %c2_14 = arith.constant 2 : index
    %c1_15 = arith.constant 1 : index
    %39 = memref.load %arg2[%c2_14, %c1_15] : memref<4x63xf32, #tpu.memory_space<smem>>
    %40 = vector.broadcast %39 : f32 to vector<32x128xf32>
    %41 = arith.select %32, %40, %28 : vector<32x128xi1>, vector<32x128xf32>
    %c3_16 = arith.constant 3 : index
    %c1_17 = arith.constant 1 : index
    %42 = memref.load %arg2[%c3_16, %c1_17] : memref<4x63xf32, #tpu.memory_space<smem>>
    %43 = vector.broadcast %42 : f32 to vector<32x128xf32>
    %44 = arith.select %32, %43, %30 : vector<32x128xi1>, vector<32x128xf32>
    %c2_i32 = arith.constant 2 : i32
    %45 = vector.broadcast %c2_i32 : i32 to vector<32x128xi32>
    %46 = arith.cmpi eq, %16, %45 : vector<32x128xi32>
    %c0_18 = arith.constant 0 : index
    %c2_19 = arith.constant 2 : index
    %47 = memref.load %arg2[%c0_18, %c2_19] : memref<4x63xf32, #tpu.memory_space<smem>>
    %48 = vector.broadcast %47 : f32 to vector<32x128xf32>
    %49 = arith.select %46, %48, %35 : vector<32x128xi1>, vector<32x128xf32>
    %c1_20 = arith.constant 1 : index
    %c2_21 = arith.constant 2 : index
    %50 = memref.load %arg2[%c1_20, %c2_21] : memref<4x63xf32, #tpu.memory_space<smem>>
    %51 = vector.broadcast %50 : f32 to vector<32x128xf32>
    %52 = arith.select %46, %51, %38 : vector<32x128xi1>, vector<32x128xf32>
    %c2_22 = arith.constant 2 : index
    %c2_23 = arith.constant 2 : index
    %53 = memref.load %arg2[%c2_22, %c2_23] : memref<4x63xf32, #tpu.memory_space<smem>>
    %54 = vector.broadcast %53 : f32 to vector<32x128xf32>
    %55 = arith.select %46, %54, %41 : vector<32x128xi1>, vector<32x128xf32>
    %c3_24 = arith.constant 3 : index
    %c2_25 = arith.constant 2 : index
    %56 = memref.load %arg2[%c3_24, %c2_25] : memref<4x63xf32, #tpu.memory_space<smem>>
    %57 = vector.broadcast %56 : f32 to vector<32x128xf32>
    %58 = arith.select %46, %57, %44 : vector<32x128xi1>, vector<32x128xf32>
    %c3_i32 = arith.constant 3 : i32
    %59 = vector.broadcast %c3_i32 : i32 to vector<32x128xi32>
    %60 = arith.cmpi eq, %16, %59 : vector<32x128xi32>
    %c0_26 = arith.constant 0 : index
    %c3_27 = arith.constant 3 : index
    %61 = memref.load %arg2[%c0_26, %c3_27] : memref<4x63xf32, #tpu.memory_space<smem>>
    %62 = vector.broadcast %61 : f32 to vector<32x128xf32>
    %63 = arith.select %60, %62, %49 : vector<32x128xi1>, vector<32x128xf32>
    %c1_28 = arith.constant 1 : index
    %c3_29 = arith.constant 3 : index
    %64 = memref.load %arg2[%c1_28, %c3_29] : memref<4x63xf32, #tpu.memory_space<smem>>
    %65 = vector.broadcast %64 : f32 to vector<32x128xf32>
    %66 = arith.select %60, %65, %52 : vector<32x128xi1>, vector<32x128xf32>
    %c2_30 = arith.constant 2 : index
    %c3_31 = arith.constant 3 : index
    %67 = memref.load %arg2[%c2_30, %c3_31] : memref<4x63xf32, #tpu.memory_space<smem>>
    %68 = vector.broadcast %67 : f32 to vector<32x128xf32>
    %69 = arith.select %60, %68, %55 : vector<32x128xi1>, vector<32x128xf32>
    %c3_32 = arith.constant 3 : index
    %c3_33 = arith.constant 3 : index
    %70 = memref.load %arg2[%c3_32, %c3_33] : memref<4x63xf32, #tpu.memory_space<smem>>
    %71 = vector.broadcast %70 : f32 to vector<32x128xf32>
    %72 = arith.select %60, %71, %58 : vector<32x128xi1>, vector<32x128xf32>
    %c4_i32 = arith.constant 4 : i32
    %73 = vector.broadcast %c4_i32 : i32 to vector<32x128xi32>
    %74 = arith.cmpi eq, %16, %73 : vector<32x128xi32>
    %c0_34 = arith.constant 0 : index
    %c4 = arith.constant 4 : index
    %75 = memref.load %arg2[%c0_34, %c4] : memref<4x63xf32, #tpu.memory_space<smem>>
    %76 = vector.broadcast %75 : f32 to vector<32x128xf32>
    %77 = arith.select %74, %76, %63 : vector<32x128xi1>, vector<32x128xf32>
    %c1_35 = arith.constant 1 : index
    %c4_36 = arith.constant 4 : index
    %78 = memref.load %arg2[%c1_35, %c4_36] : memref<4x63xf32, #tpu.memory_space<smem>>
    %79 = vector.broadcast %78 : f32 to vector<32x128xf32>
    %80 = arith.select %74, %79, %66 : vector<32x128xi1>, vector<32x128xf32>
    %c2_37 = arith.constant 2 : index
    %c4_38 = arith.constant 4 : index
    %81 = memref.load %arg2[%c2_37, %c4_38] : memref<4x63xf32, #tpu.memory_space<smem>>
    %82 = vector.broadcast %81 : f32 to vector<32x128xf32>
    %83 = arith.select %74, %82, %69 : vector<32x128xi1>, vector<32x128xf32>
    %c3_39 = arith.constant 3 : index
    %c4_40 = arith.constant 4 : index
    %84 = memref.load %arg2[%c3_39, %c4_40] : memref<4x63xf32, #tpu.memory_space<smem>>
    %85 = vector.broadcast %84 : f32 to vector<32x128xf32>
    %86 = arith.select %74, %85, %72 : vector<32x128xi1>, vector<32x128xf32>
    %c5_i32 = arith.constant 5 : i32
    %87 = vector.broadcast %c5_i32 : i32 to vector<32x128xi32>
    %88 = arith.cmpi eq, %16, %87 : vector<32x128xi32>
    %c0_41 = arith.constant 0 : index
    %c5 = arith.constant 5 : index
    %89 = memref.load %arg2[%c0_41, %c5] : memref<4x63xf32, #tpu.memory_space<smem>>
    %90 = vector.broadcast %89 : f32 to vector<32x128xf32>
    %91 = arith.select %88, %90, %77 : vector<32x128xi1>, vector<32x128xf32>
    %c1_42 = arith.constant 1 : index
    %c5_43 = arith.constant 5 : index
    %92 = memref.load %arg2[%c1_42, %c5_43] : memref<4x63xf32, #tpu.memory_space<smem>>
    %93 = vector.broadcast %92 : f32 to vector<32x128xf32>
    %94 = arith.select %88, %93, %80 : vector<32x128xi1>, vector<32x128xf32>
    %c2_44 = arith.constant 2 : index
    %c5_45 = arith.constant 5 : index
    %95 = memref.load %arg2[%c2_44, %c5_45] : memref<4x63xf32, #tpu.memory_space<smem>>
    %96 = vector.broadcast %95 : f32 to vector<32x128xf32>
    %97 = arith.select %88, %96, %83 : vector<32x128xi1>, vector<32x128xf32>
    %c3_46 = arith.constant 3 : index
    %c5_47 = arith.constant 5 : index
    %98 = memref.load %arg2[%c3_46, %c5_47] : memref<4x63xf32, #tpu.memory_space<smem>>
    %99 = vector.broadcast %98 : f32 to vector<32x128xf32>
    %100 = arith.select %88, %99, %86 : vector<32x128xi1>, vector<32x128xf32>
    %c6_i32 = arith.constant 6 : i32
    %101 = vector.broadcast %c6_i32 : i32 to vector<32x128xi32>
    %102 = arith.cmpi eq, %16, %101 : vector<32x128xi32>
    %c0_48 = arith.constant 0 : index
    %c6 = arith.constant 6 : index
    %103 = memref.load %arg2[%c0_48, %c6] : memref<4x63xf32, #tpu.memory_space<smem>>
    %104 = vector.broadcast %103 : f32 to vector<32x128xf32>
    %105 = arith.select %102, %104, %91 : vector<32x128xi1>, vector<32x128xf32>
    %c1_49 = arith.constant 1 : index
    %c6_50 = arith.constant 6 : index
    %106 = memref.load %arg2[%c1_49, %c6_50] : memref<4x63xf32, #tpu.memory_space<smem>>
    %107 = vector.broadcast %106 : f32 to vector<32x128xf32>
    %108 = arith.select %102, %107, %94 : vector<32x128xi1>, vector<32x128xf32>
    %c2_51 = arith.constant 2 : index
    %c6_52 = arith.constant 6 : index
    %109 = memref.load %arg2[%c2_51, %c6_52] : memref<4x63xf32, #tpu.memory_space<smem>>
    %110 = vector.broadcast %109 : f32 to vector<32x128xf32>
    %111 = arith.select %102, %110, %97 : vector<32x128xi1>, vector<32x128xf32>
    %c3_53 = arith.constant 3 : index
    %c6_54 = arith.constant 6 : index
    %112 = memref.load %arg2[%c3_53, %c6_54] : memref<4x63xf32, #tpu.memory_space<smem>>
    %113 = vector.broadcast %112 : f32 to vector<32x128xf32>
    %114 = arith.select %102, %113, %100 : vector<32x128xi1>, vector<32x128xf32>
    %c7_i32 = arith.constant 7 : i32
    %115 = vector.broadcast %c7_i32 : i32 to vector<32x128xi32>
    %116 = arith.cmpi eq, %16, %115 : vector<32x128xi32>
    %c0_55 = arith.constant 0 : index
    %c7 = arith.constant 7 : index
    %117 = memref.load %arg2[%c0_55, %c7] : memref<4x63xf32, #tpu.memory_space<smem>>
    %118 = vector.broadcast %117 : f32 to vector<32x128xf32>
    %119 = arith.select %116, %118, %105 : vector<32x128xi1>, vector<32x128xf32>
    %c1_56 = arith.constant 1 : index
    %c7_57 = arith.constant 7 : index
    %120 = memref.load %arg2[%c1_56, %c7_57] : memref<4x63xf32, #tpu.memory_space<smem>>
    %121 = vector.broadcast %120 : f32 to vector<32x128xf32>
    %122 = arith.select %116, %121, %108 : vector<32x128xi1>, vector<32x128xf32>
    %c2_58 = arith.constant 2 : index
    %c7_59 = arith.constant 7 : index
    %123 = memref.load %arg2[%c2_58, %c7_59] : memref<4x63xf32, #tpu.memory_space<smem>>
    %124 = vector.broadcast %123 : f32 to vector<32x128xf32>
    %125 = arith.select %116, %124, %111 : vector<32x128xi1>, vector<32x128xf32>
    %c3_60 = arith.constant 3 : index
    %c7_61 = arith.constant 7 : index
    %126 = memref.load %arg2[%c3_60, %c7_61] : memref<4x63xf32, #tpu.memory_space<smem>>
    %127 = vector.broadcast %126 : f32 to vector<32x128xf32>
    %128 = arith.select %116, %127, %114 : vector<32x128xi1>, vector<32x128xf32>
    %c8_i32 = arith.constant 8 : i32
    %129 = vector.broadcast %c8_i32 : i32 to vector<32x128xi32>
    %130 = arith.cmpi eq, %16, %129 : vector<32x128xi32>
    %c0_62 = arith.constant 0 : index
    %c8 = arith.constant 8 : index
    %131 = memref.load %arg2[%c0_62, %c8] : memref<4x63xf32, #tpu.memory_space<smem>>
    %132 = vector.broadcast %131 : f32 to vector<32x128xf32>
    %133 = arith.select %130, %132, %119 : vector<32x128xi1>, vector<32x128xf32>
    %c1_63 = arith.constant 1 : index
    %c8_64 = arith.constant 8 : index
    %134 = memref.load %arg2[%c1_63, %c8_64] : memref<4x63xf32, #tpu.memory_space<smem>>
    %135 = vector.broadcast %134 : f32 to vector<32x128xf32>
    %136 = arith.select %130, %135, %122 : vector<32x128xi1>, vector<32x128xf32>
    %c2_65 = arith.constant 2 : index
    %c8_66 = arith.constant 8 : index
    %137 = memref.load %arg2[%c2_65, %c8_66] : memref<4x63xf32, #tpu.memory_space<smem>>
    %138 = vector.broadcast %137 : f32 to vector<32x128xf32>
    %139 = arith.select %130, %138, %125 : vector<32x128xi1>, vector<32x128xf32>
    %c3_67 = arith.constant 3 : index
    %c8_68 = arith.constant 8 : index
    %140 = memref.load %arg2[%c3_67, %c8_68] : memref<4x63xf32, #tpu.memory_space<smem>>
    %141 = vector.broadcast %140 : f32 to vector<32x128xf32>
    %142 = arith.select %130, %141, %128 : vector<32x128xi1>, vector<32x128xf32>
    %c9_i32 = arith.constant 9 : i32
    %143 = vector.broadcast %c9_i32 : i32 to vector<32x128xi32>
    %144 = arith.cmpi eq, %16, %143 : vector<32x128xi32>
    %c0_69 = arith.constant 0 : index
    %c9 = arith.constant 9 : index
    %145 = memref.load %arg2[%c0_69, %c9] : memref<4x63xf32, #tpu.memory_space<smem>>
    %146 = vector.broadcast %145 : f32 to vector<32x128xf32>
    %147 = arith.select %144, %146, %133 : vector<32x128xi1>, vector<32x128xf32>
    %c1_70 = arith.constant 1 : index
    %c9_71 = arith.constant 9 : index
    %148 = memref.load %arg2[%c1_70, %c9_71] : memref<4x63xf32, #tpu.memory_space<smem>>
    %149 = vector.broadcast %148 : f32 to vector<32x128xf32>
    %150 = arith.select %144, %149, %136 : vector<32x128xi1>, vector<32x128xf32>
    %c2_72 = arith.constant 2 : index
    %c9_73 = arith.constant 9 : index
    %151 = memref.load %arg2[%c2_72, %c9_73] : memref<4x63xf32, #tpu.memory_space<smem>>
    %152 = vector.broadcast %151 : f32 to vector<32x128xf32>
    %153 = arith.select %144, %152, %139 : vector<32x128xi1>, vector<32x128xf32>
    %c3_74 = arith.constant 3 : index
    %c9_75 = arith.constant 9 : index
    %154 = memref.load %arg2[%c3_74, %c9_75] : memref<4x63xf32, #tpu.memory_space<smem>>
    %155 = vector.broadcast %154 : f32 to vector<32x128xf32>
    %156 = arith.select %144, %155, %142 : vector<32x128xi1>, vector<32x128xf32>
    %c10_i32 = arith.constant 10 : i32
    %157 = vector.broadcast %c10_i32 : i32 to vector<32x128xi32>
    %158 = arith.cmpi eq, %16, %157 : vector<32x128xi32>
    %c0_76 = arith.constant 0 : index
    %c10 = arith.constant 10 : index
    %159 = memref.load %arg2[%c0_76, %c10] : memref<4x63xf32, #tpu.memory_space<smem>>
    %160 = vector.broadcast %159 : f32 to vector<32x128xf32>
    %161 = arith.select %158, %160, %147 : vector<32x128xi1>, vector<32x128xf32>
    %c1_77 = arith.constant 1 : index
    %c10_78 = arith.constant 10 : index
    %162 = memref.load %arg2[%c1_77, %c10_78] : memref<4x63xf32, #tpu.memory_space<smem>>
    %163 = vector.broadcast %162 : f32 to vector<32x128xf32>
    %164 = arith.select %158, %163, %150 : vector<32x128xi1>, vector<32x128xf32>
    %c2_79 = arith.constant 2 : index
    %c10_80 = arith.constant 10 : index
    %165 = memref.load %arg2[%c2_79, %c10_80] : memref<4x63xf32, #tpu.memory_space<smem>>
    %166 = vector.broadcast %165 : f32 to vector<32x128xf32>
    %167 = arith.select %158, %166, %153 : vector<32x128xi1>, vector<32x128xf32>
    %c3_81 = arith.constant 3 : index
    %c10_82 = arith.constant 10 : index
    %168 = memref.load %arg2[%c3_81, %c10_82] : memref<4x63xf32, #tpu.memory_space<smem>>
    %169 = vector.broadcast %168 : f32 to vector<32x128xf32>
    %170 = arith.select %158, %169, %156 : vector<32x128xi1>, vector<32x128xf32>
    %c11_i32 = arith.constant 11 : i32
    %171 = vector.broadcast %c11_i32 : i32 to vector<32x128xi32>
    %172 = arith.cmpi eq, %16, %171 : vector<32x128xi32>
    %c0_83 = arith.constant 0 : index
    %c11 = arith.constant 11 : index
    %173 = memref.load %arg2[%c0_83, %c11] : memref<4x63xf32, #tpu.memory_space<smem>>
    %174 = vector.broadcast %173 : f32 to vector<32x128xf32>
    %175 = arith.select %172, %174, %161 : vector<32x128xi1>, vector<32x128xf32>
    %c1_84 = arith.constant 1 : index
    %c11_85 = arith.constant 11 : index
    %176 = memref.load %arg2[%c1_84, %c11_85] : memref<4x63xf32, #tpu.memory_space<smem>>
    %177 = vector.broadcast %176 : f32 to vector<32x128xf32>
    %178 = arith.select %172, %177, %164 : vector<32x128xi1>, vector<32x128xf32>
    %c2_86 = arith.constant 2 : index
    %c11_87 = arith.constant 11 : index
    %179 = memref.load %arg2[%c2_86, %c11_87] : memref<4x63xf32, #tpu.memory_space<smem>>
    %180 = vector.broadcast %179 : f32 to vector<32x128xf32>
    %181 = arith.select %172, %180, %167 : vector<32x128xi1>, vector<32x128xf32>
    %c3_88 = arith.constant 3 : index
    %c11_89 = arith.constant 11 : index
    %182 = memref.load %arg2[%c3_88, %c11_89] : memref<4x63xf32, #tpu.memory_space<smem>>
    %183 = vector.broadcast %182 : f32 to vector<32x128xf32>
    %184 = arith.select %172, %183, %170 : vector<32x128xi1>, vector<32x128xf32>
    %c12_i32 = arith.constant 12 : i32
    %185 = vector.broadcast %c12_i32 : i32 to vector<32x128xi32>
    %186 = arith.cmpi eq, %16, %185 : vector<32x128xi32>
    %c0_90 = arith.constant 0 : index
    %c12 = arith.constant 12 : index
    %187 = memref.load %arg2[%c0_90, %c12] : memref<4x63xf32, #tpu.memory_space<smem>>
    %188 = vector.broadcast %187 : f32 to vector<32x128xf32>
    %189 = arith.select %186, %188, %175 : vector<32x128xi1>, vector<32x128xf32>
    %c1_91 = arith.constant 1 : index
    %c12_92 = arith.constant 12 : index
    %190 = memref.load %arg2[%c1_91, %c12_92] : memref<4x63xf32, #tpu.memory_space<smem>>
    %191 = vector.broadcast %190 : f32 to vector<32x128xf32>
    %192 = arith.select %186, %191, %178 : vector<32x128xi1>, vector<32x128xf32>
    %c2_93 = arith.constant 2 : index
    %c12_94 = arith.constant 12 : index
    %193 = memref.load %arg2[%c2_93, %c12_94] : memref<4x63xf32, #tpu.memory_space<smem>>
    %194 = vector.broadcast %193 : f32 to vector<32x128xf32>
    %195 = arith.select %186, %194, %181 : vector<32x128xi1>, vector<32x128xf32>
    %c3_95 = arith.constant 3 : index
    %c12_96 = arith.constant 12 : index
    %196 = memref.load %arg2[%c3_95, %c12_96] : memref<4x63xf32, #tpu.memory_space<smem>>
    %197 = vector.broadcast %196 : f32 to vector<32x128xf32>
    %198 = arith.select %186, %197, %184 : vector<32x128xi1>, vector<32x128xf32>
    %c13_i32 = arith.constant 13 : i32
    %199 = vector.broadcast %c13_i32 : i32 to vector<32x128xi32>
    %200 = arith.cmpi eq, %16, %199 : vector<32x128xi32>
    %c0_97 = arith.constant 0 : index
    %c13 = arith.constant 13 : index
    %201 = memref.load %arg2[%c0_97, %c13] : memref<4x63xf32, #tpu.memory_space<smem>>
    %202 = vector.broadcast %201 : f32 to vector<32x128xf32>
    %203 = arith.select %200, %202, %189 : vector<32x128xi1>, vector<32x128xf32>
    %c1_98 = arith.constant 1 : index
    %c13_99 = arith.constant 13 : index
    %204 = memref.load %arg2[%c1_98, %c13_99] : memref<4x63xf32, #tpu.memory_space<smem>>
    %205 = vector.broadcast %204 : f32 to vector<32x128xf32>
    %206 = arith.select %200, %205, %192 : vector<32x128xi1>, vector<32x128xf32>
    %c2_100 = arith.constant 2 : index
    %c13_101 = arith.constant 13 : index
    %207 = memref.load %arg2[%c2_100, %c13_101] : memref<4x63xf32, #tpu.memory_space<smem>>
    %208 = vector.broadcast %207 : f32 to vector<32x128xf32>
    %209 = arith.select %200, %208, %195 : vector<32x128xi1>, vector<32x128xf32>
    %c3_102 = arith.constant 3 : index
    %c13_103 = arith.constant 13 : index
    %210 = memref.load %arg2[%c3_102, %c13_103] : memref<4x63xf32, #tpu.memory_space<smem>>
    %211 = vector.broadcast %210 : f32 to vector<32x128xf32>
    %212 = arith.select %200, %211, %198 : vector<32x128xi1>, vector<32x128xf32>
    %c14_i32 = arith.constant 14 : i32
    %213 = vector.broadcast %c14_i32 : i32 to vector<32x128xi32>
    %214 = arith.cmpi eq, %16, %213 : vector<32x128xi32>
    %c0_104 = arith.constant 0 : index
    %c14 = arith.constant 14 : index
    %215 = memref.load %arg2[%c0_104, %c14] : memref<4x63xf32, #tpu.memory_space<smem>>
    %216 = vector.broadcast %215 : f32 to vector<32x128xf32>
    %217 = arith.select %214, %216, %203 : vector<32x128xi1>, vector<32x128xf32>
    %c1_105 = arith.constant 1 : index
    %c14_106 = arith.constant 14 : index
    %218 = memref.load %arg2[%c1_105, %c14_106] : memref<4x63xf32, #tpu.memory_space<smem>>
    %219 = vector.broadcast %218 : f32 to vector<32x128xf32>
    %220 = arith.select %214, %219, %206 : vector<32x128xi1>, vector<32x128xf32>
    %c2_107 = arith.constant 2 : index
    %c14_108 = arith.constant 14 : index
    %221 = memref.load %arg2[%c2_107, %c14_108] : memref<4x63xf32, #tpu.memory_space<smem>>
    %222 = vector.broadcast %221 : f32 to vector<32x128xf32>
    %223 = arith.select %214, %222, %209 : vector<32x128xi1>, vector<32x128xf32>
    %c3_109 = arith.constant 3 : index
    %c14_110 = arith.constant 14 : index
    %224 = memref.load %arg2[%c3_109, %c14_110] : memref<4x63xf32, #tpu.memory_space<smem>>
    %225 = vector.broadcast %224 : f32 to vector<32x128xf32>
    %226 = arith.select %214, %225, %212 : vector<32x128xi1>, vector<32x128xf32>
    %c15_i32 = arith.constant 15 : i32
    %227 = vector.broadcast %c15_i32 : i32 to vector<32x128xi32>
    %228 = arith.cmpi eq, %16, %227 : vector<32x128xi32>
    %c0_111 = arith.constant 0 : index
    %c15 = arith.constant 15 : index
    %229 = memref.load %arg2[%c0_111, %c15] : memref<4x63xf32, #tpu.memory_space<smem>>
    %230 = vector.broadcast %229 : f32 to vector<32x128xf32>
    %231 = arith.select %228, %230, %217 : vector<32x128xi1>, vector<32x128xf32>
    %c1_112 = arith.constant 1 : index
    %c15_113 = arith.constant 15 : index
    %232 = memref.load %arg2[%c1_112, %c15_113] : memref<4x63xf32, #tpu.memory_space<smem>>
    %233 = vector.broadcast %232 : f32 to vector<32x128xf32>
    %234 = arith.select %228, %233, %220 : vector<32x128xi1>, vector<32x128xf32>
    %c2_114 = arith.constant 2 : index
    %c15_115 = arith.constant 15 : index
    %235 = memref.load %arg2[%c2_114, %c15_115] : memref<4x63xf32, #tpu.memory_space<smem>>
    %236 = vector.broadcast %235 : f32 to vector<32x128xf32>
    %237 = arith.select %228, %236, %223 : vector<32x128xi1>, vector<32x128xf32>
    %c3_116 = arith.constant 3 : index
    %c15_117 = arith.constant 15 : index
    %238 = memref.load %arg2[%c3_116, %c15_117] : memref<4x63xf32, #tpu.memory_space<smem>>
    %239 = vector.broadcast %238 : f32 to vector<32x128xf32>
    %240 = arith.select %228, %239, %226 : vector<32x128xi1>, vector<32x128xf32>
    %c16_i32 = arith.constant 16 : i32
    %241 = vector.broadcast %c16_i32 : i32 to vector<32x128xi32>
    %242 = arith.cmpi eq, %16, %241 : vector<32x128xi32>
    %c0_118 = arith.constant 0 : index
    %c16 = arith.constant 16 : index
    %243 = memref.load %arg2[%c0_118, %c16] : memref<4x63xf32, #tpu.memory_space<smem>>
    %244 = vector.broadcast %243 : f32 to vector<32x128xf32>
    %245 = arith.select %242, %244, %231 : vector<32x128xi1>, vector<32x128xf32>
    %c1_119 = arith.constant 1 : index
    %c16_120 = arith.constant 16 : index
    %246 = memref.load %arg2[%c1_119, %c16_120] : memref<4x63xf32, #tpu.memory_space<smem>>
    %247 = vector.broadcast %246 : f32 to vector<32x128xf32>
    %248 = arith.select %242, %247, %234 : vector<32x128xi1>, vector<32x128xf32>
    %c2_121 = arith.constant 2 : index
    %c16_122 = arith.constant 16 : index
    %249 = memref.load %arg2[%c2_121, %c16_122] : memref<4x63xf32, #tpu.memory_space<smem>>
    %250 = vector.broadcast %249 : f32 to vector<32x128xf32>
    %251 = arith.select %242, %250, %237 : vector<32x128xi1>, vector<32x128xf32>
    %c3_123 = arith.constant 3 : index
    %c16_124 = arith.constant 16 : index
    %252 = memref.load %arg2[%c3_123, %c16_124] : memref<4x63xf32, #tpu.memory_space<smem>>
    %253 = vector.broadcast %252 : f32 to vector<32x128xf32>
    %254 = arith.select %242, %253, %240 : vector<32x128xi1>, vector<32x128xf32>
    %c17_i32 = arith.constant 17 : i32
    %255 = vector.broadcast %c17_i32 : i32 to vector<32x128xi32>
    %256 = arith.cmpi eq, %16, %255 : vector<32x128xi32>
    %c0_125 = arith.constant 0 : index
    %c17 = arith.constant 17 : index
    %257 = memref.load %arg2[%c0_125, %c17] : memref<4x63xf32, #tpu.memory_space<smem>>
    %258 = vector.broadcast %257 : f32 to vector<32x128xf32>
    %259 = arith.select %256, %258, %245 : vector<32x128xi1>, vector<32x128xf32>
    %c1_126 = arith.constant 1 : index
    %c17_127 = arith.constant 17 : index
    %260 = memref.load %arg2[%c1_126, %c17_127] : memref<4x63xf32, #tpu.memory_space<smem>>
    %261 = vector.broadcast %260 : f32 to vector<32x128xf32>
    %262 = arith.select %256, %261, %248 : vector<32x128xi1>, vector<32x128xf32>
    %c2_128 = arith.constant 2 : index
    %c17_129 = arith.constant 17 : index
    %263 = memref.load %arg2[%c2_128, %c17_129] : memref<4x63xf32, #tpu.memory_space<smem>>
    %264 = vector.broadcast %263 : f32 to vector<32x128xf32>
    %265 = arith.select %256, %264, %251 : vector<32x128xi1>, vector<32x128xf32>
    %c3_130 = arith.constant 3 : index
    %c17_131 = arith.constant 17 : index
    %266 = memref.load %arg2[%c3_130, %c17_131] : memref<4x63xf32, #tpu.memory_space<smem>>
    %267 = vector.broadcast %266 : f32 to vector<32x128xf32>
    %268 = arith.select %256, %267, %254 : vector<32x128xi1>, vector<32x128xf32>
    %c18_i32 = arith.constant 18 : i32
    %269 = vector.broadcast %c18_i32 : i32 to vector<32x128xi32>
    %270 = arith.cmpi eq, %16, %269 : vector<32x128xi32>
    %c0_132 = arith.constant 0 : index
    %c18 = arith.constant 18 : index
    %271 = memref.load %arg2[%c0_132, %c18] : memref<4x63xf32, #tpu.memory_space<smem>>
    %272 = vector.broadcast %271 : f32 to vector<32x128xf32>
    %273 = arith.select %270, %272, %259 : vector<32x128xi1>, vector<32x128xf32>
    %c1_133 = arith.constant 1 : index
    %c18_134 = arith.constant 18 : index
    %274 = memref.load %arg2[%c1_133, %c18_134] : memref<4x63xf32, #tpu.memory_space<smem>>
    %275 = vector.broadcast %274 : f32 to vector<32x128xf32>
    %276 = arith.select %270, %275, %262 : vector<32x128xi1>, vector<32x128xf32>
    %c2_135 = arith.constant 2 : index
    %c18_136 = arith.constant 18 : index
    %277 = memref.load %arg2[%c2_135, %c18_136] : memref<4x63xf32, #tpu.memory_space<smem>>
    %278 = vector.broadcast %277 : f32 to vector<32x128xf32>
    %279 = arith.select %270, %278, %265 : vector<32x128xi1>, vector<32x128xf32>
    %c3_137 = arith.constant 3 : index
    %c18_138 = arith.constant 18 : index
    %280 = memref.load %arg2[%c3_137, %c18_138] : memref<4x63xf32, #tpu.memory_space<smem>>
    %281 = vector.broadcast %280 : f32 to vector<32x128xf32>
    %282 = arith.select %270, %281, %268 : vector<32x128xi1>, vector<32x128xf32>
    %c19_i32 = arith.constant 19 : i32
    %283 = vector.broadcast %c19_i32 : i32 to vector<32x128xi32>
    %284 = arith.cmpi eq, %16, %283 : vector<32x128xi32>
    %c0_139 = arith.constant 0 : index
    %c19 = arith.constant 19 : index
    %285 = memref.load %arg2[%c0_139, %c19] : memref<4x63xf32, #tpu.memory_space<smem>>
    %286 = vector.broadcast %285 : f32 to vector<32x128xf32>
    %287 = arith.select %284, %286, %273 : vector<32x128xi1>, vector<32x128xf32>
    %c1_140 = arith.constant 1 : index
    %c19_141 = arith.constant 19 : index
    %288 = memref.load %arg2[%c1_140, %c19_141] : memref<4x63xf32, #tpu.memory_space<smem>>
    %289 = vector.broadcast %288 : f32 to vector<32x128xf32>
    %290 = arith.select %284, %289, %276 : vector<32x128xi1>, vector<32x128xf32>
    %c2_142 = arith.constant 2 : index
    %c19_143 = arith.constant 19 : index
    %291 = memref.load %arg2[%c2_142, %c19_143] : memref<4x63xf32, #tpu.memory_space<smem>>
    %292 = vector.broadcast %291 : f32 to vector<32x128xf32>
    %293 = arith.select %284, %292, %279 : vector<32x128xi1>, vector<32x128xf32>
    %c3_144 = arith.constant 3 : index
    %c19_145 = arith.constant 19 : index
    %294 = memref.load %arg2[%c3_144, %c19_145] : memref<4x63xf32, #tpu.memory_space<smem>>
    %295 = vector.broadcast %294 : f32 to vector<32x128xf32>
    %296 = arith.select %284, %295, %282 : vector<32x128xi1>, vector<32x128xf32>
    %c20_i32 = arith.constant 20 : i32
    %297 = vector.broadcast %c20_i32 : i32 to vector<32x128xi32>
    %298 = arith.cmpi eq, %16, %297 : vector<32x128xi32>
    %c0_146 = arith.constant 0 : index
    %c20 = arith.constant 20 : index
    %299 = memref.load %arg2[%c0_146, %c20] : memref<4x63xf32, #tpu.memory_space<smem>>
    %300 = vector.broadcast %299 : f32 to vector<32x128xf32>
    %301 = arith.select %298, %300, %287 : vector<32x128xi1>, vector<32x128xf32>
    %c1_147 = arith.constant 1 : index
    %c20_148 = arith.constant 20 : index
    %302 = memref.load %arg2[%c1_147, %c20_148] : memref<4x63xf32, #tpu.memory_space<smem>>
    %303 = vector.broadcast %302 : f32 to vector<32x128xf32>
    %304 = arith.select %298, %303, %290 : vector<32x128xi1>, vector<32x128xf32>
    %c2_149 = arith.constant 2 : index
    %c20_150 = arith.constant 20 : index
    %305 = memref.load %arg2[%c2_149, %c20_150] : memref<4x63xf32, #tpu.memory_space<smem>>
    %306 = vector.broadcast %305 : f32 to vector<32x128xf32>
    %307 = arith.select %298, %306, %293 : vector<32x128xi1>, vector<32x128xf32>
    %c3_151 = arith.constant 3 : index
    %c20_152 = arith.constant 20 : index
    %308 = memref.load %arg2[%c3_151, %c20_152] : memref<4x63xf32, #tpu.memory_space<smem>>
    %309 = vector.broadcast %308 : f32 to vector<32x128xf32>
    %310 = arith.select %298, %309, %296 : vector<32x128xi1>, vector<32x128xf32>
    %c21_i32 = arith.constant 21 : i32
    %311 = vector.broadcast %c21_i32 : i32 to vector<32x128xi32>
    %312 = arith.cmpi eq, %16, %311 : vector<32x128xi32>
    %c0_153 = arith.constant 0 : index
    %c21 = arith.constant 21 : index
    %313 = memref.load %arg2[%c0_153, %c21] : memref<4x63xf32, #tpu.memory_space<smem>>
    %314 = vector.broadcast %313 : f32 to vector<32x128xf32>
    %315 = arith.select %312, %314, %301 : vector<32x128xi1>, vector<32x128xf32>
    %c1_154 = arith.constant 1 : index
    %c21_155 = arith.constant 21 : index
    %316 = memref.load %arg2[%c1_154, %c21_155] : memref<4x63xf32, #tpu.memory_space<smem>>
    %317 = vector.broadcast %316 : f32 to vector<32x128xf32>
    %318 = arith.select %312, %317, %304 : vector<32x128xi1>, vector<32x128xf32>
    %c2_156 = arith.constant 2 : index
    %c21_157 = arith.constant 21 : index
    %319 = memref.load %arg2[%c2_156, %c21_157] : memref<4x63xf32, #tpu.memory_space<smem>>
    %320 = vector.broadcast %319 : f32 to vector<32x128xf32>
    %321 = arith.select %312, %320, %307 : vector<32x128xi1>, vector<32x128xf32>
    %c3_158 = arith.constant 3 : index
    %c21_159 = arith.constant 21 : index
    %322 = memref.load %arg2[%c3_158, %c21_159] : memref<4x63xf32, #tpu.memory_space<smem>>
    %323 = vector.broadcast %322 : f32 to vector<32x128xf32>
    %324 = arith.select %312, %323, %310 : vector<32x128xi1>, vector<32x128xf32>
    %c22_i32 = arith.constant 22 : i32
    %325 = vector.broadcast %c22_i32 : i32 to vector<32x128xi32>
    %326 = arith.cmpi eq, %16, %325 : vector<32x128xi32>
    %c0_160 = arith.constant 0 : index
    %c22 = arith.constant 22 : index
    %327 = memref.load %arg2[%c0_160, %c22] : memref<4x63xf32, #tpu.memory_space<smem>>
    %328 = vector.broadcast %327 : f32 to vector<32x128xf32>
    %329 = arith.select %326, %328, %315 : vector<32x128xi1>, vector<32x128xf32>
    %c1_161 = arith.constant 1 : index
    %c22_162 = arith.constant 22 : index
    %330 = memref.load %arg2[%c1_161, %c22_162] : memref<4x63xf32, #tpu.memory_space<smem>>
    %331 = vector.broadcast %330 : f32 to vector<32x128xf32>
    %332 = arith.select %326, %331, %318 : vector<32x128xi1>, vector<32x128xf32>
    %c2_163 = arith.constant 2 : index
    %c22_164 = arith.constant 22 : index
    %333 = memref.load %arg2[%c2_163, %c22_164] : memref<4x63xf32, #tpu.memory_space<smem>>
    %334 = vector.broadcast %333 : f32 to vector<32x128xf32>
    %335 = arith.select %326, %334, %321 : vector<32x128xi1>, vector<32x128xf32>
    %c3_165 = arith.constant 3 : index
    %c22_166 = arith.constant 22 : index
    %336 = memref.load %arg2[%c3_165, %c22_166] : memref<4x63xf32, #tpu.memory_space<smem>>
    %337 = vector.broadcast %336 : f32 to vector<32x128xf32>
    %338 = arith.select %326, %337, %324 : vector<32x128xi1>, vector<32x128xf32>
    %c23_i32 = arith.constant 23 : i32
    %339 = vector.broadcast %c23_i32 : i32 to vector<32x128xi32>
    %340 = arith.cmpi eq, %16, %339 : vector<32x128xi32>
    %c0_167 = arith.constant 0 : index
    %c23 = arith.constant 23 : index
    %341 = memref.load %arg2[%c0_167, %c23] : memref<4x63xf32, #tpu.memory_space<smem>>
    %342 = vector.broadcast %341 : f32 to vector<32x128xf32>
    %343 = arith.select %340, %342, %329 : vector<32x128xi1>, vector<32x128xf32>
    %c1_168 = arith.constant 1 : index
    %c23_169 = arith.constant 23 : index
    %344 = memref.load %arg2[%c1_168, %c23_169] : memref<4x63xf32, #tpu.memory_space<smem>>
    %345 = vector.broadcast %344 : f32 to vector<32x128xf32>
    %346 = arith.select %340, %345, %332 : vector<32x128xi1>, vector<32x128xf32>
    %c2_170 = arith.constant 2 : index
    %c23_171 = arith.constant 23 : index
    %347 = memref.load %arg2[%c2_170, %c23_171] : memref<4x63xf32, #tpu.memory_space<smem>>
    %348 = vector.broadcast %347 : f32 to vector<32x128xf32>
    %349 = arith.select %340, %348, %335 : vector<32x128xi1>, vector<32x128xf32>
    %c3_172 = arith.constant 3 : index
    %c23_173 = arith.constant 23 : index
    %350 = memref.load %arg2[%c3_172, %c23_173] : memref<4x63xf32, #tpu.memory_space<smem>>
    %351 = vector.broadcast %350 : f32 to vector<32x128xf32>
    %352 = arith.select %340, %351, %338 : vector<32x128xi1>, vector<32x128xf32>
    %c24_i32 = arith.constant 24 : i32
    %353 = vector.broadcast %c24_i32 : i32 to vector<32x128xi32>
    %354 = arith.cmpi eq, %16, %353 : vector<32x128xi32>
    %c0_174 = arith.constant 0 : index
    %c24 = arith.constant 24 : index
    %355 = memref.load %arg2[%c0_174, %c24] : memref<4x63xf32, #tpu.memory_space<smem>>
    %356 = vector.broadcast %355 : f32 to vector<32x128xf32>
    %357 = arith.select %354, %356, %343 : vector<32x128xi1>, vector<32x128xf32>
    %c1_175 = arith.constant 1 : index
    %c24_176 = arith.constant 24 : index
    %358 = memref.load %arg2[%c1_175, %c24_176] : memref<4x63xf32, #tpu.memory_space<smem>>
    %359 = vector.broadcast %358 : f32 to vector<32x128xf32>
    %360 = arith.select %354, %359, %346 : vector<32x128xi1>, vector<32x128xf32>
    %c2_177 = arith.constant 2 : index
    %c24_178 = arith.constant 24 : index
    %361 = memref.load %arg2[%c2_177, %c24_178] : memref<4x63xf32, #tpu.memory_space<smem>>
    %362 = vector.broadcast %361 : f32 to vector<32x128xf32>
    %363 = arith.select %354, %362, %349 : vector<32x128xi1>, vector<32x128xf32>
    %c3_179 = arith.constant 3 : index
    %c24_180 = arith.constant 24 : index
    %364 = memref.load %arg2[%c3_179, %c24_180] : memref<4x63xf32, #tpu.memory_space<smem>>
    %365 = vector.broadcast %364 : f32 to vector<32x128xf32>
    %366 = arith.select %354, %365, %352 : vector<32x128xi1>, vector<32x128xf32>
    %c25_i32 = arith.constant 25 : i32
    %367 = vector.broadcast %c25_i32 : i32 to vector<32x128xi32>
    %368 = arith.cmpi eq, %16, %367 : vector<32x128xi32>
    %c0_181 = arith.constant 0 : index
    %c25 = arith.constant 25 : index
    %369 = memref.load %arg2[%c0_181, %c25] : memref<4x63xf32, #tpu.memory_space<smem>>
    %370 = vector.broadcast %369 : f32 to vector<32x128xf32>
    %371 = arith.select %368, %370, %357 : vector<32x128xi1>, vector<32x128xf32>
    %c1_182 = arith.constant 1 : index
    %c25_183 = arith.constant 25 : index
    %372 = memref.load %arg2[%c1_182, %c25_183] : memref<4x63xf32, #tpu.memory_space<smem>>
    %373 = vector.broadcast %372 : f32 to vector<32x128xf32>
    %374 = arith.select %368, %373, %360 : vector<32x128xi1>, vector<32x128xf32>
    %c2_184 = arith.constant 2 : index
    %c25_185 = arith.constant 25 : index
    %375 = memref.load %arg2[%c2_184, %c25_185] : memref<4x63xf32, #tpu.memory_space<smem>>
    %376 = vector.broadcast %375 : f32 to vector<32x128xf32>
    %377 = arith.select %368, %376, %363 : vector<32x128xi1>, vector<32x128xf32>
    %c3_186 = arith.constant 3 : index
    %c25_187 = arith.constant 25 : index
    %378 = memref.load %arg2[%c3_186, %c25_187] : memref<4x63xf32, #tpu.memory_space<smem>>
    %379 = vector.broadcast %378 : f32 to vector<32x128xf32>
    %380 = arith.select %368, %379, %366 : vector<32x128xi1>, vector<32x128xf32>
    %c26_i32 = arith.constant 26 : i32
    %381 = vector.broadcast %c26_i32 : i32 to vector<32x128xi32>
    %382 = arith.cmpi eq, %16, %381 : vector<32x128xi32>
    %c0_188 = arith.constant 0 : index
    %c26 = arith.constant 26 : index
    %383 = memref.load %arg2[%c0_188, %c26] : memref<4x63xf32, #tpu.memory_space<smem>>
    %384 = vector.broadcast %383 : f32 to vector<32x128xf32>
    %385 = arith.select %382, %384, %371 : vector<32x128xi1>, vector<32x128xf32>
    %c1_189 = arith.constant 1 : index
    %c26_190 = arith.constant 26 : index
    %386 = memref.load %arg2[%c1_189, %c26_190] : memref<4x63xf32, #tpu.memory_space<smem>>
    %387 = vector.broadcast %386 : f32 to vector<32x128xf32>
    %388 = arith.select %382, %387, %374 : vector<32x128xi1>, vector<32x128xf32>
    %c2_191 = arith.constant 2 : index
    %c26_192 = arith.constant 26 : index
    %389 = memref.load %arg2[%c2_191, %c26_192] : memref<4x63xf32, #tpu.memory_space<smem>>
    %390 = vector.broadcast %389 : f32 to vector<32x128xf32>
    %391 = arith.select %382, %390, %377 : vector<32x128xi1>, vector<32x128xf32>
    %c3_193 = arith.constant 3 : index
    %c26_194 = arith.constant 26 : index
    %392 = memref.load %arg2[%c3_193, %c26_194] : memref<4x63xf32, #tpu.memory_space<smem>>
    %393 = vector.broadcast %392 : f32 to vector<32x128xf32>
    %394 = arith.select %382, %393, %380 : vector<32x128xi1>, vector<32x128xf32>
    %c27_i32 = arith.constant 27 : i32
    %395 = vector.broadcast %c27_i32 : i32 to vector<32x128xi32>
    %396 = arith.cmpi eq, %16, %395 : vector<32x128xi32>
    %c0_195 = arith.constant 0 : index
    %c27 = arith.constant 27 : index
    %397 = memref.load %arg2[%c0_195, %c27] : memref<4x63xf32, #tpu.memory_space<smem>>
    %398 = vector.broadcast %397 : f32 to vector<32x128xf32>
    %399 = arith.select %396, %398, %385 : vector<32x128xi1>, vector<32x128xf32>
    %c1_196 = arith.constant 1 : index
    %c27_197 = arith.constant 27 : index
    %400 = memref.load %arg2[%c1_196, %c27_197] : memref<4x63xf32, #tpu.memory_space<smem>>
    %401 = vector.broadcast %400 : f32 to vector<32x128xf32>
    %402 = arith.select %396, %401, %388 : vector<32x128xi1>, vector<32x128xf32>
    %c2_198 = arith.constant 2 : index
    %c27_199 = arith.constant 27 : index
    %403 = memref.load %arg2[%c2_198, %c27_199] : memref<4x63xf32, #tpu.memory_space<smem>>
    %404 = vector.broadcast %403 : f32 to vector<32x128xf32>
    %405 = arith.select %396, %404, %391 : vector<32x128xi1>, vector<32x128xf32>
    %c3_200 = arith.constant 3 : index
    %c27_201 = arith.constant 27 : index
    %406 = memref.load %arg2[%c3_200, %c27_201] : memref<4x63xf32, #tpu.memory_space<smem>>
    %407 = vector.broadcast %406 : f32 to vector<32x128xf32>
    %408 = arith.select %396, %407, %394 : vector<32x128xi1>, vector<32x128xf32>
    %c28_i32 = arith.constant 28 : i32
    %409 = vector.broadcast %c28_i32 : i32 to vector<32x128xi32>
    %410 = arith.cmpi eq, %16, %409 : vector<32x128xi32>
    %c0_202 = arith.constant 0 : index
    %c28 = arith.constant 28 : index
    %411 = memref.load %arg2[%c0_202, %c28] : memref<4x63xf32, #tpu.memory_space<smem>>
    %412 = vector.broadcast %411 : f32 to vector<32x128xf32>
    %413 = arith.select %410, %412, %399 : vector<32x128xi1>, vector<32x128xf32>
    %c1_203 = arith.constant 1 : index
    %c28_204 = arith.constant 28 : index
    %414 = memref.load %arg2[%c1_203, %c28_204] : memref<4x63xf32, #tpu.memory_space<smem>>
    %415 = vector.broadcast %414 : f32 to vector<32x128xf32>
    %416 = arith.select %410, %415, %402 : vector<32x128xi1>, vector<32x128xf32>
    %c2_205 = arith.constant 2 : index
    %c28_206 = arith.constant 28 : index
    %417 = memref.load %arg2[%c2_205, %c28_206] : memref<4x63xf32, #tpu.memory_space<smem>>
    %418 = vector.broadcast %417 : f32 to vector<32x128xf32>
    %419 = arith.select %410, %418, %405 : vector<32x128xi1>, vector<32x128xf32>
    %c3_207 = arith.constant 3 : index
    %c28_208 = arith.constant 28 : index
    %420 = memref.load %arg2[%c3_207, %c28_208] : memref<4x63xf32, #tpu.memory_space<smem>>
    %421 = vector.broadcast %420 : f32 to vector<32x128xf32>
    %422 = arith.select %410, %421, %408 : vector<32x128xi1>, vector<32x128xf32>
    %c29_i32 = arith.constant 29 : i32
    %423 = vector.broadcast %c29_i32 : i32 to vector<32x128xi32>
    %424 = arith.cmpi eq, %16, %423 : vector<32x128xi32>
    %c0_209 = arith.constant 0 : index
    %c29 = arith.constant 29 : index
    %425 = memref.load %arg2[%c0_209, %c29] : memref<4x63xf32, #tpu.memory_space<smem>>
    %426 = vector.broadcast %425 : f32 to vector<32x128xf32>
    %427 = arith.select %424, %426, %413 : vector<32x128xi1>, vector<32x128xf32>
    %c1_210 = arith.constant 1 : index
    %c29_211 = arith.constant 29 : index
    %428 = memref.load %arg2[%c1_210, %c29_211] : memref<4x63xf32, #tpu.memory_space<smem>>
    %429 = vector.broadcast %428 : f32 to vector<32x128xf32>
    %430 = arith.select %424, %429, %416 : vector<32x128xi1>, vector<32x128xf32>
    %c2_212 = arith.constant 2 : index
    %c29_213 = arith.constant 29 : index
    %431 = memref.load %arg2[%c2_212, %c29_213] : memref<4x63xf32, #tpu.memory_space<smem>>
    %432 = vector.broadcast %431 : f32 to vector<32x128xf32>
    %433 = arith.select %424, %432, %419 : vector<32x128xi1>, vector<32x128xf32>
    %c3_214 = arith.constant 3 : index
    %c29_215 = arith.constant 29 : index
    %434 = memref.load %arg2[%c3_214, %c29_215] : memref<4x63xf32, #tpu.memory_space<smem>>
    %435 = vector.broadcast %434 : f32 to vector<32x128xf32>
    %436 = arith.select %424, %435, %422 : vector<32x128xi1>, vector<32x128xf32>
    %c30_i32 = arith.constant 30 : i32
    %437 = vector.broadcast %c30_i32 : i32 to vector<32x128xi32>
    %438 = arith.cmpi eq, %16, %437 : vector<32x128xi32>
    %c0_216 = arith.constant 0 : index
    %c30 = arith.constant 30 : index
    %439 = memref.load %arg2[%c0_216, %c30] : memref<4x63xf32, #tpu.memory_space<smem>>
    %440 = vector.broadcast %439 : f32 to vector<32x128xf32>
    %441 = arith.select %438, %440, %427 : vector<32x128xi1>, vector<32x128xf32>
    %c1_217 = arith.constant 1 : index
    %c30_218 = arith.constant 30 : index
    %442 = memref.load %arg2[%c1_217, %c30_218] : memref<4x63xf32, #tpu.memory_space<smem>>
    %443 = vector.broadcast %442 : f32 to vector<32x128xf32>
    %444 = arith.select %438, %443, %430 : vector<32x128xi1>, vector<32x128xf32>
    %c2_219 = arith.constant 2 : index
    %c30_220 = arith.constant 30 : index
    %445 = memref.load %arg2[%c2_219, %c30_220] : memref<4x63xf32, #tpu.memory_space<smem>>
    %446 = vector.broadcast %445 : f32 to vector<32x128xf32>
    %447 = arith.select %438, %446, %433 : vector<32x128xi1>, vector<32x128xf32>
    %c3_221 = arith.constant 3 : index
    %c30_222 = arith.constant 30 : index
    %448 = memref.load %arg2[%c3_221, %c30_222] : memref<4x63xf32, #tpu.memory_space<smem>>
    %449 = vector.broadcast %448 : f32 to vector<32x128xf32>
    %450 = arith.select %438, %449, %436 : vector<32x128xi1>, vector<32x128xf32>
    %c31_i32 = arith.constant 31 : i32
    %451 = vector.broadcast %c31_i32 : i32 to vector<32x128xi32>
    %452 = arith.cmpi eq, %16, %451 : vector<32x128xi32>
    %c0_223 = arith.constant 0 : index
    %c31 = arith.constant 31 : index
    %453 = memref.load %arg2[%c0_223, %c31] : memref<4x63xf32, #tpu.memory_space<smem>>
    %454 = vector.broadcast %453 : f32 to vector<32x128xf32>
    %455 = arith.select %452, %454, %441 : vector<32x128xi1>, vector<32x128xf32>
    %c1_224 = arith.constant 1 : index
    %c31_225 = arith.constant 31 : index
    %456 = memref.load %arg2[%c1_224, %c31_225] : memref<4x63xf32, #tpu.memory_space<smem>>
    %457 = vector.broadcast %456 : f32 to vector<32x128xf32>
    %458 = arith.select %452, %457, %444 : vector<32x128xi1>, vector<32x128xf32>
    %c2_226 = arith.constant 2 : index
    %c31_227 = arith.constant 31 : index
    %459 = memref.load %arg2[%c2_226, %c31_227] : memref<4x63xf32, #tpu.memory_space<smem>>
    %460 = vector.broadcast %459 : f32 to vector<32x128xf32>
    %461 = arith.select %452, %460, %447 : vector<32x128xi1>, vector<32x128xf32>
    %c3_228 = arith.constant 3 : index
    %c31_229 = arith.constant 31 : index
    %462 = memref.load %arg2[%c3_228, %c31_229] : memref<4x63xf32, #tpu.memory_space<smem>>
    %463 = vector.broadcast %462 : f32 to vector<32x128xf32>
    %464 = arith.select %452, %463, %450 : vector<32x128xi1>, vector<32x128xf32>
    %c32_i32_230 = arith.constant 32 : i32
    %465 = vector.broadcast %c32_i32_230 : i32 to vector<32x128xi32>
    %466 = arith.cmpi eq, %16, %465 : vector<32x128xi32>
    %c0_231 = arith.constant 0 : index
    %c32 = arith.constant 32 : index
    %467 = memref.load %arg2[%c0_231, %c32] : memref<4x63xf32, #tpu.memory_space<smem>>
    %468 = vector.broadcast %467 : f32 to vector<32x128xf32>
    %469 = arith.select %466, %468, %455 : vector<32x128xi1>, vector<32x128xf32>
    %c1_232 = arith.constant 1 : index
    %c32_233 = arith.constant 32 : index
    %470 = memref.load %arg2[%c1_232, %c32_233] : memref<4x63xf32, #tpu.memory_space<smem>>
    %471 = vector.broadcast %470 : f32 to vector<32x128xf32>
    %472 = arith.select %466, %471, %458 : vector<32x128xi1>, vector<32x128xf32>
    %c2_234 = arith.constant 2 : index
    %c32_235 = arith.constant 32 : index
    %473 = memref.load %arg2[%c2_234, %c32_235] : memref<4x63xf32, #tpu.memory_space<smem>>
    %474 = vector.broadcast %473 : f32 to vector<32x128xf32>
    %475 = arith.select %466, %474, %461 : vector<32x128xi1>, vector<32x128xf32>
    %c3_236 = arith.constant 3 : index
    %c32_237 = arith.constant 32 : index
    %476 = memref.load %arg2[%c3_236, %c32_237] : memref<4x63xf32, #tpu.memory_space<smem>>
    %477 = vector.broadcast %476 : f32 to vector<32x128xf32>
    %478 = arith.select %466, %477, %464 : vector<32x128xi1>, vector<32x128xf32>
    %c33_i32 = arith.constant 33 : i32
    %479 = vector.broadcast %c33_i32 : i32 to vector<32x128xi32>
    %480 = arith.cmpi eq, %16, %479 : vector<32x128xi32>
    %c0_238 = arith.constant 0 : index
    %c33 = arith.constant 33 : index
    %481 = memref.load %arg2[%c0_238, %c33] : memref<4x63xf32, #tpu.memory_space<smem>>
    %482 = vector.broadcast %481 : f32 to vector<32x128xf32>
    %483 = arith.select %480, %482, %469 : vector<32x128xi1>, vector<32x128xf32>
    %c1_239 = arith.constant 1 : index
    %c33_240 = arith.constant 33 : index
    %484 = memref.load %arg2[%c1_239, %c33_240] : memref<4x63xf32, #tpu.memory_space<smem>>
    %485 = vector.broadcast %484 : f32 to vector<32x128xf32>
    %486 = arith.select %480, %485, %472 : vector<32x128xi1>, vector<32x128xf32>
    %c2_241 = arith.constant 2 : index
    %c33_242 = arith.constant 33 : index
    %487 = memref.load %arg2[%c2_241, %c33_242] : memref<4x63xf32, #tpu.memory_space<smem>>
    %488 = vector.broadcast %487 : f32 to vector<32x128xf32>
    %489 = arith.select %480, %488, %475 : vector<32x128xi1>, vector<32x128xf32>
    %c3_243 = arith.constant 3 : index
    %c33_244 = arith.constant 33 : index
    %490 = memref.load %arg2[%c3_243, %c33_244] : memref<4x63xf32, #tpu.memory_space<smem>>
    %491 = vector.broadcast %490 : f32 to vector<32x128xf32>
    %492 = arith.select %480, %491, %478 : vector<32x128xi1>, vector<32x128xf32>
    %c34_i32 = arith.constant 34 : i32
    %493 = vector.broadcast %c34_i32 : i32 to vector<32x128xi32>
    %494 = arith.cmpi eq, %16, %493 : vector<32x128xi32>
    %c0_245 = arith.constant 0 : index
    %c34 = arith.constant 34 : index
    %495 = memref.load %arg2[%c0_245, %c34] : memref<4x63xf32, #tpu.memory_space<smem>>
    %496 = vector.broadcast %495 : f32 to vector<32x128xf32>
    %497 = arith.select %494, %496, %483 : vector<32x128xi1>, vector<32x128xf32>
    %c1_246 = arith.constant 1 : index
    %c34_247 = arith.constant 34 : index
    %498 = memref.load %arg2[%c1_246, %c34_247] : memref<4x63xf32, #tpu.memory_space<smem>>
    %499 = vector.broadcast %498 : f32 to vector<32x128xf32>
    %500 = arith.select %494, %499, %486 : vector<32x128xi1>, vector<32x128xf32>
    %c2_248 = arith.constant 2 : index
    %c34_249 = arith.constant 34 : index
    %501 = memref.load %arg2[%c2_248, %c34_249] : memref<4x63xf32, #tpu.memory_space<smem>>
    %502 = vector.broadcast %501 : f32 to vector<32x128xf32>
    %503 = arith.select %494, %502, %489 : vector<32x128xi1>, vector<32x128xf32>
    %c3_250 = arith.constant 3 : index
    %c34_251 = arith.constant 34 : index
    %504 = memref.load %arg2[%c3_250, %c34_251] : memref<4x63xf32, #tpu.memory_space<smem>>
    %505 = vector.broadcast %504 : f32 to vector<32x128xf32>
    %506 = arith.select %494, %505, %492 : vector<32x128xi1>, vector<32x128xf32>
    %c35_i32 = arith.constant 35 : i32
    %507 = vector.broadcast %c35_i32 : i32 to vector<32x128xi32>
    %508 = arith.cmpi eq, %16, %507 : vector<32x128xi32>
    %c0_252 = arith.constant 0 : index
    %c35 = arith.constant 35 : index
    %509 = memref.load %arg2[%c0_252, %c35] : memref<4x63xf32, #tpu.memory_space<smem>>
    %510 = vector.broadcast %509 : f32 to vector<32x128xf32>
    %511 = arith.select %508, %510, %497 : vector<32x128xi1>, vector<32x128xf32>
    %c1_253 = arith.constant 1 : index
    %c35_254 = arith.constant 35 : index
    %512 = memref.load %arg2[%c1_253, %c35_254] : memref<4x63xf32, #tpu.memory_space<smem>>
    %513 = vector.broadcast %512 : f32 to vector<32x128xf32>
    %514 = arith.select %508, %513, %500 : vector<32x128xi1>, vector<32x128xf32>
    %c2_255 = arith.constant 2 : index
    %c35_256 = arith.constant 35 : index
    %515 = memref.load %arg2[%c2_255, %c35_256] : memref<4x63xf32, #tpu.memory_space<smem>>
    %516 = vector.broadcast %515 : f32 to vector<32x128xf32>
    %517 = arith.select %508, %516, %503 : vector<32x128xi1>, vector<32x128xf32>
    %c3_257 = arith.constant 3 : index
    %c35_258 = arith.constant 35 : index
    %518 = memref.load %arg2[%c3_257, %c35_258] : memref<4x63xf32, #tpu.memory_space<smem>>
    %519 = vector.broadcast %518 : f32 to vector<32x128xf32>
    %520 = arith.select %508, %519, %506 : vector<32x128xi1>, vector<32x128xf32>
    %c36_i32 = arith.constant 36 : i32
    %521 = vector.broadcast %c36_i32 : i32 to vector<32x128xi32>
    %522 = arith.cmpi eq, %16, %521 : vector<32x128xi32>
    %c0_259 = arith.constant 0 : index
    %c36 = arith.constant 36 : index
    %523 = memref.load %arg2[%c0_259, %c36] : memref<4x63xf32, #tpu.memory_space<smem>>
    %524 = vector.broadcast %523 : f32 to vector<32x128xf32>
    %525 = arith.select %522, %524, %511 : vector<32x128xi1>, vector<32x128xf32>
    %c1_260 = arith.constant 1 : index
    %c36_261 = arith.constant 36 : index
    %526 = memref.load %arg2[%c1_260, %c36_261] : memref<4x63xf32, #tpu.memory_space<smem>>
    %527 = vector.broadcast %526 : f32 to vector<32x128xf32>
    %528 = arith.select %522, %527, %514 : vector<32x128xi1>, vector<32x128xf32>
    %c2_262 = arith.constant 2 : index
    %c36_263 = arith.constant 36 : index
    %529 = memref.load %arg2[%c2_262, %c36_263] : memref<4x63xf32, #tpu.memory_space<smem>>
    %530 = vector.broadcast %529 : f32 to vector<32x128xf32>
    %531 = arith.select %522, %530, %517 : vector<32x128xi1>, vector<32x128xf32>
    %c3_264 = arith.constant 3 : index
    %c36_265 = arith.constant 36 : index
    %532 = memref.load %arg2[%c3_264, %c36_265] : memref<4x63xf32, #tpu.memory_space<smem>>
    %533 = vector.broadcast %532 : f32 to vector<32x128xf32>
    %534 = arith.select %522, %533, %520 : vector<32x128xi1>, vector<32x128xf32>
    %c37_i32 = arith.constant 37 : i32
    %535 = vector.broadcast %c37_i32 : i32 to vector<32x128xi32>
    %536 = arith.cmpi eq, %16, %535 : vector<32x128xi32>
    %c0_266 = arith.constant 0 : index
    %c37 = arith.constant 37 : index
    %537 = memref.load %arg2[%c0_266, %c37] : memref<4x63xf32, #tpu.memory_space<smem>>
    %538 = vector.broadcast %537 : f32 to vector<32x128xf32>
    %539 = arith.select %536, %538, %525 : vector<32x128xi1>, vector<32x128xf32>
    %c1_267 = arith.constant 1 : index
    %c37_268 = arith.constant 37 : index
    %540 = memref.load %arg2[%c1_267, %c37_268] : memref<4x63xf32, #tpu.memory_space<smem>>
    %541 = vector.broadcast %540 : f32 to vector<32x128xf32>
    %542 = arith.select %536, %541, %528 : vector<32x128xi1>, vector<32x128xf32>
    %c2_269 = arith.constant 2 : index
    %c37_270 = arith.constant 37 : index
    %543 = memref.load %arg2[%c2_269, %c37_270] : memref<4x63xf32, #tpu.memory_space<smem>>
    %544 = vector.broadcast %543 : f32 to vector<32x128xf32>
    %545 = arith.select %536, %544, %531 : vector<32x128xi1>, vector<32x128xf32>
    %c3_271 = arith.constant 3 : index
    %c37_272 = arith.constant 37 : index
    %546 = memref.load %arg2[%c3_271, %c37_272] : memref<4x63xf32, #tpu.memory_space<smem>>
    %547 = vector.broadcast %546 : f32 to vector<32x128xf32>
    %548 = arith.select %536, %547, %534 : vector<32x128xi1>, vector<32x128xf32>
    %c38_i32 = arith.constant 38 : i32
    %549 = vector.broadcast %c38_i32 : i32 to vector<32x128xi32>
    %550 = arith.cmpi eq, %16, %549 : vector<32x128xi32>
    %c0_273 = arith.constant 0 : index
    %c38 = arith.constant 38 : index
    %551 = memref.load %arg2[%c0_273, %c38] : memref<4x63xf32, #tpu.memory_space<smem>>
    %552 = vector.broadcast %551 : f32 to vector<32x128xf32>
    %553 = arith.select %550, %552, %539 : vector<32x128xi1>, vector<32x128xf32>
    %c1_274 = arith.constant 1 : index
    %c38_275 = arith.constant 38 : index
    %554 = memref.load %arg2[%c1_274, %c38_275] : memref<4x63xf32, #tpu.memory_space<smem>>
    %555 = vector.broadcast %554 : f32 to vector<32x128xf32>
    %556 = arith.select %550, %555, %542 : vector<32x128xi1>, vector<32x128xf32>
    %c2_276 = arith.constant 2 : index
    %c38_277 = arith.constant 38 : index
    %557 = memref.load %arg2[%c2_276, %c38_277] : memref<4x63xf32, #tpu.memory_space<smem>>
    %558 = vector.broadcast %557 : f32 to vector<32x128xf32>
    %559 = arith.select %550, %558, %545 : vector<32x128xi1>, vector<32x128xf32>
    %c3_278 = arith.constant 3 : index
    %c38_279 = arith.constant 38 : index
    %560 = memref.load %arg2[%c3_278, %c38_279] : memref<4x63xf32, #tpu.memory_space<smem>>
    %561 = vector.broadcast %560 : f32 to vector<32x128xf32>
    %562 = arith.select %550, %561, %548 : vector<32x128xi1>, vector<32x128xf32>
    %c39_i32 = arith.constant 39 : i32
    %563 = vector.broadcast %c39_i32 : i32 to vector<32x128xi32>
    %564 = arith.cmpi eq, %16, %563 : vector<32x128xi32>
    %c0_280 = arith.constant 0 : index
    %c39 = arith.constant 39 : index
    %565 = memref.load %arg2[%c0_280, %c39] : memref<4x63xf32, #tpu.memory_space<smem>>
    %566 = vector.broadcast %565 : f32 to vector<32x128xf32>
    %567 = arith.select %564, %566, %553 : vector<32x128xi1>, vector<32x128xf32>
    %c1_281 = arith.constant 1 : index
    %c39_282 = arith.constant 39 : index
    %568 = memref.load %arg2[%c1_281, %c39_282] : memref<4x63xf32, #tpu.memory_space<smem>>
    %569 = vector.broadcast %568 : f32 to vector<32x128xf32>
    %570 = arith.select %564, %569, %556 : vector<32x128xi1>, vector<32x128xf32>
    %c2_283 = arith.constant 2 : index
    %c39_284 = arith.constant 39 : index
    %571 = memref.load %arg2[%c2_283, %c39_284] : memref<4x63xf32, #tpu.memory_space<smem>>
    %572 = vector.broadcast %571 : f32 to vector<32x128xf32>
    %573 = arith.select %564, %572, %559 : vector<32x128xi1>, vector<32x128xf32>
    %c3_285 = arith.constant 3 : index
    %c39_286 = arith.constant 39 : index
    %574 = memref.load %arg2[%c3_285, %c39_286] : memref<4x63xf32, #tpu.memory_space<smem>>
    %575 = vector.broadcast %574 : f32 to vector<32x128xf32>
    %576 = arith.select %564, %575, %562 : vector<32x128xi1>, vector<32x128xf32>
    %c40_i32 = arith.constant 40 : i32
    %577 = vector.broadcast %c40_i32 : i32 to vector<32x128xi32>
    %578 = arith.cmpi eq, %16, %577 : vector<32x128xi32>
    %c0_287 = arith.constant 0 : index
    %c40 = arith.constant 40 : index
    %579 = memref.load %arg2[%c0_287, %c40] : memref<4x63xf32, #tpu.memory_space<smem>>
    %580 = vector.broadcast %579 : f32 to vector<32x128xf32>
    %581 = arith.select %578, %580, %567 : vector<32x128xi1>, vector<32x128xf32>
    %c1_288 = arith.constant 1 : index
    %c40_289 = arith.constant 40 : index
    %582 = memref.load %arg2[%c1_288, %c40_289] : memref<4x63xf32, #tpu.memory_space<smem>>
    %583 = vector.broadcast %582 : f32 to vector<32x128xf32>
    %584 = arith.select %578, %583, %570 : vector<32x128xi1>, vector<32x128xf32>
    %c2_290 = arith.constant 2 : index
    %c40_291 = arith.constant 40 : index
    %585 = memref.load %arg2[%c2_290, %c40_291] : memref<4x63xf32, #tpu.memory_space<smem>>
    %586 = vector.broadcast %585 : f32 to vector<32x128xf32>
    %587 = arith.select %578, %586, %573 : vector<32x128xi1>, vector<32x128xf32>
    %c3_292 = arith.constant 3 : index
    %c40_293 = arith.constant 40 : index
    %588 = memref.load %arg2[%c3_292, %c40_293] : memref<4x63xf32, #tpu.memory_space<smem>>
    %589 = vector.broadcast %588 : f32 to vector<32x128xf32>
    %590 = arith.select %578, %589, %576 : vector<32x128xi1>, vector<32x128xf32>
    %c41_i32 = arith.constant 41 : i32
    %591 = vector.broadcast %c41_i32 : i32 to vector<32x128xi32>
    %592 = arith.cmpi eq, %16, %591 : vector<32x128xi32>
    %c0_294 = arith.constant 0 : index
    %c41 = arith.constant 41 : index
    %593 = memref.load %arg2[%c0_294, %c41] : memref<4x63xf32, #tpu.memory_space<smem>>
    %594 = vector.broadcast %593 : f32 to vector<32x128xf32>
    %595 = arith.select %592, %594, %581 : vector<32x128xi1>, vector<32x128xf32>
    %c1_295 = arith.constant 1 : index
    %c41_296 = arith.constant 41 : index
    %596 = memref.load %arg2[%c1_295, %c41_296] : memref<4x63xf32, #tpu.memory_space<smem>>
    %597 = vector.broadcast %596 : f32 to vector<32x128xf32>
    %598 = arith.select %592, %597, %584 : vector<32x128xi1>, vector<32x128xf32>
    %c2_297 = arith.constant 2 : index
    %c41_298 = arith.constant 41 : index
    %599 = memref.load %arg2[%c2_297, %c41_298] : memref<4x63xf32, #tpu.memory_space<smem>>
    %600 = vector.broadcast %599 : f32 to vector<32x128xf32>
    %601 = arith.select %592, %600, %587 : vector<32x128xi1>, vector<32x128xf32>
    %c3_299 = arith.constant 3 : index
    %c41_300 = arith.constant 41 : index
    %602 = memref.load %arg2[%c3_299, %c41_300] : memref<4x63xf32, #tpu.memory_space<smem>>
    %603 = vector.broadcast %602 : f32 to vector<32x128xf32>
    %604 = arith.select %592, %603, %590 : vector<32x128xi1>, vector<32x128xf32>
    %c42_i32 = arith.constant 42 : i32
    %605 = vector.broadcast %c42_i32 : i32 to vector<32x128xi32>
    %606 = arith.cmpi eq, %16, %605 : vector<32x128xi32>
    %c0_301 = arith.constant 0 : index
    %c42 = arith.constant 42 : index
    %607 = memref.load %arg2[%c0_301, %c42] : memref<4x63xf32, #tpu.memory_space<smem>>
    %608 = vector.broadcast %607 : f32 to vector<32x128xf32>
    %609 = arith.select %606, %608, %595 : vector<32x128xi1>, vector<32x128xf32>
    %c1_302 = arith.constant 1 : index
    %c42_303 = arith.constant 42 : index
    %610 = memref.load %arg2[%c1_302, %c42_303] : memref<4x63xf32, #tpu.memory_space<smem>>
    %611 = vector.broadcast %610 : f32 to vector<32x128xf32>
    %612 = arith.select %606, %611, %598 : vector<32x128xi1>, vector<32x128xf32>
    %c2_304 = arith.constant 2 : index
    %c42_305 = arith.constant 42 : index
    %613 = memref.load %arg2[%c2_304, %c42_305] : memref<4x63xf32, #tpu.memory_space<smem>>
    %614 = vector.broadcast %613 : f32 to vector<32x128xf32>
    %615 = arith.select %606, %614, %601 : vector<32x128xi1>, vector<32x128xf32>
    %c3_306 = arith.constant 3 : index
    %c42_307 = arith.constant 42 : index
    %616 = memref.load %arg2[%c3_306, %c42_307] : memref<4x63xf32, #tpu.memory_space<smem>>
    %617 = vector.broadcast %616 : f32 to vector<32x128xf32>
    %618 = arith.select %606, %617, %604 : vector<32x128xi1>, vector<32x128xf32>
    %c43_i32 = arith.constant 43 : i32
    %619 = vector.broadcast %c43_i32 : i32 to vector<32x128xi32>
    %620 = arith.cmpi eq, %16, %619 : vector<32x128xi32>
    %c0_308 = arith.constant 0 : index
    %c43 = arith.constant 43 : index
    %621 = memref.load %arg2[%c0_308, %c43] : memref<4x63xf32, #tpu.memory_space<smem>>
    %622 = vector.broadcast %621 : f32 to vector<32x128xf32>
    %623 = arith.select %620, %622, %609 : vector<32x128xi1>, vector<32x128xf32>
    %c1_309 = arith.constant 1 : index
    %c43_310 = arith.constant 43 : index
    %624 = memref.load %arg2[%c1_309, %c43_310] : memref<4x63xf32, #tpu.memory_space<smem>>
    %625 = vector.broadcast %624 : f32 to vector<32x128xf32>
    %626 = arith.select %620, %625, %612 : vector<32x128xi1>, vector<32x128xf32>
    %c2_311 = arith.constant 2 : index
    %c43_312 = arith.constant 43 : index
    %627 = memref.load %arg2[%c2_311, %c43_312] : memref<4x63xf32, #tpu.memory_space<smem>>
    %628 = vector.broadcast %627 : f32 to vector<32x128xf32>
    %629 = arith.select %620, %628, %615 : vector<32x128xi1>, vector<32x128xf32>
    %c3_313 = arith.constant 3 : index
    %c43_314 = arith.constant 43 : index
    %630 = memref.load %arg2[%c3_313, %c43_314] : memref<4x63xf32, #tpu.memory_space<smem>>
    %631 = vector.broadcast %630 : f32 to vector<32x128xf32>
    %632 = arith.select %620, %631, %618 : vector<32x128xi1>, vector<32x128xf32>
    %c44_i32 = arith.constant 44 : i32
    %633 = vector.broadcast %c44_i32 : i32 to vector<32x128xi32>
    %634 = arith.cmpi eq, %16, %633 : vector<32x128xi32>
    %c0_315 = arith.constant 0 : index
    %c44 = arith.constant 44 : index
    %635 = memref.load %arg2[%c0_315, %c44] : memref<4x63xf32, #tpu.memory_space<smem>>
    %636 = vector.broadcast %635 : f32 to vector<32x128xf32>
    %637 = arith.select %634, %636, %623 : vector<32x128xi1>, vector<32x128xf32>
    %c1_316 = arith.constant 1 : index
    %c44_317 = arith.constant 44 : index
    %638 = memref.load %arg2[%c1_316, %c44_317] : memref<4x63xf32, #tpu.memory_space<smem>>
    %639 = vector.broadcast %638 : f32 to vector<32x128xf32>
    %640 = arith.select %634, %639, %626 : vector<32x128xi1>, vector<32x128xf32>
    %c2_318 = arith.constant 2 : index
    %c44_319 = arith.constant 44 : index
    %641 = memref.load %arg2[%c2_318, %c44_319] : memref<4x63xf32, #tpu.memory_space<smem>>
    %642 = vector.broadcast %641 : f32 to vector<32x128xf32>
    %643 = arith.select %634, %642, %629 : vector<32x128xi1>, vector<32x128xf32>
    %c3_320 = arith.constant 3 : index
    %c44_321 = arith.constant 44 : index
    %644 = memref.load %arg2[%c3_320, %c44_321] : memref<4x63xf32, #tpu.memory_space<smem>>
    %645 = vector.broadcast %644 : f32 to vector<32x128xf32>
    %646 = arith.select %634, %645, %632 : vector<32x128xi1>, vector<32x128xf32>
    %c45_i32 = arith.constant 45 : i32
    %647 = vector.broadcast %c45_i32 : i32 to vector<32x128xi32>
    %648 = arith.cmpi eq, %16, %647 : vector<32x128xi32>
    %c0_322 = arith.constant 0 : index
    %c45 = arith.constant 45 : index
    %649 = memref.load %arg2[%c0_322, %c45] : memref<4x63xf32, #tpu.memory_space<smem>>
    %650 = vector.broadcast %649 : f32 to vector<32x128xf32>
    %651 = arith.select %648, %650, %637 : vector<32x128xi1>, vector<32x128xf32>
    %c1_323 = arith.constant 1 : index
    %c45_324 = arith.constant 45 : index
    %652 = memref.load %arg2[%c1_323, %c45_324] : memref<4x63xf32, #tpu.memory_space<smem>>
    %653 = vector.broadcast %652 : f32 to vector<32x128xf32>
    %654 = arith.select %648, %653, %640 : vector<32x128xi1>, vector<32x128xf32>
    %c2_325 = arith.constant 2 : index
    %c45_326 = arith.constant 45 : index
    %655 = memref.load %arg2[%c2_325, %c45_326] : memref<4x63xf32, #tpu.memory_space<smem>>
    %656 = vector.broadcast %655 : f32 to vector<32x128xf32>
    %657 = arith.select %648, %656, %643 : vector<32x128xi1>, vector<32x128xf32>
    %c3_327 = arith.constant 3 : index
    %c45_328 = arith.constant 45 : index
    %658 = memref.load %arg2[%c3_327, %c45_328] : memref<4x63xf32, #tpu.memory_space<smem>>
    %659 = vector.broadcast %658 : f32 to vector<32x128xf32>
    %660 = arith.select %648, %659, %646 : vector<32x128xi1>, vector<32x128xf32>
    %c46_i32 = arith.constant 46 : i32
    %661 = vector.broadcast %c46_i32 : i32 to vector<32x128xi32>
    %662 = arith.cmpi eq, %16, %661 : vector<32x128xi32>
    %c0_329 = arith.constant 0 : index
    %c46 = arith.constant 46 : index
    %663 = memref.load %arg2[%c0_329, %c46] : memref<4x63xf32, #tpu.memory_space<smem>>
    %664 = vector.broadcast %663 : f32 to vector<32x128xf32>
    %665 = arith.select %662, %664, %651 : vector<32x128xi1>, vector<32x128xf32>
    %c1_330 = arith.constant 1 : index
    %c46_331 = arith.constant 46 : index
    %666 = memref.load %arg2[%c1_330, %c46_331] : memref<4x63xf32, #tpu.memory_space<smem>>
    %667 = vector.broadcast %666 : f32 to vector<32x128xf32>
    %668 = arith.select %662, %667, %654 : vector<32x128xi1>, vector<32x128xf32>
    %c2_332 = arith.constant 2 : index
    %c46_333 = arith.constant 46 : index
    %669 = memref.load %arg2[%c2_332, %c46_333] : memref<4x63xf32, #tpu.memory_space<smem>>
    %670 = vector.broadcast %669 : f32 to vector<32x128xf32>
    %671 = arith.select %662, %670, %657 : vector<32x128xi1>, vector<32x128xf32>
    %c3_334 = arith.constant 3 : index
    %c46_335 = arith.constant 46 : index
    %672 = memref.load %arg2[%c3_334, %c46_335] : memref<4x63xf32, #tpu.memory_space<smem>>
    %673 = vector.broadcast %672 : f32 to vector<32x128xf32>
    %674 = arith.select %662, %673, %660 : vector<32x128xi1>, vector<32x128xf32>
    %c47_i32 = arith.constant 47 : i32
    %675 = vector.broadcast %c47_i32 : i32 to vector<32x128xi32>
    %676 = arith.cmpi eq, %16, %675 : vector<32x128xi32>
    %c0_336 = arith.constant 0 : index
    %c47 = arith.constant 47 : index
    %677 = memref.load %arg2[%c0_336, %c47] : memref<4x63xf32, #tpu.memory_space<smem>>
    %678 = vector.broadcast %677 : f32 to vector<32x128xf32>
    %679 = arith.select %676, %678, %665 : vector<32x128xi1>, vector<32x128xf32>
    %c1_337 = arith.constant 1 : index
    %c47_338 = arith.constant 47 : index
    %680 = memref.load %arg2[%c1_337, %c47_338] : memref<4x63xf32, #tpu.memory_space<smem>>
    %681 = vector.broadcast %680 : f32 to vector<32x128xf32>
    %682 = arith.select %676, %681, %668 : vector<32x128xi1>, vector<32x128xf32>
    %c2_339 = arith.constant 2 : index
    %c47_340 = arith.constant 47 : index
    %683 = memref.load %arg2[%c2_339, %c47_340] : memref<4x63xf32, #tpu.memory_space<smem>>
    %684 = vector.broadcast %683 : f32 to vector<32x128xf32>
    %685 = arith.select %676, %684, %671 : vector<32x128xi1>, vector<32x128xf32>
    %c3_341 = arith.constant 3 : index
    %c47_342 = arith.constant 47 : index
    %686 = memref.load %arg2[%c3_341, %c47_342] : memref<4x63xf32, #tpu.memory_space<smem>>
    %687 = vector.broadcast %686 : f32 to vector<32x128xf32>
    %688 = arith.select %676, %687, %674 : vector<32x128xi1>, vector<32x128xf32>
    %c48_i32 = arith.constant 48 : i32
    %689 = vector.broadcast %c48_i32 : i32 to vector<32x128xi32>
    %690 = arith.cmpi eq, %16, %689 : vector<32x128xi32>
    %c0_343 = arith.constant 0 : index
    %c48 = arith.constant 48 : index
    %691 = memref.load %arg2[%c0_343, %c48] : memref<4x63xf32, #tpu.memory_space<smem>>
    %692 = vector.broadcast %691 : f32 to vector<32x128xf32>
    %693 = arith.select %690, %692, %679 : vector<32x128xi1>, vector<32x128xf32>
    %c1_344 = arith.constant 1 : index
    %c48_345 = arith.constant 48 : index
    %694 = memref.load %arg2[%c1_344, %c48_345] : memref<4x63xf32, #tpu.memory_space<smem>>
    %695 = vector.broadcast %694 : f32 to vector<32x128xf32>
    %696 = arith.select %690, %695, %682 : vector<32x128xi1>, vector<32x128xf32>
    %c2_346 = arith.constant 2 : index
    %c48_347 = arith.constant 48 : index
    %697 = memref.load %arg2[%c2_346, %c48_347] : memref<4x63xf32, #tpu.memory_space<smem>>
    %698 = vector.broadcast %697 : f32 to vector<32x128xf32>
    %699 = arith.select %690, %698, %685 : vector<32x128xi1>, vector<32x128xf32>
    %c3_348 = arith.constant 3 : index
    %c48_349 = arith.constant 48 : index
    %700 = memref.load %arg2[%c3_348, %c48_349] : memref<4x63xf32, #tpu.memory_space<smem>>
    %701 = vector.broadcast %700 : f32 to vector<32x128xf32>
    %702 = arith.select %690, %701, %688 : vector<32x128xi1>, vector<32x128xf32>
    %c49_i32 = arith.constant 49 : i32
    %703 = vector.broadcast %c49_i32 : i32 to vector<32x128xi32>
    %704 = arith.cmpi eq, %16, %703 : vector<32x128xi32>
    %c0_350 = arith.constant 0 : index
    %c49 = arith.constant 49 : index
    %705 = memref.load %arg2[%c0_350, %c49] : memref<4x63xf32, #tpu.memory_space<smem>>
    %706 = vector.broadcast %705 : f32 to vector<32x128xf32>
    %707 = arith.select %704, %706, %693 : vector<32x128xi1>, vector<32x128xf32>
    %c1_351 = arith.constant 1 : index
    %c49_352 = arith.constant 49 : index
    %708 = memref.load %arg2[%c1_351, %c49_352] : memref<4x63xf32, #tpu.memory_space<smem>>
    %709 = vector.broadcast %708 : f32 to vector<32x128xf32>
    %710 = arith.select %704, %709, %696 : vector<32x128xi1>, vector<32x128xf32>
    %c2_353 = arith.constant 2 : index
    %c49_354 = arith.constant 49 : index
    %711 = memref.load %arg2[%c2_353, %c49_354] : memref<4x63xf32, #tpu.memory_space<smem>>
    %712 = vector.broadcast %711 : f32 to vector<32x128xf32>
    %713 = arith.select %704, %712, %699 : vector<32x128xi1>, vector<32x128xf32>
    %c3_355 = arith.constant 3 : index
    %c49_356 = arith.constant 49 : index
    %714 = memref.load %arg2[%c3_355, %c49_356] : memref<4x63xf32, #tpu.memory_space<smem>>
    %715 = vector.broadcast %714 : f32 to vector<32x128xf32>
    %716 = arith.select %704, %715, %702 : vector<32x128xi1>, vector<32x128xf32>
    %c50_i32 = arith.constant 50 : i32
    %717 = vector.broadcast %c50_i32 : i32 to vector<32x128xi32>
    %718 = arith.cmpi eq, %16, %717 : vector<32x128xi32>
    %c0_357 = arith.constant 0 : index
    %c50 = arith.constant 50 : index
    %719 = memref.load %arg2[%c0_357, %c50] : memref<4x63xf32, #tpu.memory_space<smem>>
    %720 = vector.broadcast %719 : f32 to vector<32x128xf32>
    %721 = arith.select %718, %720, %707 : vector<32x128xi1>, vector<32x128xf32>
    %c1_358 = arith.constant 1 : index
    %c50_359 = arith.constant 50 : index
    %722 = memref.load %arg2[%c1_358, %c50_359] : memref<4x63xf32, #tpu.memory_space<smem>>
    %723 = vector.broadcast %722 : f32 to vector<32x128xf32>
    %724 = arith.select %718, %723, %710 : vector<32x128xi1>, vector<32x128xf32>
    %c2_360 = arith.constant 2 : index
    %c50_361 = arith.constant 50 : index
    %725 = memref.load %arg2[%c2_360, %c50_361] : memref<4x63xf32, #tpu.memory_space<smem>>
    %726 = vector.broadcast %725 : f32 to vector<32x128xf32>
    %727 = arith.select %718, %726, %713 : vector<32x128xi1>, vector<32x128xf32>
    %c3_362 = arith.constant 3 : index
    %c50_363 = arith.constant 50 : index
    %728 = memref.load %arg2[%c3_362, %c50_363] : memref<4x63xf32, #tpu.memory_space<smem>>
    %729 = vector.broadcast %728 : f32 to vector<32x128xf32>
    %730 = arith.select %718, %729, %716 : vector<32x128xi1>, vector<32x128xf32>
    %c51_i32 = arith.constant 51 : i32
    %731 = vector.broadcast %c51_i32 : i32 to vector<32x128xi32>
    %732 = arith.cmpi eq, %16, %731 : vector<32x128xi32>
    %c0_364 = arith.constant 0 : index
    %c51 = arith.constant 51 : index
    %733 = memref.load %arg2[%c0_364, %c51] : memref<4x63xf32, #tpu.memory_space<smem>>
    %734 = vector.broadcast %733 : f32 to vector<32x128xf32>
    %735 = arith.select %732, %734, %721 : vector<32x128xi1>, vector<32x128xf32>
    %c1_365 = arith.constant 1 : index
    %c51_366 = arith.constant 51 : index
    %736 = memref.load %arg2[%c1_365, %c51_366] : memref<4x63xf32, #tpu.memory_space<smem>>
    %737 = vector.broadcast %736 : f32 to vector<32x128xf32>
    %738 = arith.select %732, %737, %724 : vector<32x128xi1>, vector<32x128xf32>
    %c2_367 = arith.constant 2 : index
    %c51_368 = arith.constant 51 : index
    %739 = memref.load %arg2[%c2_367, %c51_368] : memref<4x63xf32, #tpu.memory_space<smem>>
    %740 = vector.broadcast %739 : f32 to vector<32x128xf32>
    %741 = arith.select %732, %740, %727 : vector<32x128xi1>, vector<32x128xf32>
    %c3_369 = arith.constant 3 : index
    %c51_370 = arith.constant 51 : index
    %742 = memref.load %arg2[%c3_369, %c51_370] : memref<4x63xf32, #tpu.memory_space<smem>>
    %743 = vector.broadcast %742 : f32 to vector<32x128xf32>
    %744 = arith.select %732, %743, %730 : vector<32x128xi1>, vector<32x128xf32>
    %c52_i32 = arith.constant 52 : i32
    %745 = vector.broadcast %c52_i32 : i32 to vector<32x128xi32>
    %746 = arith.cmpi eq, %16, %745 : vector<32x128xi32>
    %c0_371 = arith.constant 0 : index
    %c52 = arith.constant 52 : index
    %747 = memref.load %arg2[%c0_371, %c52] : memref<4x63xf32, #tpu.memory_space<smem>>
    %748 = vector.broadcast %747 : f32 to vector<32x128xf32>
    %749 = arith.select %746, %748, %735 : vector<32x128xi1>, vector<32x128xf32>
    %c1_372 = arith.constant 1 : index
    %c52_373 = arith.constant 52 : index
    %750 = memref.load %arg2[%c1_372, %c52_373] : memref<4x63xf32, #tpu.memory_space<smem>>
    %751 = vector.broadcast %750 : f32 to vector<32x128xf32>
    %752 = arith.select %746, %751, %738 : vector<32x128xi1>, vector<32x128xf32>
    %c2_374 = arith.constant 2 : index
    %c52_375 = arith.constant 52 : index
    %753 = memref.load %arg2[%c2_374, %c52_375] : memref<4x63xf32, #tpu.memory_space<smem>>
    %754 = vector.broadcast %753 : f32 to vector<32x128xf32>
    %755 = arith.select %746, %754, %741 : vector<32x128xi1>, vector<32x128xf32>
    %c3_376 = arith.constant 3 : index
    %c52_377 = arith.constant 52 : index
    %756 = memref.load %arg2[%c3_376, %c52_377] : memref<4x63xf32, #tpu.memory_space<smem>>
    %757 = vector.broadcast %756 : f32 to vector<32x128xf32>
    %758 = arith.select %746, %757, %744 : vector<32x128xi1>, vector<32x128xf32>
    %c53_i32 = arith.constant 53 : i32
    %759 = vector.broadcast %c53_i32 : i32 to vector<32x128xi32>
    %760 = arith.cmpi eq, %16, %759 : vector<32x128xi32>
    %c0_378 = arith.constant 0 : index
    %c53 = arith.constant 53 : index
    %761 = memref.load %arg2[%c0_378, %c53] : memref<4x63xf32, #tpu.memory_space<smem>>
    %762 = vector.broadcast %761 : f32 to vector<32x128xf32>
    %763 = arith.select %760, %762, %749 : vector<32x128xi1>, vector<32x128xf32>
    %c1_379 = arith.constant 1 : index
    %c53_380 = arith.constant 53 : index
    %764 = memref.load %arg2[%c1_379, %c53_380] : memref<4x63xf32, #tpu.memory_space<smem>>
    %765 = vector.broadcast %764 : f32 to vector<32x128xf32>
    %766 = arith.select %760, %765, %752 : vector<32x128xi1>, vector<32x128xf32>
    %c2_381 = arith.constant 2 : index
    %c53_382 = arith.constant 53 : index
    %767 = memref.load %arg2[%c2_381, %c53_382] : memref<4x63xf32, #tpu.memory_space<smem>>
    %768 = vector.broadcast %767 : f32 to vector<32x128xf32>
    %769 = arith.select %760, %768, %755 : vector<32x128xi1>, vector<32x128xf32>
    %c3_383 = arith.constant 3 : index
    %c53_384 = arith.constant 53 : index
    %770 = memref.load %arg2[%c3_383, %c53_384] : memref<4x63xf32, #tpu.memory_space<smem>>
    %771 = vector.broadcast %770 : f32 to vector<32x128xf32>
    %772 = arith.select %760, %771, %758 : vector<32x128xi1>, vector<32x128xf32>
    %c54_i32 = arith.constant 54 : i32
    %773 = vector.broadcast %c54_i32 : i32 to vector<32x128xi32>
    %774 = arith.cmpi eq, %16, %773 : vector<32x128xi32>
    %c0_385 = arith.constant 0 : index
    %c54 = arith.constant 54 : index
    %775 = memref.load %arg2[%c0_385, %c54] : memref<4x63xf32, #tpu.memory_space<smem>>
    %776 = vector.broadcast %775 : f32 to vector<32x128xf32>
    %777 = arith.select %774, %776, %763 : vector<32x128xi1>, vector<32x128xf32>
    %c1_386 = arith.constant 1 : index
    %c54_387 = arith.constant 54 : index
    %778 = memref.load %arg2[%c1_386, %c54_387] : memref<4x63xf32, #tpu.memory_space<smem>>
    %779 = vector.broadcast %778 : f32 to vector<32x128xf32>
    %780 = arith.select %774, %779, %766 : vector<32x128xi1>, vector<32x128xf32>
    %c2_388 = arith.constant 2 : index
    %c54_389 = arith.constant 54 : index
    %781 = memref.load %arg2[%c2_388, %c54_389] : memref<4x63xf32, #tpu.memory_space<smem>>
    %782 = vector.broadcast %781 : f32 to vector<32x128xf32>
    %783 = arith.select %774, %782, %769 : vector<32x128xi1>, vector<32x128xf32>
    %c3_390 = arith.constant 3 : index
    %c54_391 = arith.constant 54 : index
    %784 = memref.load %arg2[%c3_390, %c54_391] : memref<4x63xf32, #tpu.memory_space<smem>>
    %785 = vector.broadcast %784 : f32 to vector<32x128xf32>
    %786 = arith.select %774, %785, %772 : vector<32x128xi1>, vector<32x128xf32>
    %c55_i32 = arith.constant 55 : i32
    %787 = vector.broadcast %c55_i32 : i32 to vector<32x128xi32>
    %788 = arith.cmpi eq, %16, %787 : vector<32x128xi32>
    %c0_392 = arith.constant 0 : index
    %c55 = arith.constant 55 : index
    %789 = memref.load %arg2[%c0_392, %c55] : memref<4x63xf32, #tpu.memory_space<smem>>
    %790 = vector.broadcast %789 : f32 to vector<32x128xf32>
    %791 = arith.select %788, %790, %777 : vector<32x128xi1>, vector<32x128xf32>
    %c1_393 = arith.constant 1 : index
    %c55_394 = arith.constant 55 : index
    %792 = memref.load %arg2[%c1_393, %c55_394] : memref<4x63xf32, #tpu.memory_space<smem>>
    %793 = vector.broadcast %792 : f32 to vector<32x128xf32>
    %794 = arith.select %788, %793, %780 : vector<32x128xi1>, vector<32x128xf32>
    %c2_395 = arith.constant 2 : index
    %c55_396 = arith.constant 55 : index
    %795 = memref.load %arg2[%c2_395, %c55_396] : memref<4x63xf32, #tpu.memory_space<smem>>
    %796 = vector.broadcast %795 : f32 to vector<32x128xf32>
    %797 = arith.select %788, %796, %783 : vector<32x128xi1>, vector<32x128xf32>
    %c3_397 = arith.constant 3 : index
    %c55_398 = arith.constant 55 : index
    %798 = memref.load %arg2[%c3_397, %c55_398] : memref<4x63xf32, #tpu.memory_space<smem>>
    %799 = vector.broadcast %798 : f32 to vector<32x128xf32>
    %800 = arith.select %788, %799, %786 : vector<32x128xi1>, vector<32x128xf32>
    %c56_i32 = arith.constant 56 : i32
    %801 = vector.broadcast %c56_i32 : i32 to vector<32x128xi32>
    %802 = arith.cmpi eq, %16, %801 : vector<32x128xi32>
    %c0_399 = arith.constant 0 : index
    %c56 = arith.constant 56 : index
    %803 = memref.load %arg2[%c0_399, %c56] : memref<4x63xf32, #tpu.memory_space<smem>>
    %804 = vector.broadcast %803 : f32 to vector<32x128xf32>
    %805 = arith.select %802, %804, %791 : vector<32x128xi1>, vector<32x128xf32>
    %c1_400 = arith.constant 1 : index
    %c56_401 = arith.constant 56 : index
    %806 = memref.load %arg2[%c1_400, %c56_401] : memref<4x63xf32, #tpu.memory_space<smem>>
    %807 = vector.broadcast %806 : f32 to vector<32x128xf32>
    %808 = arith.select %802, %807, %794 : vector<32x128xi1>, vector<32x128xf32>
    %c2_402 = arith.constant 2 : index
    %c56_403 = arith.constant 56 : index
    %809 = memref.load %arg2[%c2_402, %c56_403] : memref<4x63xf32, #tpu.memory_space<smem>>
    %810 = vector.broadcast %809 : f32 to vector<32x128xf32>
    %811 = arith.select %802, %810, %797 : vector<32x128xi1>, vector<32x128xf32>
    %c3_404 = arith.constant 3 : index
    %c56_405 = arith.constant 56 : index
    %812 = memref.load %arg2[%c3_404, %c56_405] : memref<4x63xf32, #tpu.memory_space<smem>>
    %813 = vector.broadcast %812 : f32 to vector<32x128xf32>
    %814 = arith.select %802, %813, %800 : vector<32x128xi1>, vector<32x128xf32>
    %c57_i32 = arith.constant 57 : i32
    %815 = vector.broadcast %c57_i32 : i32 to vector<32x128xi32>
    %816 = arith.cmpi eq, %16, %815 : vector<32x128xi32>
    %c0_406 = arith.constant 0 : index
    %c57 = arith.constant 57 : index
    %817 = memref.load %arg2[%c0_406, %c57] : memref<4x63xf32, #tpu.memory_space<smem>>
    %818 = vector.broadcast %817 : f32 to vector<32x128xf32>
    %819 = arith.select %816, %818, %805 : vector<32x128xi1>, vector<32x128xf32>
    %c1_407 = arith.constant 1 : index
    %c57_408 = arith.constant 57 : index
    %820 = memref.load %arg2[%c1_407, %c57_408] : memref<4x63xf32, #tpu.memory_space<smem>>
    %821 = vector.broadcast %820 : f32 to vector<32x128xf32>
    %822 = arith.select %816, %821, %808 : vector<32x128xi1>, vector<32x128xf32>
    %c2_409 = arith.constant 2 : index
    %c57_410 = arith.constant 57 : index
    %823 = memref.load %arg2[%c2_409, %c57_410] : memref<4x63xf32, #tpu.memory_space<smem>>
    %824 = vector.broadcast %823 : f32 to vector<32x128xf32>
    %825 = arith.select %816, %824, %811 : vector<32x128xi1>, vector<32x128xf32>
    %c3_411 = arith.constant 3 : index
    %c57_412 = arith.constant 57 : index
    %826 = memref.load %arg2[%c3_411, %c57_412] : memref<4x63xf32, #tpu.memory_space<smem>>
    %827 = vector.broadcast %826 : f32 to vector<32x128xf32>
    %828 = arith.select %816, %827, %814 : vector<32x128xi1>, vector<32x128xf32>
    %c58_i32 = arith.constant 58 : i32
    %829 = vector.broadcast %c58_i32 : i32 to vector<32x128xi32>
    %830 = arith.cmpi eq, %16, %829 : vector<32x128xi32>
    %c0_413 = arith.constant 0 : index
    %c58 = arith.constant 58 : index
    %831 = memref.load %arg2[%c0_413, %c58] : memref<4x63xf32, #tpu.memory_space<smem>>
    %832 = vector.broadcast %831 : f32 to vector<32x128xf32>
    %833 = arith.select %830, %832, %819 : vector<32x128xi1>, vector<32x128xf32>
    %c1_414 = arith.constant 1 : index
    %c58_415 = arith.constant 58 : index
    %834 = memref.load %arg2[%c1_414, %c58_415] : memref<4x63xf32, #tpu.memory_space<smem>>
    %835 = vector.broadcast %834 : f32 to vector<32x128xf32>
    %836 = arith.select %830, %835, %822 : vector<32x128xi1>, vector<32x128xf32>
    %c2_416 = arith.constant 2 : index
    %c58_417 = arith.constant 58 : index
    %837 = memref.load %arg2[%c2_416, %c58_417] : memref<4x63xf32, #tpu.memory_space<smem>>
    %838 = vector.broadcast %837 : f32 to vector<32x128xf32>
    %839 = arith.select %830, %838, %825 : vector<32x128xi1>, vector<32x128xf32>
    %c3_418 = arith.constant 3 : index
    %c58_419 = arith.constant 58 : index
    %840 = memref.load %arg2[%c3_418, %c58_419] : memref<4x63xf32, #tpu.memory_space<smem>>
    %841 = vector.broadcast %840 : f32 to vector<32x128xf32>
    %842 = arith.select %830, %841, %828 : vector<32x128xi1>, vector<32x128xf32>
    %c59_i32 = arith.constant 59 : i32
    %843 = vector.broadcast %c59_i32 : i32 to vector<32x128xi32>
    %844 = arith.cmpi eq, %16, %843 : vector<32x128xi32>
    %c0_420 = arith.constant 0 : index
    %c59 = arith.constant 59 : index
    %845 = memref.load %arg2[%c0_420, %c59] : memref<4x63xf32, #tpu.memory_space<smem>>
    %846 = vector.broadcast %845 : f32 to vector<32x128xf32>
    %847 = arith.select %844, %846, %833 : vector<32x128xi1>, vector<32x128xf32>
    %c1_421 = arith.constant 1 : index
    %c59_422 = arith.constant 59 : index
    %848 = memref.load %arg2[%c1_421, %c59_422] : memref<4x63xf32, #tpu.memory_space<smem>>
    %849 = vector.broadcast %848 : f32 to vector<32x128xf32>
    %850 = arith.select %844, %849, %836 : vector<32x128xi1>, vector<32x128xf32>
    %c2_423 = arith.constant 2 : index
    %c59_424 = arith.constant 59 : index
    %851 = memref.load %arg2[%c2_423, %c59_424] : memref<4x63xf32, #tpu.memory_space<smem>>
    %852 = vector.broadcast %851 : f32 to vector<32x128xf32>
    %853 = arith.select %844, %852, %839 : vector<32x128xi1>, vector<32x128xf32>
    %c3_425 = arith.constant 3 : index
    %c59_426 = arith.constant 59 : index
    %854 = memref.load %arg2[%c3_425, %c59_426] : memref<4x63xf32, #tpu.memory_space<smem>>
    %855 = vector.broadcast %854 : f32 to vector<32x128xf32>
    %856 = arith.select %844, %855, %842 : vector<32x128xi1>, vector<32x128xf32>
    %c60_i32 = arith.constant 60 : i32
    %857 = vector.broadcast %c60_i32 : i32 to vector<32x128xi32>
    %858 = arith.cmpi eq, %16, %857 : vector<32x128xi32>
    %c0_427 = arith.constant 0 : index
    %c60 = arith.constant 60 : index
    %859 = memref.load %arg2[%c0_427, %c60] : memref<4x63xf32, #tpu.memory_space<smem>>
    %860 = vector.broadcast %859 : f32 to vector<32x128xf32>
    %861 = arith.select %858, %860, %847 : vector<32x128xi1>, vector<32x128xf32>
    %c1_428 = arith.constant 1 : index
    %c60_429 = arith.constant 60 : index
    %862 = memref.load %arg2[%c1_428, %c60_429] : memref<4x63xf32, #tpu.memory_space<smem>>
    %863 = vector.broadcast %862 : f32 to vector<32x128xf32>
    %864 = arith.select %858, %863, %850 : vector<32x128xi1>, vector<32x128xf32>
    %c2_430 = arith.constant 2 : index
    %c60_431 = arith.constant 60 : index
    %865 = memref.load %arg2[%c2_430, %c60_431] : memref<4x63xf32, #tpu.memory_space<smem>>
    %866 = vector.broadcast %865 : f32 to vector<32x128xf32>
    %867 = arith.select %858, %866, %853 : vector<32x128xi1>, vector<32x128xf32>
    %c3_432 = arith.constant 3 : index
    %c60_433 = arith.constant 60 : index
    %868 = memref.load %arg2[%c3_432, %c60_433] : memref<4x63xf32, #tpu.memory_space<smem>>
    %869 = vector.broadcast %868 : f32 to vector<32x128xf32>
    %870 = arith.select %858, %869, %856 : vector<32x128xi1>, vector<32x128xf32>
    %c61_i32 = arith.constant 61 : i32
    %871 = vector.broadcast %c61_i32 : i32 to vector<32x128xi32>
    %872 = arith.cmpi eq, %16, %871 : vector<32x128xi32>
    %c0_434 = arith.constant 0 : index
    %c61 = arith.constant 61 : index
    %873 = memref.load %arg2[%c0_434, %c61] : memref<4x63xf32, #tpu.memory_space<smem>>
    %874 = vector.broadcast %873 : f32 to vector<32x128xf32>
    %875 = arith.select %872, %874, %861 : vector<32x128xi1>, vector<32x128xf32>
    %c1_435 = arith.constant 1 : index
    %c61_436 = arith.constant 61 : index
    %876 = memref.load %arg2[%c1_435, %c61_436] : memref<4x63xf32, #tpu.memory_space<smem>>
    %877 = vector.broadcast %876 : f32 to vector<32x128xf32>
    %878 = arith.select %872, %877, %864 : vector<32x128xi1>, vector<32x128xf32>
    %c2_437 = arith.constant 2 : index
    %c61_438 = arith.constant 61 : index
    %879 = memref.load %arg2[%c2_437, %c61_438] : memref<4x63xf32, #tpu.memory_space<smem>>
    %880 = vector.broadcast %879 : f32 to vector<32x128xf32>
    %881 = arith.select %872, %880, %867 : vector<32x128xi1>, vector<32x128xf32>
    %c3_439 = arith.constant 3 : index
    %c61_440 = arith.constant 61 : index
    %882 = memref.load %arg2[%c3_439, %c61_440] : memref<4x63xf32, #tpu.memory_space<smem>>
    %883 = vector.broadcast %882 : f32 to vector<32x128xf32>
    %884 = arith.select %872, %883, %870 : vector<32x128xi1>, vector<32x128xf32>
    %c62_i32 = arith.constant 62 : i32
    %885 = vector.broadcast %c62_i32 : i32 to vector<32x128xi32>
    %886 = arith.cmpi eq, %16, %885 : vector<32x128xi32>
    %c0_441 = arith.constant 0 : index
    %c62 = arith.constant 62 : index
    %887 = memref.load %arg2[%c0_441, %c62] : memref<4x63xf32, #tpu.memory_space<smem>>
    %888 = vector.broadcast %887 : f32 to vector<32x128xf32>
    %889 = arith.select %886, %888, %875 : vector<32x128xi1>, vector<32x128xf32>
    %c1_442 = arith.constant 1 : index
    %c62_443 = arith.constant 62 : index
    %890 = memref.load %arg2[%c1_442, %c62_443] : memref<4x63xf32, #tpu.memory_space<smem>>
    %891 = vector.broadcast %890 : f32 to vector<32x128xf32>
    %892 = arith.select %886, %891, %878 : vector<32x128xi1>, vector<32x128xf32>
    %c2_444 = arith.constant 2 : index
    %c62_445 = arith.constant 62 : index
    %893 = memref.load %arg2[%c2_444, %c62_445] : memref<4x63xf32, #tpu.memory_space<smem>>
    %894 = vector.broadcast %893 : f32 to vector<32x128xf32>
    %895 = arith.select %886, %894, %881 : vector<32x128xi1>, vector<32x128xf32>
    %c3_446 = arith.constant 3 : index
    %c62_447 = arith.constant 62 : index
    %896 = memref.load %arg2[%c3_446, %c62_447] : memref<4x63xf32, #tpu.memory_space<smem>>
    %897 = vector.broadcast %896 : f32 to vector<32x128xf32>
    %898 = arith.select %886, %897, %884 : vector<32x128xi1>, vector<32x128xf32>
    %899 = arith.mulf %892, %22 : vector<32x128xf32>
    %900 = arith.addf %889, %899 : vector<32x128xf32>
    %901 = arith.mulf %898, %22 : vector<32x128xf32>
    %902 = arith.addf %895, %901 : vector<32x128xf32>
    %903 = arith.divf %902, %900 : vector<32x128xf32>
    %904 = arith.mulf %903, %7 : vector<32x128xf32>
    %cst_448 = arith.constant 0.000000e+00 : f32
    %905 = vector.broadcast %cst_448 : f32 to vector<32x128xf32>
    %906 = arith.subf %905, %900 : vector<32x128xf32>
    %907 = vector.broadcast %0 : f32 to vector<32x128xf32>
    %908 = arith.mulf %906, %907 : vector<32x128xf32>
    %909 = math.exp %908 : vector<32x128xf32>
    %cst_449 = arith.constant 1.000000e+00 : f32
    %910 = vector.broadcast %cst_449 : f32 to vector<32x128xf32>
    %911 = arith.subf %910, %909 : vector<32x128xf32>
    %912 = arith.mulf %904, %911 : vector<32x128xf32>
    %913 = arith.index_cast %5 : i32 to index
    %c0_450 = arith.constant 0 : index
    %914 = vector.load %arg4[%913, %c0_450] : memref<32x128xf32, #tpu.memory_space<vmem>>, vector<32x128xf32>
    tpu.vector_store %arg4[%913, %c0_450], %912 {strides = array<i32>} : memref<32x128xf32, #tpu.memory_space<vmem>>, vector<32x128xf32>,
    %c1_i32_451 = arith.constant 1 : i32
    return
  }
  func.func @transform_0(%arg0: i32) -> i32 {
    %c0_i32 = arith.constant 0 : i32
    %c0_i32_0 = arith.constant 0 : i32
    return %c0_i32 : i32
  }
  func.func @transform_1(%arg0: i32) -> (i32, i32) {
    %c0_i32 = arith.constant 0 : i32
    %c0_i32_0 = arith.constant 0 : i32
    %c0_i32_1 = arith.constant 0 : i32
    return %c0_i32, %c0_i32_0 : i32, i32
  }
  func.func @transform_2(%arg0: i32) -> (i32, i32) {
    %c0_i32 = arith.constant 0 : i32
    %c0_i32_0 = arith.constant 0 : i32
    return %arg0, %c0_i32 : i32, i32
  }
  func.func @transform_3(%arg0: i32) -> (i32, i32) {
    %c0_i32 = arith.constant 0 : i32
    %c0_i32_0 = arith.constant 0 : i32
    return %arg0, %c0_i32 : i32, i32
  }
}

</mosaic_0001>

<llo_original>
// kernel: custom-call.7
$region0: #{custom-call.7}
  %s0 = inlined_call_operand.vmem [shape: u32[64], index: 0, kind: output, shape index: {}]

// kernel: scintillator_response.1
$region0: #{scintillator_response.1}
  #allocation0 [shape = 'u32[]', space=smem, size = 0x4, offset = 0x4, fixed_abs, tag = 'smem constant byte address 0x4 - core index']
  #allocation1 [shape = 'u32[144,128]{1,0:T(1,128)}', space=vmem, size = 0x12000, scoped, tag = 'internal scratch']
  %s0 = inlined_call_operand.vmem [shape: f32[4], index: 0, kind: input, shape index: {}]
  %s1 = inlined_call_operand.vmem [shape: f32[4,63], index: 1, kind: input, shape index: {}]
  %s2 = inlined_call_operand.vmem [shape: f32[32,128], index: 2, kind: input, shape index: {}]
  %s3 = inlined_call_operand.vmem [shape: f32[32,128], index: 3, kind: output, shape index: {}]
  %s4 = sld [smem:[#allocation0]]
  $region30: #{scintillator_response.1} parent=0
    _
  %s6 = ssub.s32 1, %s4
  %s7 = scalar_select 0, %s6, %s4
  $region1: #{scintillator_response.1} parent=0
    #allocation2 [shape = 'u8[512]{0}', space=smem, size = 0x200, scoped, tag = 'input window, operand 0, single buffered']
    #allocation3 [shape = 's32[1]{0}', space=sflag, size = 0x4, scoped, tag = 'scoped memory for scintillator_response.1']
    #allocation4 [shape = 'u8[2048]{0}', space=smem, size = 0x800, scoped, tag = 'input window, operand 1, single buffered']
    #allocation5 [shape = 's32[1]{0}', space=sflag, size = 0x4, scoped, tag = 'scoped memory for scintillator_response.1']
    %8 = vsyncpa [#allocation3], 0
    %9 = vsyncpa [#allocation5], 0
    // Predicated region
    $region2: #{scintillator_response.1} parent=1 // pred_check
      _
    $region3: #{scintillator_response.1} parent=1 // pred_check_branch
      %11 = sbr.rel (0) target = $region5
    $region4: #{scintillator_response.1} parent=1 // pred_region
      %s13 = ssub.s32 16, 16
      %14 = vsyncadd [#allocation3], %s13
      %s16 = sshll.u32 %s0, 4
      %s17 = int_to_ptr.vmem [resolvable:$true] %s16
      %19 = dma.vmem_to_smem %s17, 16, [#allocation2], [#allocation3]
    $region5: #{scintillator_response.1} parent=1 // pred_fallthru
      _
    // Predicated region
    $region6: #{scintillator_response.1} parent=1 // pred_check
      _
    $region7: #{scintillator_response.1} parent=1 // pred_check_branch
      %21 = sbr.rel (0) target = $region9
    $region8: #{scintillator_response.1} parent=1 // pred_region
      %s23 = ssub.s32 64, 64
      %24 = vsyncadd [#allocation5], %s23
      %s26 = sshll.u32 %s1, 4
      %s27 = int_to_ptr.vmem [resolvable:$true] %s26
      %29 = dma.vmem_to_smem %s27, 64, [#allocation4], [#allocation5]
    $region9: #{scintillator_response.1} parent=1 // pred_fallthru
      _
    // Predicated region
    $region10: #{scintillator_response.1} parent=1 // pred_check
      _
    $region11: #{scintillator_response.1} parent=1 // pred_check_branch
      %31 = sbr.rel (0) target = $region13
    $region12: #{scintillator_response.1} parent=1 // pred_region
      _
    $region13: #{scintillator_response.1} parent=1 // pred_fallthru
      _
    // Predicated region
    $region14: #{scintillator_response.1} parent=1 // pred_check
      _
    $region15: #{scintillator_response.1} parent=1 // pred_check_branch
      %33 = sbr.rel (0) target = $region17
    $region16: #{scintillator_response.1} parent=1 // pred_region
      %34 = dma.done [#allocation3], 16
    $region17: #{scintillator_response.1} parent=1 // pred_fallthru
      _
    // Predicated region
    $region18: #{scintillator_response.1} parent=1 // pred_check
      _
    $region19: #{scintillator_response.1} parent=1 // pred_check_branch
      %36 = sbr.rel (0) target = $region21
    $region20: #{scintillator_response.1} parent=1 // pred_region
      %37 = dma.done [#allocation5], 64
    $region21: #{scintillator_response.1} parent=1 // pred_fallthru
      _
    %38 = sfence
    %s39 = sld [smem:[#allocation2]]
    %s40 = sld [smem:[#allocation2 + $0x1]]
    %s41 = sld [smem:[#allocation2 + $0x2]]
    %s42 = sld [smem:[#allocation2 + $0x3]]
    %v43 = vld [vmem:[%s2] sm:$0xff]
    %v44 = vld [vmem:[%s2 + $0x8] sm:$0xff]
    %v45 = vld [vmem:[%s2 + $0x10] sm:$0xff]
    %v46 = vld [vmem:[%s2 + $0x18] sm:$0xff]
    %v47 = vstv %s40
    %v48 = vsub.f32 %v43, %v47
    %v49 = vsub.f32 %v44, %v47
    %v50 = vsub.f32 %v45, %v47
    %v51 = vsub.f32 %v46, %v47
    %v52 = vstv %s41
    %v53 = vmul.f32 %v48, %v52
    %v54 = vmul.f32 %v49, %v52
    %v55 = vmul.f32 %v50, %v52
    %v56 = vmul.f32 %v51, %v52
    %v57 = vmax.f32 %v53, 0.0
    %v58 = vmax.f32 %v54, 0.0
    %v59 = vmax.f32 %v55, 0.0
    %v60 = vmax.f32 %v56, 0.0
    %v61 = vmin.f32 %v57, 62.0
    %v62 = vmin.f32 %v58, 62.0
    %v63 = vmin.f32 %v59, 62.0
    %v64 = vmin.f32 %v60, 62.0
    %v65 = vcvt.f32.s32.to.zero.pseudo %v61
    %v66 = vcvt.f32.s32.to.zero.pseudo %v62
    %v67 = vcvt.f32.s32.to.zero.pseudo %v63
    %v68 = vcvt.f32.s32.to.zero.pseudo %v64
    %v69 = vcvt.s32.f32 %v65
    %v70 = vcvt.s32.f32 %v66
    %v71 = vcvt.s32.f32 %v67
    %v72 = vcvt.s32.f32 %v68
    %v73 = vstv %s42
    %v74 = vmul.f32 %v69, %v73
    %v75 = vmul.f32 %v70, %v73
    %v76 = vmul.f32 %v71, %v73
    %v77 = vmul.f32 %v72, %v73
    %v78 = vadd.f32 %v47, %v74
    %v79 = vadd.f32 %v47, %v75
    %v80 = vadd.f32 %v47, %v76
    %v81 = vadd.f32 %v47, %v77
    %v82 = vsub.f32 %v43, %v78
    %v83 = vsub.f32 %v44, %v79
    %v84 = vsub.f32 %v45, %v80
    %v85 = vsub.f32 %v46, %v81
    %s86 = sld [smem:[#allocation4]]
    %v87 = vstv %s86
    %s88 = sld [smem:[#allocation4 + $0x80]]
    %v89 = vstv %s88
    %s90 = sld [smem:[#allocation4 + $0x100]]
    %v91 = vstv %s90
    %s92 = sld [smem:[#allocation4 + $0x180]]
    %v93 = vstv %s92
    %vm94 = vcmp.eq.s32.totalorder %v65, 1
    %vm95 = vcmp.eq.s32.totalorder %v66, 1
    %vm96 = vcmp.eq.s32.totalorder %v67, 1
    %vm97 = vcmp.eq.s32.totalorder %v68, 1
    %s98 = sld [smem:[#allocation4 + $0x1]]
    %v99 = vstv %s98
    %v100 = vsel %vm94, %v99, %v87
    %v101 = vsel %vm95, %v99, %v87
    %v102 = vsel %vm96, %v99, %v87
    %v103 = vsel %vm97, %v99, %v87
    %s104 = sld [smem:[#allocation4 + $0x81]]
    %v105 = vstv %s104
    %v106 = vsel %vm94, %v105, %v89
    %v107 = vsel %vm95, %v105, %v89
    %v108 = vsel %vm96, %v105, %v89
    %v109 = vsel %vm97, %v105, %v89
    %s110 = sld [smem:[#allocation4 + $0x101]]
    %v111 = vstv %s110
    %v112 = vsel %vm94, %v111, %v91
    %v113 = vsel %vm95, %v111, %v91
    %v114 = vsel %vm96, %v111, %v91
    %v115 = vsel %vm97, %v111, %v91
    %s116 = sld [smem:[#allocation4 + $0x181]]
    %v117 = vstv %s116
    %v118 = vsel %vm94, %v117, %v93
    %v119 = vsel %vm95, %v117, %v93
    %v120 = vsel %vm96, %v117, %v93
    %v121 = vsel %vm97, %v117, %v93
    %vm122 = vcmp.eq.s32.totalorder %v65, 2
    %vm123 = vcmp.eq.s32.totalorder %v66, 2
    %vm124 = vcmp.eq.s32.totalorder %v67, 2
    %vm125 = vcmp.eq.s32.totalorder %v68, 2
    %s126 = sld [smem:[#allocation4 + $0x2]]
    %v127 = vstv %s126
    %v128 = vsel %vm122, %v127, %v100
    %v129 = vsel %vm123, %v127, %v101
    %v130 = vsel %vm124, %v127, %v102
    %v131 = vsel %vm125, %v127, %v103
    %s132 = sld [smem:[#allocation4 + $0x82]]
    %v133 = vstv %s132
    %v134 = vsel %vm122, %v133, %v106
    %v135 = vsel %vm123, %v133, %v107
    %v136 = vsel %vm124, %v133, %v108
    %v137 = vsel %vm125, %v133, %v109
    %s138 = sld [smem:[#allocation4 + $0x102]]
    %v139 = vstv %s138
    %v140 = vsel %vm122, %v139, %v112
    %v141 = vsel %vm123, %v139, %v113
    %v142 = vsel %vm124, %v139, %v114
    %v143 = vsel %vm125, %v139, %v115
    %s144 = sld [smem:[#allocation4 + $0x182]]
    %v145 = vstv %s144
    %v146 = vsel %vm122, %v145, %v118
    %v147 = vsel %vm123, %v145, %v119
    %v148 = vsel %vm124, %v145, %v120
    %v149 = vsel %vm125, %v145, %v121
    %vm150 = vcmp.eq.s32.totalorder %v65, 3
    %vm151 = vcmp.eq.s32.totalorder %v66, 3
    %vm152 = vcmp.eq.s32.totalorder %v67, 3
    %vm153 = vcmp.eq.s32.totalorder %v68, 3
    %s154 = sld [smem:[#allocation4 + $0x3]]
    %v155 = vstv %s154
    %v156 = vsel %vm150, %v155, %v128
    %v157 = vsel %vm151, %v155, %v129
    %v158 = vsel %vm152, %v155, %v130
    %v159 = vsel %vm153, %v155, %v131
    %s160 = sld [smem:[#allocation4 + $0x83]]
    %v161 = vstv %s160
    %v162 = vsel %vm150, %v161, %v134
    %v163 = vsel %vm151, %v161, %v135
    %v164 = vsel %vm152, %v161, %v136
    %v165 = vsel %vm153, %v161, %v137
    %s166 = sld [smem:[#allocation4 + $0x103]]
    %v167 = vstv %s166
    %v168 = vsel %vm150, %v167, %v140
    %v169 = vsel %vm151, %v167, %v141
    %v170 = vsel %vm152, %v167, %v142
    %v171 = vsel %vm153, %v167, %v143
    %s172 = sld [smem:[#allocation4 + $0x183]]
    %v173 = vstv %s172
    %v174 = vsel %vm150, %v173, %v146
    %v175 = vsel %vm151, %v173, %v147
    %v176 = vsel %vm152, %v173, %v148
    %v177 = vsel %vm153, %v173, %v149
    %vm178 = vcmp.eq.s32.totalorder %v65, 4
    %vm179 = vcmp.eq.s32.totalorder %v66, 4
    %vm180 = vcmp.eq.s32.totalorder %v67, 4
    %vm181 = vcmp.eq.s32.totalorder %v68, 4
    %s182 = sld [smem:[#allocation4 + $0x4]]
    %v183 = vstv %s182
    %v184 = vsel %vm178, %v183, %v156
    %v185 = vsel %vm179, %v183, %v157
    %v186 = vsel %vm180, %v183, %v158
    %v187 = vsel %vm181, %v183, %v159
    %s188 = sld [smem:[#allocation4 + $0x84]]
    %v189 = vstv %s188
    %v190 = vsel %vm178, %v189, %v162
    %v191 = vsel %vm179, %v189, %v163
    %v192 = vsel %vm180, %v189, %v164
    %v193 = vsel %vm181, %v189, %v165
    %s194 = sld [smem:[#allocation4 + $0x104]]
    %v195 = vstv %s194
    %v196 = vsel %vm178, %v195, %v168
    %v197 = vsel %vm179, %v195, %v169
    %v198 = vsel %vm180, %v195, %v170
    %v199 = vsel %vm181, %v195, %v171
    %s200 = sld [smem:[#allocation4 + $0x184]]
    %v201 = vstv %s200
    %v202 = vsel %vm178, %v201, %v174
    %v203 = vsel %vm179, %v201, %v175
    %v204 = vsel %vm180, %v201, %v176
    %v205 = vsel %vm181, %v201, %v177
    %vm206 = vcmp.eq.s32.totalorder %v65, 5
    %vm207 = vcmp.eq.s32.totalorder %v66, 5
    %vm208 = vcmp.eq.s32.totalorder %v67, 5
    %vm209 = vcmp.eq.s32.totalorder %v68, 5
    %s210 = sld [smem:[#allocation4 + $0x5]]
    %v211 = vstv %s210
    %v212 = vsel %vm206, %v211, %v184
    %v213 = vsel %vm207, %v211, %v185
    %v214 = vsel %vm208, %v211, %v186
    %v215 = vsel %vm209, %v211, %v187
    %s216 = sld [smem:[#allocation4 + $0x85]]
    %v217 = vstv %s216
    %v218 = vsel %vm206, %v217, %v190
    %v219 = vsel %vm207, %v217, %v191
    %v220 = vsel %vm208, %v217, %v192
    %v221 = vsel %vm209, %v217, %v193
    %s222 = sld [smem:[#allocation4 + $0x105]]
    %v223 = vstv %s222
    %v224 = vsel %vm206, %v223, %v196
    %v225 = vsel %vm207, %v223, %v197
    %v226 = vsel %vm208, %v223, %v198
    %v227 = vsel %vm209, %v223, %v199
    %s228 = sld [smem:[#allocation4 + $0x185]]
    %v229 = vstv %s228
    %v230 = vsel %vm206, %v229, %v202
    %v231 = vsel %vm207, %v229, %v203
    %v232 = vsel %vm208, %v229, %v204
    %v233 = vsel %vm209, %v229, %v205
    %vm234 = vcmp.eq.s32.totalorder %v65, 6
    %vm235 = vcmp.eq.s32.totalorder %v66, 6
    %vm236 = vcmp.eq.s32.totalorder %v67, 6
    %vm237 = vcmp.eq.s32.totalorder %v68, 6
    %s238 = sld [smem:[#allocation4 + $0x6]]
    %v239 = vstv %s238
    %v240 = vsel %vm234, %v239, %v212
    %v241 = vsel %vm235, %v239, %v213
    %v242 = vsel %vm236, %v239, %v214
    %v243 = vsel %vm237, %v239, %v215
    %s244 = sld [smem:[#allocation4 + $0x86]]
    %v245 = vstv %s244
    %v246 = vsel %vm234, %v245, %v218
    %v247 = vsel %vm235, %v245, %v219
    %v248 = vsel %vm236, %v245, %v220
    %v249 = vsel %vm237, %v245, %v221
    %s250 = sld [smem:[#allocation4 + $0x106]]
    %v251 = vstv %s250
    %v252 = vsel %vm234, %v251, %v224
    %v253 = vsel %vm235, %v251, %v225
    %v254 = vsel %vm236, %v251, %v226
    %v255 = vsel %vm237, %v251, %v227
    %s256 = sld [smem:[#allocation4 + $0x186]]
    %v257 = vstv %s256
    %v258 = vsel %vm234, %v257, %v230
    %v259 = vsel %vm235, %v257, %v231
    %v260 = vsel %vm236, %v257, %v232
    %v261 = vsel %vm237, %v257, %v233
    %vm262 = vcmp.eq.s32.totalorder %v65, 7
    %vm263 = vcmp.eq.s32.totalorder %v66, 7
    %vm264 = vcmp.eq.s32.totalorder %v67, 7
    %vm265 = vcmp.eq.s32.totalorder %v68, 7
    %s266 = sld [smem:[#allocation4 + $0x7]]
    %v267 = vstv %s266
    %v268 = vsel %vm262, %v267, %v240
    %v269 = vsel %vm263, %v267, %v241
    %v270 = vsel %vm264, %v267, %v242
    %v271 = vsel %vm265, %v267, %v243
    %s272 = sld [smem:[#allocation4 + $0x87]]
    %v273 = vstv %s272
    %v274 = vsel %vm262, %v273, %v246
    %v275 = vsel %vm263, %v273, %v247
    %v276 = vsel %vm264, %v273, %v248
    %v277 = vsel %vm265, %v273, %v249
    %s278 = sld [smem:[#allocation4 + $0x107]]
    %v279 = vstv %s278
    %v280 = vsel %vm262, %v279, %v252
    %v281 = vsel %vm263, %v279, %v253
    %v282 = vsel %vm264, %v279, %v254
    %v283 = vsel %vm265, %v279, %v255
    %s284 = sld [smem:[#allocation4 + $0x187]]
    %v285 = vstv %s284
    %v286 = vsel %vm262, %v285, %v258
    %v287 = vsel %vm263, %v285, %v259
    %v288 = vsel %vm264, %v285, %v260
    %v289 = vsel %vm265, %v285, %v261
    %vm290 = vcmp.eq.s32.totalorder %v65, 8
    %vm291 = vcmp.eq.s32.totalorder %v66, 8
    %vm292 = vcmp.eq.s32.totalorder %v67, 8
    %vm293 = vcmp.eq.s32.totalorder %v68, 8
    %s294 = sld [smem:[#allocation4 + $0x8]]
    %v295 = vstv %s294
    %v296 = vsel %vm290, %v295, %v268
    %v297 = vsel %vm291, %v295, %v269
    %v298 = vsel %vm292, %v295, %v270
    %v299 = vsel %vm293, %v295, %v271
    %s300 = sld [smem:[#allocation4 + $0x88]]
    %v301 = vstv %s300
    %v302 = vsel %vm290, %v301, %v274
    %v303 = vsel %vm291, %v301, %v275
    %v304 = vsel %vm292, %v301, %v276
    %v305 = vsel %vm293, %v301, %v277
    %s306 = sld [smem:[#allocation4 + $0x108]]
    %v307 = vstv %s306
    %v308 = vsel %vm290, %v307, %v280
    %v309 = vsel %vm291, %v307, %v281
    %v310 = vsel %vm292, %v307, %v282
    %v311 = vsel %vm293, %v307, %v283
    %s312 = sld [smem:[#allocation4 + $0x188]]
    %v313 = vstv %s312
    %v314 = vsel %vm290, %v313, %v286
    %v315 = vsel %vm291, %v313, %v287
    %v316 = vsel %vm292, %v313, %v288
    %v317 = vsel %vm293, %v313, %v289
    %vm318 = vcmp.eq.s32.totalorder %v65, 9
    %vm319 = vcmp.eq.s32.totalorder %v66, 9
    %vm320 = vcmp.eq.s32.totalorder %v67, 9
    %vm321 = vcmp.eq.s32.totalorder %v68, 9
    %s322 = sld [smem:[#allocation4 + $0x9]]
    %v323 = vstv %s322
    %v324 = vsel %vm318, %v323, %v296
    %v325 = vsel %vm319, %v323, %v297
    %v326 = vsel %vm320, %v323, %v298
    %v327 = vsel %vm321, %v323, %v299
    %s328 = sld [smem:[#allocation4 + $0x89]]
    %v329 = vstv %s328
    %v330 = vsel %vm318, %v329, %v302
    %v331 = vsel %vm319, %v329, %v303
    %v332 = vsel %vm320, %v329, %v304
    %v333 = vsel %vm321, %v329, %v305
    %s334 = sld [smem:[#allocation4 + $0x109]]
    %v335 = vstv %s334
    %v336 = vsel %vm318, %v335, %v308
    %v337 = vsel %vm319, %v335, %v309
    %v338 = vsel %vm320, %v335, %v310
    %v339 = vsel %vm321, %v335, %v311
    %s340 = sld [smem:[#allocation4 + $0x189]]
    %v341 = vstv %s340
    %v342 = vsel %vm318, %v341, %v314
    %v343 = vsel %vm319, %v341, %v315
    %v344 = vsel %vm320, %v341, %v316
    %v345 = vsel %vm321, %v341, %v317
    %vm346 = vcmp.eq.s32.totalorder %v65, 10
    %vm347 = vcmp.eq.s32.totalorder %v66, 10
    %vm348 = vcmp.eq.s32.totalorder %v67, 10
    %vm349 = vcmp.eq.s32.totalorder %v68, 10
    %s350 = sld [smem:[#allocation4 + $0xa]]
    %v351 = vstv %s350
    %v352 = vsel %vm346, %v351, %v324
    %v353 = vsel %vm347, %v351, %v325
    %v354 = vsel %vm348, %v351, %v326
    %v355 = vsel %vm349, %v351, %v327
    %s356 = sld [smem:[#allocation4 + $0x8a]]
    %v357 = vstv %s356
    %v358 = vsel %vm346, %v357, %v330
    %v359 = vsel %vm347, %v357, %v331
    %v360 = vsel %vm348, %v357, %v332
    %v361 = vsel %vm349, %v357, %v333
    %s362 = sld [smem:[#allocation4 + $0x10a]]
    %v363 = vstv %s362
    %v364 = vsel %vm346, %v363, %v336
    %v365 = vsel %vm347, %v363, %v337
    %v366 = vsel %vm348, %v363, %v338
    %v367 = vsel %vm349, %v363, %v339
    %s368 = sld [smem:[#allocation4 + $0x18a]]
    %v369 = vstv %s368
    %v370 = vsel %vm346, %v369, %v342
    %v371 = vsel %vm347, %v369, %v343
    %v372 = vsel %vm348, %v369, %v344
    %v373 = vsel %vm349, %v369, %v345
    %vm374 = vcmp.eq.s32.totalorder %v65, 11
    %vm375 = vcmp.eq.s32.totalorder %v66, 11
    %vm376 = vcmp.eq.s32.totalorder %v67, 11
    %vm377 = vcmp.eq.s32.totalorder %v68, 11
    %s378 = sld [smem:[#allocation4 + $0xb]]
    %v379 = vstv %s378
    %v380 = vsel %vm374, %v379, %v352
    %v381 = vsel %vm375, %v379, %v353
    %v382 = vsel %vm376, %v379, %v354
    %v383 = vsel %vm377, %v379, %v355
    %s384 = sld [smem:[#allocation4 + $0x8b]]
    %v385 = vstv %s384
    %v386 = vsel %vm374, %v385, %v358
    %v387 = vsel %vm375, %v385, %v359
    %v388 = vsel %vm376, %v385, %v360
    %v389 = vsel %vm377, %v385, %v361
    %s390 = sld [smem:[#allocation4 + $0x10b]]
    %v391 = vstv %s390
    %v392 = vsel %vm374, %v391, %v364
    %v393 = vsel %vm375, %v391, %v365
    %v394 = vsel %vm376, %v391, %v366
    %v395 = vsel %vm377, %v391, %v367
    %s396 = sld [smem:[#allocation4 + $0x18b]]
    %v397 = vstv %s396
    %v398 = vsel %vm374, %v397, %v370
    %v399 = vsel %vm375, %v397, %v371
    %v400 = vsel %vm376, %v397, %v372
    %v401 = vsel %vm377, %v397, %v373
    %vm402 = vcmp.eq.s32.totalorder %v65, 12
    %vm403 = vcmp.eq.s32.totalorder %v66, 12
    %vm404 = vcmp.eq.s32.totalorder %v67, 12
    %vm405 = vcmp.eq.s32.totalorder %v68, 12
    %s406 = sld [smem:[#allocation4 + $0xc]]
    %v407 = vstv %s406
    %v408 = vsel %vm402, %v407, %v380
    %v409 = vsel %vm403, %v407, %v381
    %v410 = vsel %vm404, %v407, %v382
    %v411 = vsel %vm405, %v407, %v383
    %s412 = sld [smem:[#allocation4 + $0x8c]]
    %v413 = vstv %s412
    %v414 = vsel %vm402, %v413, %v386
    %v415 = vsel %vm403, %v413, %v387
    %v416 = vsel %vm404, %v413, %v388
    %v417 = vsel %vm405, %v413, %v389
    %s418 = sld [smem:[#allocation4 + $0x10c]]
    %v419 = vstv %s418
    %v420 = vsel %vm402, %v419, %v392
    %v421 = vsel %vm403, %v419, %v393
    %v422 = vsel %vm404, %v419, %v394
    %v423 = vsel %vm405, %v419, %v395
    %s424 = sld [smem:[#allocation4 + $0x18c]]
    %v425 = vstv %s424
    %v426 = vsel %vm402, %v425, %v398
    %v427 = vsel %vm403, %v425, %v399
    %v428 = vsel %vm404, %v425, %v400
    %v429 = vsel %vm405, %v425, %v401
    %vm430 = vcmp.eq.s32.totalorder %v65, 13
    %vm431 = vcmp.eq.s32.totalorder %v66, 13
    %vm432 = vcmp.eq.s32.totalorder %v67, 13
    %vm433 = vcmp.eq.s32.totalorder %v68, 13
    %s434 = sld [smem:[#allocation4 + $0xd]]
    %v435 = vstv %s434
    %v436 = vsel %vm430, %v435, %v408
    %v437 = vsel %vm431, %v435, %v409
    %v438 = vsel %vm432, %v435, %v410
    %v439 = vsel %vm433, %v435, %v411
    %s440 = sld [smem:[#allocation4 + $0x8d]]
    %v441 = vstv %s440
    %v442 = vsel %vm430, %v441, %v414
    %v443 = vsel %vm431, %v441, %v415
    %v444 = vsel %vm432, %v441, %v416
    %v445 = vsel %vm433, %v441, %v417
    %s446 = sld [smem:[#allocation4 + $0x10d]]
    %v447 = vstv %s446
    %v448 = vsel %vm430, %v447, %v420
    %v449 = vsel %vm431, %v447, %v421
    %v450 = vsel %vm432, %v447, %v422
    %v451 = vsel %vm433, %v447, %v423
    %s452 = sld [smem:[#allocation4 + $0x18d]]
    %v453 = vstv %s452
    %v454 = vsel %vm430, %v453, %v426
    %v455 = vsel %vm431, %v453, %v427
    %v456 = vsel %vm432, %v453, %v428
    %v457 = vsel %vm433, %v453, %v429
    %vm458 = vcmp.eq.s32.totalorder %v65, 14
    %vm459 = vcmp.eq.s32.totalorder %v66, 14
    %vm460 = vcmp.eq.s32.totalorder %v67, 14
    %vm461 = vcmp.eq.s32.totalorder %v68, 14
    %s462 = sld [smem:[#allocation4 + $0xe]]
    %v463 = vstv %s462
    %v464 = vsel %vm458, %v463, %v436
    %v465 = vsel %vm459, %v463, %v437
    %v466 = vsel %vm460, %v463, %v438
    %v467 = vsel %vm461, %v463, %v439
    %s468 = sld [smem:[#allocation4 + $0x8e]]
    %v469 = vstv %s468
    %v470 = vsel %vm458, %v469, %v442
    %v471 = vsel %vm459, %v469, %v443
    %v472 = vsel %vm460, %v469, %v444
    %v473 = vsel %vm461, %v469, %v445
    %s474 = sld [smem:[#allocation4 + $0x10e]]
    %v475 = vstv %s474
    %v476 = vsel %vm458, %v475, %v448
    %v477 = vsel %vm459, %v475, %v449
    %v478 = vsel %vm460, %v475, %v450
    %v479 = vsel %vm461, %v475, %v451
    %s480 = sld [smem:[#allocation4 + $0x18e]]
    %v481 = vstv %s480
    %v482 = vsel %vm458, %v481, %v454
    %v483 = vsel %vm459, %v481, %v455
    %v484 = vsel %vm460, %v481, %v456
    %v485 = vsel %vm461, %v481, %v457
    %vm486 = vcmp.eq.s32.totalorder %v65, 15
    %vm487 = vcmp.eq.s32.totalorder %v66, 15
    %vm488 = vcmp.eq.s32.totalorder %v67, 15
    %vm489 = vcmp.eq.s32.totalorder %v68, 15
    %s490 = sld [smem:[#allocation4 + $0xf]]
    %v491 = vstv %s490
    %v492 = vsel %vm486, %v491, %v464
    %v493 = vsel %vm487, %v491, %v465
    %v494 = vsel %vm488, %v491, %v466
    %v495 = vsel %vm489, %v491, %v467
    %s496 = sld [smem:[#allocation4 + $0x8f]]
    %v497 = vstv %s496
    %v498 = vsel %vm486, %v497, %v470
    %v499 = vsel %vm487, %v497, %v471
    %v500 = vsel %vm488, %v497, %v472
    %v501 = vsel %vm489, %v497, %v473
    %s502 = sld [smem:[#allocation4 + $0x10f]]
    %v503 = vstv %s502
    %v504 = vsel %vm486, %v503, %v476
    %v505 = vsel %vm487, %v503, %v477
    %v506 = vsel %vm488, %v503, %v478
    %v507 = vsel %vm489, %v503, %v479
    %s508 = sld [smem:[#allocation4 + $0x18f]]
    %v509 = vstv %s508
    %v510 = vsel %vm486, %v509, %v482
    %v511 = vsel %vm487, %v509, %v483
    %v512 = vsel %vm488, %v509, %v484
    %v513 = vsel %vm489, %v509, %v485
    %vm514 = vcmp.eq.s32.totalorder %v65, 16
    %vm515 = vcmp.eq.s32.totalorder %v66, 16
    %vm516 = vcmp.eq.s32.totalorder %v67, 16
    %vm517 = vcmp.eq.s32.totalorder %v68, 16
    %s518 = sld [smem:[#allocation4 + $0x10]]
    %v519 = vstv %s518
    %v520 = vsel %vm514, %v519, %v492
    %v521 = vsel %vm515, %v519, %v493
    %v522 = vsel %vm516, %v519, %v494
    %v523 = vsel %vm517, %v519, %v495
    %s524 = sld [smem:[#allocation4 + $0x90]]
    %v525 = vstv %s524
    %v526 = vsel %vm514, %v525, %v498
    %v527 = vsel %vm515, %v525, %v499
    %v528 = vsel %vm516, %v525, %v500
    %v529 = vsel %vm517, %v525, %v501
    %s530 = sld [smem:[#allocation4 + $0x110]]
    %v531 = vstv %s530
    %v532 = vsel %vm514, %v531, %v504
    %v533 = vsel %vm515, %v531, %v505
    %v534 = vsel %vm516, %v531, %v506
    %v535 = vsel %vm517, %v531, %v507
    %s536 = sld [smem:[#allocation4 + $0x190]]
    %v537 = vstv %s536
    %v538 = vsel %vm514, %v537, %v510
    %v539 = vsel %vm515, %v537, %v511
    %v540 = vsel %vm516, %v537, %v512
    %v541 = vsel %vm517, %v537, %v513
    %vm542 = vcmp.eq.s32.totalorder %v65, 17
    %vm543 = vcmp.eq.s32.totalorder %v66, 17
    %vm544 = vcmp.eq.s32.totalorder %v67, 17
    %vm545 = vcmp.eq.s32.totalorder %v68, 17
    %s546 = sld [smem:[#allocation4 + $0x11]]
    %v547 = vstv %s546
    %v548 = vsel %vm542, %v547, %v520
    %v549 = vsel %vm543, %v547, %v521
    %v550 = vsel %vm544, %v547, %v522
    %v551 = vsel %vm545, %v547, %v523
    %s552 = sld [smem:[#allocation4 + $0x91]]
    %v553 = vstv %s552
    %v554 = vsel %vm542, %v553, %v526
    %v555 = vsel %vm543, %v553, %v527
    %v556 = vsel %vm544, %v553, %v528
    %v557 = vsel %vm545, %v553, %v529
    %s558 = sld [smem:[#allocation4 + $0x111]]
    %v559 = vstv %s558
    %v560 = vsel %vm542, %v559, %v532
    %v561 = vsel %vm543, %v559, %v533
    %v562 = vsel %vm544, %v559, %v534
    %v563 = vsel %vm545, %v559, %v535
    %s564 = sld [smem:[#allocation4 + $0x191]]
    %v565 = vstv %s564
    %v566 = vsel %vm542, %v565, %v538
    %v567 = vsel %vm543, %v565, %v539
    %v568 = vsel %vm544, %v565, %v540
    %v569 = vsel %vm545, %v565, %v541
    %vm570 = vcmp.eq.s32.totalorder %v65, 18
    %vm571 = vcmp.eq.s32.totalorder %v66, 18
    %vm572 = vcmp.eq.s32.totalorder %v67, 18
    %vm573 = vcmp.eq.s32.totalorder %v68, 18
    %s574 = sld [smem:[#allocation4 + $0x12]]
    %v575 = vstv %s574
    %v576 = vsel %vm570, %v575, %v548
    %v577 = vsel %vm571, %v575, %v549
    %v578 = vsel %vm572, %v575, %v550
    %v579 = vsel %vm573, %v575, %v551
    %s580 = sld [smem:[#allocation4 + $0x92]]
    %v581 = vstv %s580
    %v582 = vsel %vm570, %v581, %v554
    %v583 = vsel %vm571, %v581, %v555
    %v584 = vsel %vm572, %v581, %v556
    %v585 = vsel %vm573, %v581, %v557
    %s586 = sld [smem:[#allocation4 + $0x112]]
    %v587 = vstv %s586
    %v588 = vsel %vm570, %v587, %v560
    %v589 = vsel %vm571, %v587, %v561
    %v590 = vsel %vm572, %v587, %v562
    %v591 = vsel %vm573, %v587, %v563
    %s592 = sld [smem:[#allocation4 + $0x192]]
    %v593 = vstv %s592
    %v594 = vsel %vm570, %v593, %v566
    %v595 = vsel %vm571, %v593, %v567
    %v596 = vsel %vm572, %v593, %v568
    %v597 = vsel %vm573, %v593, %v569
    %vm598 = vcmp.eq.s32.totalorder %v65, 19
    %vm599 = vcmp.eq.s32.totalorder %v66, 19
    %vm600 = vcmp.eq.s32.totalorder %v67, 19
    %vm601 = vcmp.eq.s32.totalorder %v68, 19
    %s602 = sld [smem:[#allocation4 + $0x13]]
    %v603 = vstv %s602
    %v604 = vsel %vm598, %v603, %v576
    %v605 = vsel %vm599, %v603, %v577
    %v606 = vsel %vm600, %v603, %v578
    %v607 = vsel %vm601, %v603, %v579
    %s608 = sld [smem:[#allocation4 + $0x93]]
    %v609 = vstv %s608
    %v610 = vsel %vm598, %v609, %v582
    %v611 = vsel %vm599, %v609, %v583
    %v612 = vsel %vm600, %v609, %v584
    %v613 = vsel %vm601, %v609, %v585
    %s614 = sld [smem:[#allocation4 + $0x113]]
    %v615 = vstv %s614
    %v616 = vsel %vm598, %v615, %v588
    %v617 = vsel %vm599, %v615, %v589
    %v618 = vsel %vm600, %v615, %v590
    %v619 = vsel %vm601, %v615, %v591
    %s620 = sld [smem:[#allocation4 + $0x193]]
    %v621 = vstv %s620
    %v622 = vsel %vm598, %v621, %v594
    %v623 = vsel %vm599, %v621, %v595
    %v624 = vsel %vm600, %v621, %v596
    %v625 = vsel %vm601, %v621, %v597
    %vm626 = vcmp.eq.s32.totalorder %v65, 20
    %vm627 = vcmp.eq.s32.totalorder %v66, 20
    %vm628 = vcmp.eq.s32.totalorder %v67, 20
    %vm629 = vcmp.eq.s32.totalorder %v68, 20
    %s630 = sld [smem:[#allocation4 + $0x14]]
    %v631 = vstv %s630
    %v632 = vsel %vm626, %v631, %v604
    %v633 = vsel %vm627, %v631, %v605
    %v634 = vsel %vm628, %v631, %v606
    %v635 = vsel %vm629, %v631, %v607
    %s636 = sld [smem:[#allocation4 + $0x94]]
    %v637 = vstv %s636
    %v638 = vsel %vm626, %v637, %v610
    %v639 = vsel %vm627, %v637, %v611
    %v640 = vsel %vm628, %v637, %v612
    %v641 = vsel %vm629, %v637, %v613
    %s642 = sld [smem:[#allocation4 + $0x114]]
    %v643 = vstv %s642
    %v644 = vsel %vm626, %v643, %v616
    %v645 = vsel %vm627, %v643, %v617
    %v646 = vsel %vm628, %v643, %v618
    %v647 = vsel %vm629, %v643, %v619
    %s648 = sld [smem:[#allocation4 + $0x194]]
    %v649 = vstv %s648
    %v650 = vsel %vm626, %v649, %v622
    %v651 = vsel %vm627, %v649, %v623
    %v652 = vsel %vm628, %v649, %v624
    %v653 = vsel %vm629, %v649, %v625
    %vm654 = vcmp.eq.s32.totalorder %v65, 21
    %vm655 = vcmp.eq.s32.totalorder %v66, 21
    %vm656 = vcmp.eq.s32.totalorder %v67, 21
    %vm657 = vcmp.eq.s32.totalorder %v68, 21
    %s658 = sld [smem:[#allocation4 + $0x15]]
    %v659 = vstv %s658
    %v660 = vsel %vm654, %v659, %v632
    %v661 = vsel %vm655, %v659, %v633
    %v662 = vsel %vm656, %v659, %v634
    %v663 = vsel %vm657, %v659, %v635
    %s664 = sld [smem:[#allocation4 + $0x95]]
    %v665 = vstv %s664
    %v666 = vsel %vm654, %v665, %v638
    %v667 = vsel %vm655, %v665, %v639
    %v668 = vsel %vm656, %v665, %v640
    %v669 = vsel %vm657, %v665, %v641
    %s670 = sld [smem:[#allocation4 + $0x115]]
    %v671 = vstv %s670
    %v672 = vsel %vm654, %v671, %v644
    %v673 = vsel %vm655, %v671, %v645
    %v674 = vsel %vm656, %v671, %v646
    %v675 = vsel %vm657, %v671, %v647
    %s676 = sld [smem:[#allocation4 + $0x195]]
    %v677 = vstv %s676
    %v678 = vsel %vm654, %v677, %v650
    %v679 = vsel %vm655, %v677, %v651
    %v680 = vsel %vm656, %v677, %v652
    %v681 = vsel %vm657, %v677, %v653
    %vm682 = vcmp.eq.s32.totalorder %v65, 22
    %vm683 = vcmp.eq.s32.totalorder %v66, 22
    %vm684 = vcmp.eq.s32.totalorder %v67, 22
    %vm685 = vcmp.eq.s32.totalorder %v68, 22
    %s686 = sld [smem:[#allocation4 + $0x16]]
    %v687 = vstv %s686
    %v688 = vsel %vm682, %v687, %v660
    %v689 = vsel %vm683, %v687, %v661
    %v690 = vsel %vm684, %v687, %v662
    %v691 = vsel %vm685, %v687, %v663
    %s692 = sld [smem:[#allocation4 + $0x96]]
    %v693 = vstv %s692
    %v694 = vsel %vm682, %v693, %v666
    %v695 = vsel %vm683, %v693, %v667
    %v696 = vsel %vm684, %v693, %v668
    %v697 = vsel %vm685, %v693, %v669
    %s698 = sld [smem:[#allocation4 + $0x116]]
    %v699 = vstv %s698
    %v700 = vsel %vm682, %v699, %v672
    %v701 = vsel %vm683, %v699, %v673
    %v702 = vsel %vm684, %v699, %v674
    %v703 = vsel %vm685, %v699, %v675
    %s704 = sld [smem:[#allocation4 + $0x196]]
    %v705 = vstv %s704
    %v706 = vsel %vm682, %v705, %v678
    %v707 = vsel %vm683, %v705, %v679
    %v708 = vsel %vm684, %v705, %v680
    %v709 = vsel %vm685, %v705, %v681
    %vm710 = vcmp.eq.s32.totalorder %v65, 23
    %vm711 = vcmp.eq.s32.totalorder %v66, 23
    %vm712 = vcmp.eq.s32.totalorder %v67, 23
    %vm713 = vcmp.eq.s32.totalorder %v68, 23
    %s714 = sld [smem:[#allocation4 + $0x17]]
    %v715 = vstv %s714
    %v716 = vsel %vm710, %v715, %v688
    %v717 = vsel %vm711, %v715, %v689
    %v718 = vsel %vm712, %v715, %v690
    %v719 = vsel %vm713, %v715, %v691
    %s720 = sld [smem:[#allocation4 + $0x97]]
    %v721 = vstv %s720
    %v722 = vsel %vm710, %v721, %v694
    %v723 = vsel %vm711, %v721, %v695
    %v724 = vsel %vm712, %v721, %v696
    %v725 = vsel %vm713, %v721, %v697
    %s726 = sld [smem:[#allocation4 + $0x117]]
    %v727 = vstv %s726
    %v728 = vsel %vm710, %v727, %v700
    %v729 = vsel %vm711, %v727, %v701
    %v730 = vsel %vm712, %v727, %v702
    %v731 = vsel %vm713, %v727, %v703
    %s732 = sld [smem:[#allocation4 + $0x197]]
    %v733 = vstv %s732
    %v734 = vsel %vm710, %v733, %v706
    %v735 = vsel %vm711, %v733, %v707
    %v736 = vsel %vm712, %v733, %v708
    %v737 = vsel %vm713, %v733, %v709
    %vm738 = vcmp.eq.s32.totalorder %v65, 24
    %vm739 = vcmp.eq.s32.totalorder %v66, 24
    %vm740 = vcmp.eq.s32.totalorder %v67, 24
    %vm741 = vcmp.eq.s32.totalorder %v68, 24
    %s742 = sld [smem:[#allocation4 + $0x18]]
    %v743 = vstv %s742
    %v744 = vsel %vm738, %v743, %v716
    %v745 = vsel %vm739, %v743, %v717
    %v746 = vsel %vm740, %v743, %v718
    %v747 = vsel %vm741, %v743, %v719
    %s748 = sld [smem:[#allocation4 + $0x98]]
    %v749 = vstv %s748
    %v750 = vsel %vm738, %v749, %v722
    %v751 = vsel %vm739, %v749, %v723
    %v752 = vsel %vm740, %v749, %v724
    %v753 = vsel %vm741, %v749, %v725
    %s754 = sld [smem:[#allocation4 + $0x118]]
    %v755 = vstv %s754
    %v756 = vsel %vm738, %v755, %v728
    %v757 = vsel %vm739, %v755, %v729
    %v758 = vsel %vm740, %v755, %v730
    %v759 = vsel %vm741, %v755, %v731
    %s760 = sld [smem:[#allocation4 + $0x198]]
    %v761 = vstv %s760
    %v762 = vsel %vm738, %v761, %v734
    %v763 = vsel %vm739, %v761, %v735
    %v764 = vsel %vm740, %v761, %v736
    %v765 = vsel %vm741, %v761, %v737
    %vm766 = vcmp.eq.s32.totalorder %v65, 25
    %vm767 = vcmp.eq.s32.totalorder %v66, 25
    %vm768 = vcmp.eq.s32.totalorder %v67, 25
    %vm769 = vcmp.eq.s32.totalorder %v68, 25
    %s770 = sld [smem:[#allocation4 + $0x19]]
    %v771 = vstv %s770
    %v772 = vsel %vm766, %v771, %v744
    %v773 = vsel %vm767, %v771, %v745
    %v774 = vsel %vm768, %v771, %v746
    %v775 = vsel %vm769, %v771, %v747
    %s776 = sld [smem:[#allocation4 + $0x99]]
    %v777 = vstv %s776
    %v778 = vsel %vm766, %v777, %v750
    %v779 = vsel %vm767, %v777, %v751
    %v780 = vsel %vm768, %v777, %v752
    %v781 = vsel %vm769, %v777, %v753
    %s782 = sld [smem:[#allocation4 + $0x119]]
    %v783 = vstv %s782
    %v784 = vsel %vm766, %v783, %v756
    %v785 = vsel %vm767, %v783, %v757
    %v786 = vsel %vm768, %v783, %v758
    %v787 = vsel %vm769, %v783, %v759
    %s788 = sld [smem:[#allocation4 + $0x199]]
    %v789 = vstv %s788
    %v790 = vsel %vm766, %v789, %v762
    %v791 = vsel %vm767, %v789, %v763
    %v792 = vsel %vm768, %v789, %v764
    %v793 = vsel %vm769, %v789, %v765
    %vm794 = vcmp.eq.s32.totalorder %v65, 26
    %vm795 = vcmp.eq.s32.totalorder %v66, 26
    %vm796 = vcmp.eq.s32.totalorder %v67, 26
    %vm797 = vcmp.eq.s32.totalorder %v68, 26
    %s798 = sld [smem:[#allocation4 + $0x1a]]
    %v799 = vstv %s798
    %v800 = vsel %vm794, %v799, %v772
    %v801 = vsel %vm795, %v799, %v773
    %v802 = vsel %vm796, %v799, %v774
    %v803 = vsel %vm797, %v799, %v775
    %s804 = sld [smem:[#allocation4 + $0x9a]]
    %v805 = vstv %s804
    %v806 = vsel %vm794, %v805, %v778
    %v807 = vsel %vm795, %v805, %v779
    %v808 = vsel %vm796, %v805, %v780
    %v809 = vsel %vm797, %v805, %v781
    %s810 = sld [smem:[#allocation4 + $0x11a]]
    %v811 = vstv %s810
    %v812 = vsel %vm794, %v811, %v784
    %v813 = vsel %vm795, %v811, %v785
    %v814 = vsel %vm796, %v811, %v786
    %v815 = vsel %vm797, %v811, %v787
    %s816 = sld [smem:[#allocation4 + $0x19a]]
    %v817 = vstv %s816
    %v818 = vsel %vm794, %v817, %v790
    %v819 = vsel %vm795, %v817, %v791
    %v820 = vsel %vm796, %v817, %v792
    %v821 = vsel %vm797, %v817, %v793
    %vm822 = vcmp.eq.s32.totalorder %v65, 27
    %vm823 = vcmp.eq.s32.totalorder %v66, 27
    %vm824 = vcmp.eq.s32.totalorder %v67, 27
    %vm825 = vcmp.eq.s32.totalorder %v68, 27
    %s826 = sld [smem:[#allocation4 + $0x1b]]
    %v827 = vstv %s826
    %v828 = vsel %vm822, %v827, %v800
    %v829 = vsel %vm823, %v827, %v801
    %v830 = vsel %vm824, %v827, %v802
    %v831 = vsel %vm825, %v827, %v803
    %s832 = sld [smem:[#allocation4 + $0x9b]]
    %v833 = vstv %s832
    %v834 = vsel %vm822, %v833, %v806
    %v835 = vsel %vm823, %v833, %v807
    %v836 = vsel %vm824, %v833, %v808
    %v837 = vsel %vm825, %v833, %v809
    %s838 = sld [smem:[#allocation4 + $0x11b]]
    %v839 = vstv %s838
    %v840 = vsel %vm822, %v839, %v812
    %v841 = vsel %vm823, %v839, %v813
    %v842 = vsel %vm824, %v839, %v814
    %v843 = vsel %vm825, %v839, %v815
    %s844 = sld [smem:[#allocation4 + $0x19b]]
    %v845 = vstv %s844
    %v846 = vsel %vm822, %v845, %v818
    %v847 = vsel %vm823, %v845, %v819
    %v848 = vsel %vm824, %v845, %v820
    %v849 = vsel %vm825, %v845, %v821
    %vm850 = vcmp.eq.s32.totalorder %v65, 28
    %vm851 = vcmp.eq.s32.totalorder %v66, 28
    %vm852 = vcmp.eq.s32.totalorder %v67, 28
    %vm853 = vcmp.eq.s32.totalorder %v68, 28
    %s854 = sld [smem:[#allocation4 + $0x1c]]
    %v855 = vstv %s854
    %v856 = vsel %vm850, %v855, %v828
    %v857 = vsel %vm851, %v855, %v829
    %v858 = vsel %vm852, %v855, %v830
    %v859 = vsel %vm853, %v855, %v831
    %s860 = sld [smem:[#allocation4 + $0x9c]]
    %v861 = vstv %s860
    %v862 = vsel %vm850, %v861, %v834
    %v863 = vsel %vm851, %v861, %v835
    %v864 = vsel %vm852, %v861, %v836
    %v865 = vsel %vm853, %v861, %v837
    %s866 = sld [smem:[#allocation4 + $0x11c]]
    %v867 = vstv %s866
    %v868 = vsel %vm850, %v867, %v840
    %v869 = vsel %vm851, %v867, %v841
    %v870 = vsel %vm852, %v867, %v842
    %v871 = vsel %vm853, %v867, %v843
    %s872 = sld [smem:[#allocation4 + $0x19c]]
    %v873 = vstv %s872
    %v874 = vsel %vm850, %v873, %v846
    %v875 = vsel %vm851, %v873, %v847
    %v876 = vsel %vm852, %v873, %v848
    %v877 = vsel %vm853, %v873, %v849
    %vm878 = vcmp.eq.s32.totalorder %v65, 29
    %vm879 = vcmp.eq.s32.totalorder %v66, 29
    %vm880 = vcmp.eq.s32.totalorder %v67, 29
    %vm881 = vcmp.eq.s32.totalorder %v68, 29
    %s882 = sld [smem:[#allocation4 + $0x1d]]
    %v883 = vstv %s882
    %v884 = vsel %vm878, %v883, %v856
    %v885 = vsel %vm879, %v883, %v857
    %v886 = vsel %vm880, %v883, %v858
    %v887 = vsel %vm881, %v883, %v859
    %s888 = sld [smem:[#allocation4 + $0x9d]]
    %v889 = vstv %s888
    %v890 = vsel %vm878, %v889, %v862
    %v891 = vsel %vm879, %v889, %v863
    %v892 = vsel %vm880, %v889, %v864
    %v893 = vsel %vm881, %v889, %v865
    %s894 = sld [smem:[#allocation4 + $0x11d]]
    %v895 = vstv %s894
    %v896 = vsel %vm878, %v895, %v868
    %v897 = vsel %vm879, %v895, %v869
    %v898 = vsel %vm880, %v895, %v870
    %v899 = vsel %vm881, %v895, %v871
    %s900 = sld [smem:[#allocation4 + $0x19d]]
    %v901 = vstv %s900
    %v902 = vsel %vm878, %v901, %v874
    %v903 = vsel %vm879, %v901, %v875
    %v904 = vsel %vm880, %v901, %v876
    %v905 = vsel %vm881, %v901, %v877
    %vm906 = vcmp.eq.s32.totalorder %v65, 30
    %vm907 = vcmp.eq.s32.totalorder %v66, 30
    %vm908 = vcmp.eq.s32.totalorder %v67, 30
    %vm909 = vcmp.eq.s32.totalorder %v68, 30
    %s910 = sld [smem:[#allocation4 + $0x1e]]
    %v911 = vstv %s910
    %v912 = vsel %vm906, %v911, %v884
    %v913 = vsel %vm907, %v911, %v885
    %v914 = vsel %vm908, %v911, %v886
    %v915 = vsel %vm909, %v911, %v887
    %s916 = sld [smem:[#allocation4 + $0x9e]]
    %v917 = vstv %s916
    %v918 = vsel %vm906, %v917, %v890
    %v919 = vsel %vm907, %v917, %v891
    %v920 = vsel %vm908, %v917, %v892
    %v921 = vsel %vm909, %v917, %v893
    %s922 = sld [smem:[#allocation4 + $0x11e]]
    %v923 = vstv %s922
    %v924 = vsel %vm906, %v923, %v896
    %v925 = vsel %vm907, %v923, %v897
    %v926 = vsel %vm908, %v923, %v898
    %v927 = vsel %vm909, %v923, %v899
    %s928 = sld [smem:[#allocation4 + $0x19e]]
    %v929 = vstv %s928
    %v930 = vsel %vm906, %v929, %v902
    %v931 = vsel %vm907, %v929, %v903
    %v932 = vsel %vm908, %v929, %v904
    %v933 = vsel %vm909, %v929, %v905
    %vm934 = vcmp.eq.s32.totalorder %v65, 31
    %vm935 = vcmp.eq.s32.totalorder %v66, 31
    %vm936 = vcmp.eq.s32.totalorder %v67, 31
    %vm937 = vcmp.eq.s32.totalorder %v68, 31
    %s938 = sld [smem:[#allocation4 + $0x1f]]
    %v939 = vstv %s938
    %v940 = vsel %vm934, %v939, %v912
    %v941 = vsel %vm935, %v939, %v913
    %v942 = vsel %vm936, %v939, %v914
    %v943 = vsel %vm937, %v939, %v915
    %s944 = sld [smem:[#allocation4 + $0x9f]]
    %v945 = vstv %s944
    %v946 = vsel %vm934, %v945, %v918
    %v947 = vsel %vm935, %v945, %v919
    %v948 = vsel %vm936, %v945, %v920
    %v949 = vsel %vm937, %v945, %v921
    %s950 = sld [smem:[#allocation4 + $0x11f]]
    %v951 = vstv %s950
    %v952 = vsel %vm934, %v951, %v924
    %v953 = vsel %vm935, %v951, %v925
    %v954 = vsel %vm936, %v951, %v926
    %v955 = vsel %vm937, %v951, %v927
    %s956 = sld [smem:[#allocation4 + $0x19f]]
    %v957 = vstv %s956
    %v958 = vsel %vm934, %v957, %v930
    %v959 = vsel %vm935, %v957, %v931
    %v960 = vsel %vm936, %v957, %v932
    %v961 = vsel %vm937, %v957, %v933
    %vm962 = vcmp.eq.s32.totalorder %v65, 32
    %vm963 = vcmp.eq.s32.totalorder %v66, 32
    %vm964 = vcmp.eq.s32.totalorder %v67, 32
    %vm965 = vcmp.eq.s32.totalorder %v68, 32
    %s966 = sld [smem:[#allocation4 + $0x20]]
    %v967 = vstv %s966
    %v968 = vsel %vm962, %v967, %v940
    %v969 = vsel %vm963, %v967, %v941
    %v970 = vsel %vm964, %v967, %v942
    %v971 = vsel %vm965, %v967, %v943
    %s972 = sld [smem:[#allocation4 + $0xa0]]
    %v973 = vstv %s972
    %v974 = vsel %vm962, %v973, %v946
    %v975 = vsel %vm963, %v973, %v947
    %v976 = vsel %vm964, %v973, %v948
    %v977 = vsel %vm965, %v973, %v949
    %s978 = sld [smem:[#allocation4 + $0x120]]
    %v979 = vstv %s978
    %v980 = vsel %vm962, %v979, %v952
    %v981 = vsel %vm963, %v979, %v953
    %v982 = vsel %vm964, %v979, %v954
    %v983 = vsel %vm965, %v979, %v955
    %s984 = sld [smem:[#allocation4 + $0x1a0]]
    %v985 = vstv %s984
    %v986 = vsel %vm962, %v985, %v958
    %v987 = vsel %vm963, %v985, %v959
    %v988 = vsel %vm964, %v985, %v960
    %v989 = vsel %vm965, %v985, %v961
    %vm990 = vcmp.eq.s32.totalorder %v65, 33
    %vm991 = vcmp.eq.s32.totalorder %v66, 33
    %vm992 = vcmp.eq.s32.totalorder %v67, 33
    %vm993 = vcmp.eq.s32.totalorder %v68, 33
    %s994 = sld [smem:[#allocation4 + $0x21]]
    %v995 = vstv %s994
    %v996 = vsel %vm990, %v995, %v968
    %v997 = vsel %vm991, %v995, %v969
    %v998 = vsel %vm992, %v995, %v970
    %v999 = vsel %vm993, %v995, %v971
    %s1000 = sld [smem:[#allocation4 + $0xa1]]
    %v1001 = vstv %s1000
    %v1002 = vsel %vm990, %v1001, %v974
    %v1003 = vsel %vm991, %v1001, %v975
    %v1004 = vsel %vm992, %v1001, %v976
    %v1005 = vsel %vm993, %v1001, %v977
    %s1006 = sld [smem:[#allocation4 + $0x121]]
    %v1007 = vstv %s1006
    %v1008 = vsel %vm990, %v1007, %v980
    %v1009 = vsel %vm991, %v1007, %v981
    %v1010 = vsel %vm992, %v1007, %v982
    %v1011 = vsel %vm993, %v1007, %v983
    %s1012 = sld [smem:[#allocation4 + $0x1a1]]
    %v1013 = vstv %s1012
    %v1014 = vsel %vm990, %v1013, %v986
    %v1015 = vsel %vm991, %v1013, %v987
    %v1016 = vsel %vm992, %v1013, %v988
    %v1017 = vsel %vm993, %v1013, %v989
    %vm1018 = vcmp.eq.s32.totalorder %v65, 34
    %vm1019 = vcmp.eq.s32.totalorder %v66, 34
    %vm1020 = vcmp.eq.s32.totalorder %v67, 34
    %vm1021 = vcmp.eq.s32.totalorder %v68, 34
    %s1022 = sld [smem:[#allocation4 + $0x22]]
    %v1023 = vstv %s1022
    %v1024 = vsel %vm1018, %v1023, %v996
    %v1025 = vsel %vm1019, %v1023, %v997
    %v1026 = vsel %vm1020, %v1023, %v998
    %v1027 = vsel %vm1021, %v1023, %v999
    %s1028 = sld [smem:[#allocation4 + $0xa2]]
    %v1029 = vstv %s1028
    %v1030 = vsel %vm1018, %v1029, %v1002
    %v1031 = vsel %vm1019, %v1029, %v1003
    %v1032 = vsel %vm1020, %v1029, %v1004
    %v1033 = vsel %vm1021, %v1029, %v1005
    %s1034 = sld [smem:[#allocation4 + $0x122]]
    %v1035 = vstv %s1034
    %v1036 = vsel %vm1018, %v1035, %v1008
    %v1037 = vsel %vm1019, %v1035, %v1009
    %v1038 = vsel %vm1020, %v1035, %v1010
    %v1039 = vsel %vm1021, %v1035, %v1011
    %s1040 = sld [smem:[#allocation4 + $0x1a2]]
    %v1041 = vstv %s1040
    %v1042 = vsel %vm1018, %v1041, %v1014
    %v1043 = vsel %vm1019, %v1041, %v1015
    %v1044 = vsel %vm1020, %v1041, %v1016
    %v1045 = vsel %vm1021, %v1041, %v1017
    %vm1046 = vcmp.eq.s32.totalorder %v65, 35
    %vm1047 = vcmp.eq.s32.totalorder %v66, 35
    %vm1048 = vcmp.eq.s32.totalorder %v67, 35
    %vm1049 = vcmp.eq.s32.totalorder %v68, 35
    %s1050 = sld [smem:[#allocation4 + $0x23]]
    %v1051 = vstv %s1050
    %v1052 = vsel %vm1046, %v1051, %v1024
    %v1053 = vsel %vm1047, %v1051, %v1025
    %v1054 = vsel %vm1048, %v1051, %v1026
    %v1055 = vsel %vm1049, %v1051, %v1027
    %s1056 = sld [smem:[#allocation4 + $0xa3]]
    %v1057 = vstv %s1056
    %v1058 = vsel %vm1046, %v1057, %v1030
    %v1059 = vsel %vm1047, %v1057, %v1031
    %v1060 = vsel %vm1048, %v1057, %v1032
    %v1061 = vsel %vm1049, %v1057, %v1033
    %s1062 = sld [smem:[#allocation4 + $0x123]]
    %v1063 = vstv %s1062
    %v1064 = vsel %vm1046, %v1063, %v1036
    %v1065 = vsel %vm1047, %v1063, %v1037
    %v1066 = vsel %vm1048, %v1063, %v1038
    %v1067 = vsel %vm1049, %v1063, %v1039
    %s1068 = sld [smem:[#allocation4 + $0x1a3]]
    %v1069 = vstv %s1068
    %v1070 = vsel %vm1046, %v1069, %v1042
    %v1071 = vsel %vm1047, %v1069, %v1043
    %v1072 = vsel %vm1048, %v1069, %v1044
    %v1073 = vsel %vm1049, %v1069, %v1045
    %vm1074 = vcmp.eq.s32.totalorder %v65, 36
    %vm1075 = vcmp.eq.s32.totalorder %v66, 36
    %vm1076 = vcmp.eq.s32.totalorder %v67, 36
    %vm1077 = vcmp.eq.s32.totalorder %v68, 36
    %s1078 = sld [smem:[#allocation4 + $0x24]]
    %v1079 = vstv %s1078
    %v1080 = vsel %vm1074, %v1079, %v1052
    %v1081 = vsel %vm1075, %v1079, %v1053
    %v1082 = vsel %vm1076, %v1079, %v1054
    %v1083 = vsel %vm1077, %v1079, %v1055
    %s1084 = sld [smem:[#allocation4 + $0xa4]]
    %v1085 = vstv %s1084
    %v1086 = vsel %vm1074, %v1085, %v1058
    %v1087 = vsel %vm1075, %v1085, %v1059
    %v1088 = vsel %vm1076, %v1085, %v1060
    %v1089 = vsel %vm1077, %v1085, %v1061
    %s1090 = sld [smem:[#allocation4 + $0x124]]
    %v1091 = vstv %s1090
    %v1092 = vsel %vm1074, %v1091, %v1064
    %v1093 = vsel %vm1075, %v1091, %v1065
    %v1094 = vsel %vm1076, %v1091, %v1066
    %v1095 = vsel %vm1077, %v1091, %v1067
    %s1096 = sld [smem:[#allocation4 + $0x1a4]]
    %v1097 = vstv %s1096
    %v1098 = vsel %vm1074, %v1097, %v1070
    %v1099 = vsel %vm1075, %v1097, %v1071
    %v1100 = vsel %vm1076, %v1097, %v1072
    %v1101 = vsel %vm1077, %v1097, %v1073
    %vm1102 = vcmp.eq.s32.totalorder %v65, 37
    %vm1103 = vcmp.eq.s32.totalorder %v66, 37
    %vm1104 = vcmp.eq.s32.totalorder %v67, 37
    %vm1105 = vcmp.eq.s32.totalorder %v68, 37
    %s1106 = sld [smem:[#allocation4 + $0x25]]
    %v1107 = vstv %s1106
    %v1108 = vsel %vm1102, %v1107, %v1080
    %v1109 = vsel %vm1103, %v1107, %v1081
    %v1110 = vsel %vm1104, %v1107, %v1082
    %v1111 = vsel %vm1105, %v1107, %v1083
    %s1112 = sld [smem:[#allocation4 + $0xa5]]
    %v1113 = vstv %s1112
    %v1114 = vsel %vm1102, %v1113, %v1086
    %v1115 = vsel %vm1103, %v1113, %v1087
    %v1116 = vsel %vm1104, %v1113, %v1088
    %v1117 = vsel %vm1105, %v1113, %v1089
    %s1118 = sld [smem:[#allocation4 + $0x125]]
    %v1119 = vstv %s1118
    %v1120 = vsel %vm1102, %v1119, %v1092
    %v1121 = vsel %vm1103, %v1119, %v1093
    %v1122 = vsel %vm1104, %v1119, %v1094
    %v1123 = vsel %vm1105, %v1119, %v1095
    %s1124 = sld [smem:[#allocation4 + $0x1a5]]
    %v1125 = vstv %s1124
    %v1126 = vsel %vm1102, %v1125, %v1098
    %v1127 = vsel %vm1103, %v1125, %v1099
    %v1128 = vsel %vm1104, %v1125, %v1100
    %v1129 = vsel %vm1105, %v1125, %v1101
    %vm1130 = vcmp.eq.s32.totalorder %v65, 38
    %vm1131 = vcmp.eq.s32.totalorder %v66, 38
    %vm1132 = vcmp.eq.s32.totalorder %v67, 38
    %vm1133 = vcmp.eq.s32.totalorder %v68, 38
    %s1134 = sld [smem:[#allocation4 + $0x26]]
    %v1135 = vstv %s1134
    %v1136 = vsel %vm1130, %v1135, %v1108
    %v1137 = vsel %vm1131, %v1135, %v1109
    %v1138 = vsel %vm1132, %v1135, %v1110
    %v1139 = vsel %vm1133, %v1135, %v1111
    %s1140 = sld [smem:[#allocation4 + $0xa6]]
    %v1141 = vstv %s1140
    %v1142 = vsel %vm1130, %v1141, %v1114
    %v1143 = vsel %vm1131, %v1141, %v1115
    %v1144 = vsel %vm1132, %v1141, %v1116
    %v1145 = vsel %vm1133, %v1141, %v1117
    %s1146 = sld [smem:[#allocation4 + $0x126]]
    %v1147 = vstv %s1146
    %v1148 = vsel %vm1130, %v1147, %v1120
    %v1149 = vsel %vm1131, %v1147, %v1121
    %v1150 = vsel %vm1132, %v1147, %v1122
    %v1151 = vsel %vm1133, %v1147, %v1123
    %s1152 = sld [smem:[#allocation4 + $0x1a6]]
    %v1153 = vstv %s1152
    %v1154 = vsel %vm1130, %v1153, %v1126
    %v1155 = vsel %vm1131, %v1153, %v1127
    %v1156 = vsel %vm1132, %v1153, %v1128
    %v1157 = vsel %vm1133, %v1153, %v1129
    %vm1158 = vcmp.eq.s32.totalorder %v65, 39
    %vm1159 = vcmp.eq.s32.totalorder %v66, 39
    %vm1160 = vcmp.eq.s32.totalorder %v67, 39
    %vm1161 = vcmp.eq.s32.totalorder %v68, 39
    %s1162 = sld [smem:[#allocation4 + $0x27]]
    %v1163 = vstv %s1162
    %v1164 = vsel %vm1158, %v1163, %v1136
    %v1165 = vsel %vm1159, %v1163, %v1137
    %v1166 = vsel %vm1160, %v1163, %v1138
    %v1167 = vsel %vm1161, %v1163, %v1139
    %s1168 = sld [smem:[#allocation4 + $0xa7]]
    %v1169 = vstv %s1168
    %v1170 = vsel %vm1158, %v1169, %v1142
    %v1171 = vsel %vm1159, %v1169, %v1143
    %v1172 = vsel %vm1160, %v1169, %v1144
    %v1173 = vsel %vm1161, %v1169, %v1145
    %s1174 = sld [smem:[#allocation4 + $0x127]]
    %v1175 = vstv %s1174
    %v1176 = vsel %vm1158, %v1175, %v1148
    %v1177 = vsel %vm1159, %v1175, %v1149
    %v1178 = vsel %vm1160, %v1175, %v1150
    %v1179 = vsel %vm1161, %v1175, %v1151
    %s1180 = sld [smem:[#allocation4 + $0x1a7]]
    %v1181 = vstv %s1180
    %v1182 = vsel %vm1158, %v1181, %v1154
    %v1183 = vsel %vm1159, %v1181, %v1155
    %v1184 = vsel %vm1160, %v1181, %v1156
    %v1185 = vsel %vm1161, %v1181, %v1157
    %vm1186 = vcmp.eq.s32.totalorder %v65, 40
    %vm1187 = vcmp.eq.s32.totalorder %v66, 40
    %vm1188 = vcmp.eq.s32.totalorder %v67, 40
    %vm1189 = vcmp.eq.s32.totalorder %v68, 40
    %s1190 = sld [smem:[#allocation4 + $0x28]]
    %v1191 = vstv %s1190
    %v1192 = vsel %vm1186, %v1191, %v1164
    %v1193 = vsel %vm1187, %v1191, %v1165
    %v1194 = vsel %vm1188, %v1191, %v1166
    %v1195 = vsel %vm1189, %v1191, %v1167
    %s1196 = sld [smem:[#allocation4 + $0xa8]]
    %v1197 = vstv %s1196
    %v1198 = vsel %vm1186, %v1197, %v1170
    %v1199 = vsel %vm1187, %v1197, %v1171
    %v1200 = vsel %vm1188, %v1197, %v1172
    %v1201 = vsel %vm1189, %v1197, %v1173
    %s1202 = sld [smem:[#allocation4 + $0x128]]
    %v1203 = vstv %s1202
    %v1204 = vsel %vm1186, %v1203, %v1176
    %v1205 = vsel %vm1187, %v1203, %v1177
    %v1206 = vsel %vm1188, %v1203, %v1178
    %v1207 = vsel %vm1189, %v1203, %v1179
    %s1208 = sld [smem:[#allocation4 + $0x1a8]]
    %v1209 = vstv %s1208
    %v1210 = vsel %vm1186, %v1209, %v1182
    %v1211 = vsel %vm1187, %v1209, %v1183
    %v1212 = vsel %vm1188, %v1209, %v1184
    %v1213 = vsel %vm1189, %v1209, %v1185
    %vm1214 = vcmp.eq.s32.totalorder %v65, 41
    %vm1215 = vcmp.eq.s32.totalorder %v66, 41
    %vm1216 = vcmp.eq.s32.totalorder %v67, 41
    %vm1217 = vcmp.eq.s32.totalorder %v68, 41
    %s1218 = sld [smem:[#allocation4 + $0x29]]
    %v1219 = vstv %s1218
    %v1220 = vsel %vm1214, %v1219, %v1192
    %v1221 = vsel %vm1215, %v1219, %v1193
    %v1222 = vsel %vm1216, %v1219, %v1194
    %v1223 = vsel %vm1217, %v1219, %v1195
    %s1224 = sld [smem:[#allocation4 + $0xa9]]
    %v1225 = vstv %s1224
    %v1226 = vsel %vm1214, %v1225, %v1198
    %v1227 = vsel %vm1215, %v1225, %v1199
    %v1228 = vsel %vm1216, %v1225, %v1200
    %v1229 = vsel %vm1217, %v1225, %v1201
    %s1230 = sld [smem:[#allocation4 + $0x129]]
    %v1231 = vstv %s1230
    %v1232 = vsel %vm1214, %v1231, %v1204
    %v1233 = vsel %vm1215, %v1231, %v1205
    %v1234 = vsel %vm1216, %v1231, %v1206
    %v1235 = vsel %vm1217, %v1231, %v1207
    %s1236 = sld [smem:[#allocation4 + $0x1a9]]
    %v1237 = vstv %s1236
    %v1238 = vsel %vm1214, %v1237, %v1210
    %v1239 = vsel %vm1215, %v1237, %v1211
    %v1240 = vsel %vm1216, %v1237, %v1212
    %v1241 = vsel %vm1217, %v1237, %v1213
    %vm1242 = vcmp.eq.s32.totalorder %v65, 42
    %vm1243 = vcmp.eq.s32.totalorder %v66, 42
    %vm1244 = vcmp.eq.s32.totalorder %v67, 42
    %vm1245 = vcmp.eq.s32.totalorder %v68, 42
    %s1246 = sld [smem:[#allocation4 + $0x2a]]
    %v1247 = vstv %s1246
    %v1248 = vsel %vm1242, %v1247, %v1220
    %v1249 = vsel %vm1243, %v1247, %v1221
    %v1250 = vsel %vm1244, %v1247, %v1222
    %v1251 = vsel %vm1245, %v1247, %v1223
    %s1252 = sld [smem:[#allocation4 + $0xaa]]
    %v1253 = vstv %s1252
    %v1254 = vsel %vm1242, %v1253, %v1226
    %v1255 = vsel %vm1243, %v1253, %v1227
    %v1256 = vsel %vm1244, %v1253, %v1228
    %v1257 = vsel %vm1245, %v1253, %v1229
    %s1258 = sld [smem:[#allocation4 + $0x12a]]
    %v1259 = vstv %s1258
    %v1260 = vsel %vm1242, %v1259, %v1232
    %v1261 = vsel %vm1243, %v1259, %v1233
    %v1262 = vsel %vm1244, %v1259, %v1234
    %v1263 = vsel %vm1245, %v1259, %v1235
    %s1264 = sld [smem:[#allocation4 + $0x1aa]]
    %v1265 = vstv %s1264
    %v1266 = vsel %vm1242, %v1265, %v1238
    %v1267 = vsel %vm1243, %v1265, %v1239
    %v1268 = vsel %vm1244, %v1265, %v1240
    %v1269 = vsel %vm1245, %v1265, %v1241
    %vm1270 = vcmp.eq.s32.totalorder %v65, 43
    %vm1271 = vcmp.eq.s32.totalorder %v66, 43
    %vm1272 = vcmp.eq.s32.totalorder %v67, 43
    %vm1273 = vcmp.eq.s32.totalorder %v68, 43
    %s1274 = sld [smem:[#allocation4 + $0x2b]]
    %v1275 = vstv %s1274
    %v1276 = vsel %vm1270, %v1275, %v1248
    %v1277 = vsel %vm1271, %v1275, %v1249
    %v1278 = vsel %vm1272, %v1275, %v1250
    %v1279 = vsel %vm1273, %v1275, %v1251
    %s1280 = sld [smem:[#allocation4 + $0xab]]
    %v1281 = vstv %s1280
    %v1282 = vsel %vm1270, %v1281, %v1254
    %v1283 = vsel %vm1271, %v1281, %v1255
    %v1284 = vsel %vm1272, %v1281, %v1256
    %v1285 = vsel %vm1273, %v1281, %v1257
    %s1286 = sld [smem:[#allocation4 + $0x12b]]
    %v1287 = vstv %s1286
    %v1288 = vsel %vm1270, %v1287, %v1260
    %v1289 = vsel %vm1271, %v1287, %v1261
    %v1290 = vsel %vm1272, %v1287, %v1262
    %v1291 = vsel %vm1273, %v1287, %v1263
    %s1292 = sld [smem:[#allocation4 + $0x1ab]]
    %v1293 = vstv %s1292
    %v1294 = vsel %vm1270, %v1293, %v1266
    %v1295 = vsel %vm1271, %v1293, %v1267
    %v1296 = vsel %vm1272, %v1293, %v1268
    %v1297 = vsel %vm1273, %v1293, %v1269
    %vm1298 = vcmp.eq.s32.totalorder %v65, 44
    %vm1299 = vcmp.eq.s32.totalorder %v66, 44
    %vm1300 = vcmp.eq.s32.totalorder %v67, 44
    %vm1301 = vcmp.eq.s32.totalorder %v68, 44
    %s1302 = sld [smem:[#allocation4 + $0x2c]]
    %v1303 = vstv %s1302
    %v1304 = vsel %vm1298, %v1303, %v1276
    %v1305 = vsel %vm1299, %v1303, %v1277
    %v1306 = vsel %vm1300, %v1303, %v1278
    %v1307 = vsel %vm1301, %v1303, %v1279
    %s1308 = sld [smem:[#allocation4 + $0xac]]
    %v1309 = vstv %s1308
    %v1310 = vsel %vm1298, %v1309, %v1282
    %v1311 = vsel %vm1299, %v1309, %v1283
    %v1312 = vsel %vm1300, %v1309, %v1284
    %v1313 = vsel %vm1301, %v1309, %v1285
    %s1314 = sld [smem:[#allocation4 + $0x12c]]
    %v1315 = vstv %s1314
    %v1316 = vsel %vm1298, %v1315, %v1288
    %v1317 = vsel %vm1299, %v1315, %v1289
    %v1318 = vsel %vm1300, %v1315, %v1290
    %v1319 = vsel %vm1301, %v1315, %v1291
    %s1320 = sld [smem:[#allocation4 + $0x1ac]]
    %v1321 = vstv %s1320
    %v1322 = vsel %vm1298, %v1321, %v1294
    %v1323 = vsel %vm1299, %v1321, %v1295
    %v1324 = vsel %vm1300, %v1321, %v1296
    %v1325 = vsel %vm1301, %v1321, %v1297
    %vm1326 = vcmp.eq.s32.totalorder %v65, 45
    %vm1327 = vcmp.eq.s32.totalorder %v66, 45
    %vm1328 = vcmp.eq.s32.totalorder %v67, 45
    %vm1329 = vcmp.eq.s32.totalorder %v68, 45
    %s1330 = sld [smem:[#allocation4 + $0x2d]]
    %v1331 = vstv %s1330
    %v1332 = vsel %vm1326, %v1331, %v1304
    %v1333 = vsel %vm1327, %v1331, %v1305
    %v1334 = vsel %vm1328, %v1331, %v1306
    %v1335 = vsel %vm1329, %v1331, %v1307
    %s1336 = sld [smem:[#allocation4 + $0xad]]
    %v1337 = vstv %s1336
    %v1338 = vsel %vm1326, %v1337, %v1310
    %v1339 = vsel %vm1327, %v1337, %v1311
    %v1340 = vsel %vm1328, %v1337, %v1312
    %v1341 = vsel %vm1329, %v1337, %v1313
    %s1342 = sld [smem:[#allocation4 + $0x12d]]
    %v1343 = vstv %s1342
    %v1344 = vsel %vm1326, %v1343, %v1316
    %v1345 = vsel %vm1327, %v1343, %v1317
    %v1346 = vsel %vm1328, %v1343, %v1318
    %v1347 = vsel %vm1329, %v1343, %v1319
    %s1348 = sld [smem:[#allocation4 + $0x1ad]]
    %v1349 = vstv %s1348
    %v1350 = vsel %vm1326, %v1349, %v1322
    %v1351 = vsel %vm1327, %v1349, %v1323
    %v1352 = vsel %vm1328, %v1349, %v1324
    %v1353 = vsel %vm1329, %v1349, %v1325
    %vm1354 = vcmp.eq.s32.totalorder %v65, 46
    %vm1355 = vcmp.eq.s32.totalorder %v66, 46
    %vm1356 = vcmp.eq.s32.totalorder %v67, 46
    %vm1357 = vcmp.eq.s32.totalorder %v68, 46
    %s1358 = sld [smem:[#allocation4 + $0x2e]]
    %v1359 = vstv %s1358
    %v1360 = vsel %vm1354, %v1359, %v1332
    %v1361 = vsel %vm1355, %v1359, %v1333
    %v1362 = vsel %vm1356, %v1359, %v1334
    %v1363 = vsel %vm1357, %v1359, %v1335
    %s1364 = sld [smem:[#allocation4 + $0xae]]
    %v1365 = vstv %s1364
    %v1366 = vsel %vm1354, %v1365, %v1338
    %v1367 = vsel %vm1355, %v1365, %v1339
    %v1368 = vsel %vm1356, %v1365, %v1340
    %v1369 = vsel %vm1357, %v1365, %v1341
    %s1370 = sld [smem:[#allocation4 + $0x12e]]
    %v1371 = vstv %s1370
    %v1372 = vsel %vm1354, %v1371, %v1344
    %v1373 = vsel %vm1355, %v1371, %v1345
    %v1374 = vsel %vm1356, %v1371, %v1346
    %v1375 = vsel %vm1357, %v1371, %v1347
    %s1376 = sld [smem:[#allocation4 + $0x1ae]]
    %v1377 = vstv %s1376
    %v1378 = vsel %vm1354, %v1377, %v1350
    %v1379 = vsel %vm1355, %v1377, %v1351
    %v1380 = vsel %vm1356, %v1377, %v1352
    %v1381 = vsel %vm1357, %v1377, %v1353
    %vm1382 = vcmp.eq.s32.totalorder %v65, 47
    %vm1383 = vcmp.eq.s32.totalorder %v66, 47
    %vm1384 = vcmp.eq.s32.totalorder %v67, 47
    %vm1385 = vcmp.eq.s32.totalorder %v68, 47
    %s1386 = sld [smem:[#allocation4 + $0x2f]]
    %v1387 = vstv %s1386
    %v1388 = vsel %vm1382, %v1387, %v1360
    %v1389 = vsel %vm1383, %v1387, %v1361
    %v1390 = vsel %vm1384, %v1387, %v1362
    %v1391 = vsel %vm1385, %v1387, %v1363
    %s1392 = sld [smem:[#allocation4 + $0xaf]]
    %v1393 = vstv %s1392
    %v1394 = vsel %vm1382, %v1393, %v1366
    %v1395 = vsel %vm1383, %v1393, %v1367
    %v1396 = vsel %vm1384, %v1393, %v1368
    %v1397 = vsel %vm1385, %v1393, %v1369
    %s1398 = sld [smem:[#allocation4 + $0x12f]]
    %v1399 = vstv %s1398
    %v1400 = vsel %vm1382, %v1399, %v1372
    %v1401 = vsel %vm1383, %v1399, %v1373
    %v1402 = vsel %vm1384, %v1399, %v1374
    %v1403 = vsel %vm1385, %v1399, %v1375
    %s1404 = sld [smem:[#allocation4 + $0x1af]]
    %v1405 = vstv %s1404
    %v1406 = vsel %vm1382, %v1405, %v1378
    %v1407 = vsel %vm1383, %v1405, %v1379
    %v1408 = vsel %vm1384, %v1405, %v1380
    %v1409 = vsel %vm1385, %v1405, %v1381
    %vm1410 = vcmp.eq.s32.totalorder %v65, 48
    %vm1411 = vcmp.eq.s32.totalorder %v66, 48
    %vm1412 = vcmp.eq.s32.totalorder %v67, 48
    %vm1413 = vcmp.eq.s32.totalorder %v68, 48
    %s1414 = sld [smem:[#allocation4 + $0x30]]
    %v1415 = vstv %s1414
    %v1416 = vsel %vm1410, %v1415, %v1388
    %v1417 = vsel %vm1411, %v1415, %v1389
    %v1418 = vsel %vm1412, %v1415, %v1390
    %v1419 = vsel %vm1413, %v1415, %v1391
    %s1420 = sld [smem:[#allocation4 + $0xb0]]
    %v1421 = vstv %s1420
    %v1422 = vsel %vm1410, %v1421, %v1394
    %v1423 = vsel %vm1411, %v1421, %v1395
    %v1424 = vsel %vm1412, %v1421, %v1396
    %v1425 = vsel %vm1413, %v1421, %v1397
    %s1426 = sld [smem:[#allocation4 + $0x130]]
    %v1427 = vstv %s1426
    %v1428 = vsel %vm1410, %v1427, %v1400
    %v1429 = vsel %vm1411, %v1427, %v1401
    %v1430 = vsel %vm1412, %v1427, %v1402
    %v1431 = vsel %vm1413, %v1427, %v1403
    %s1432 = sld [smem:[#allocation4 + $0x1b0]]
    %v1433 = vstv %s1432
    %v1434 = vsel %vm1410, %v1433, %v1406
    %v1435 = vsel %vm1411, %v1433, %v1407
    %v1436 = vsel %vm1412, %v1433, %v1408
    %v1437 = vsel %vm1413, %v1433, %v1409
    %vm1438 = vcmp.eq.s32.totalorder %v65, 49
    %vm1439 = vcmp.eq.s32.totalorder %v66, 49
    %vm1440 = vcmp.eq.s32.totalorder %v67, 49
    %vm1441 = vcmp.eq.s32.totalorder %v68, 49
    %s1442 = sld [smem:[#allocation4 + $0x31]]
    %v1443 = vstv %s1442
    %v1444 = vsel %vm1438, %v1443, %v1416
    %v1445 = vsel %vm1439, %v1443, %v1417
    %v1446 = vsel %vm1440, %v1443, %v1418
    %v1447 = vsel %vm1441, %v1443, %v1419
    %s1448 = sld [smem:[#allocation4 + $0xb1]]
    %v1449 = vstv %s1448
    %v1450 = vsel %vm1438, %v1449, %v1422
    %v1451 = vsel %vm1439, %v1449, %v1423
    %v1452 = vsel %vm1440, %v1449, %v1424
    %v1453 = vsel %vm1441, %v1449, %v1425
    %s1454 = sld [smem:[#allocation4 + $0x131]]
    %v1455 = vstv %s1454
    %v1456 = vsel %vm1438, %v1455, %v1428
    %v1457 = vsel %vm1439, %v1455, %v1429
    %v1458 = vsel %vm1440, %v1455, %v1430
    %v1459 = vsel %vm1441, %v1455, %v1431
    %s1460 = sld [smem:[#allocation4 + $0x1b1]]
    %v1461 = vstv %s1460
    %v1462 = vsel %vm1438, %v1461, %v1434
    %v1463 = vsel %vm1439, %v1461, %v1435
    %v1464 = vsel %vm1440, %v1461, %v1436
    %v1465 = vsel %vm1441, %v1461, %v1437
    %vm1466 = vcmp.eq.s32.totalorder %v65, 50
    %vm1467 = vcmp.eq.s32.totalorder %v66, 50
    %vm1468 = vcmp.eq.s32.totalorder %v67, 50
    %vm1469 = vcmp.eq.s32.totalorder %v68, 50
    %s1470 = sld [smem:[#allocation4 + $0x32]]
    %v1471 = vstv %s1470
    %v1472 = vsel %vm1466, %v1471, %v1444
    %v1473 = vsel %vm1467, %v1471, %v1445
    %v1474 = vsel %vm1468, %v1471, %v1446
    %v1475 = vsel %vm1469, %v1471, %v1447
    %s1476 = sld [smem:[#allocation4 + $0xb2]]
    %v1477 = vstv %s1476
    %v1478 = vsel %vm1466, %v1477, %v1450
    %v1479 = vsel %vm1467, %v1477, %v1451
    %v1480 = vsel %vm1468, %v1477, %v1452
    %v1481 = vsel %vm1469, %v1477, %v1453
    %s1482 = sld [smem:[#allocation4 + $0x132]]
    %v1483 = vstv %s1482
    %v1484 = vsel %vm1466, %v1483, %v1456
    %v1485 = vsel %vm1467, %v1483, %v1457
    %v1486 = vsel %vm1468, %v1483, %v1458
    %v1487 = vsel %vm1469, %v1483, %v1459
    %s1488 = sld [smem:[#allocation4 + $0x1b2]]
    %v1489 = vstv %s1488
    %v1490 = vsel %vm1466, %v1489, %v1462
    %v1491 = vsel %vm1467, %v1489, %v1463
    %v1492 = vsel %vm1468, %v1489, %v1464
    %v1493 = vsel %vm1469, %v1489, %v1465
    %vm1494 = vcmp.eq.s32.totalorder %v65, 51
    %vm1495 = vcmp.eq.s32.totalorder %v66, 51
    %vm1496 = vcmp.eq.s32.totalorder %v67, 51
    %vm1497 = vcmp.eq.s32.totalorder %v68, 51
    %s1498 = sld [smem:[#allocation4 + $0x33]]
    %v1499 = vstv %s1498
    %v1500 = vsel %vm1494, %v1499, %v1472
    %v1501 = vsel %vm1495, %v1499, %v1473
    %v1502 = vsel %vm1496, %v1499, %v1474
    %v1503 = vsel %vm1497, %v1499, %v1475
    %s1504 = sld [smem:[#allocation4 + $0xb3]]
    %v1505 = vstv %s1504
    %v1506 = vsel %vm1494, %v1505, %v1478
    %v1507 = vsel %vm1495, %v1505, %v1479
    %v1508 = vsel %vm1496, %v1505, %v1480
    %v1509 = vsel %vm1497, %v1505, %v1481
    %s1510 = sld [smem:[#allocation4 + $0x133]]
    %v1511 = vstv %s1510
    %v1512 = vsel %vm1494, %v1511, %v1484
    %v1513 = vsel %vm1495, %v1511, %v1485
    %v1514 = vsel %vm1496, %v1511, %v1486
    %v1515 = vsel %vm1497, %v1511, %v1487
    %s1516 = sld [smem:[#allocation4 + $0x1b3]]
    %v1517 = vstv %s1516
    %v1518 = vsel %vm1494, %v1517, %v1490
    %v1519 = vsel %vm1495, %v1517, %v1491
    %v1520 = vsel %vm1496, %v1517, %v1492
    %v1521 = vsel %vm1497, %v1517, %v1493
    %vm1522 = vcmp.eq.s32.totalorder %v65, 52
    %vm1523 = vcmp.eq.s32.totalorder %v66, 52
    %vm1524 = vcmp.eq.s32.totalorder %v67, 52
    %vm1525 = vcmp.eq.s32.totalorder %v68, 52
    %s1526 = sld [smem:[#allocation4 + $0x34]]
    %v1527 = vstv %s1526
    %v1528 = vsel %vm1522, %v1527, %v1500
    %v1529 = vsel %vm1523, %v1527, %v1501
    %v1530 = vsel %vm1524, %v1527, %v1502
    %v1531 = vsel %vm1525, %v1527, %v1503
    %s1532 = sld [smem:[#allocation4 + $0xb4]]
    %v1533 = vstv %s1532
    %v1534 = vsel %vm1522, %v1533, %v1506
    %v1535 = vsel %vm1523, %v1533, %v1507
    %v1536 = vsel %vm1524, %v1533, %v1508
    %v1537 = vsel %vm1525, %v1533, %v1509
    %s1538 = sld [smem:[#allocation4 + $0x134]]
    %v1539 = vstv %s1538
    %v1540 = vsel %vm1522, %v1539, %v1512
    %v1541 = vsel %vm1523, %v1539, %v1513
    %v1542 = vsel %vm1524, %v1539, %v1514
    %v1543 = vsel %vm1525, %v1539, %v1515
    %s1544 = sld [smem:[#allocation4 + $0x1b4]]
    %v1545 = vstv %s1544
    %v1546 = vsel %vm1522, %v1545, %v1518
    %v1547 = vsel %vm1523, %v1545, %v1519
    %v1548 = vsel %vm1524, %v1545, %v1520
    %v1549 = vsel %vm1525, %v1545, %v1521
    %vm1550 = vcmp.eq.s32.totalorder %v65, 53
    %vm1551 = vcmp.eq.s32.totalorder %v66, 53
    %vm1552 = vcmp.eq.s32.totalorder %v67, 53
    %vm1553 = vcmp.eq.s32.totalorder %v68, 53
    %s1554 = sld [smem:[#allocation4 + $0x35]]
    %v1555 = vstv %s1554
    %v1556 = vsel %vm1550, %v1555, %v1528
    %v1557 = vsel %vm1551, %v1555, %v1529
    %v1558 = vsel %vm1552, %v1555, %v1530
    %v1559 = vsel %vm1553, %v1555, %v1531
    %s1560 = sld [smem:[#allocation4 + $0xb5]]
    %v1561 = vstv %s1560
    %v1562 = vsel %vm1550, %v1561, %v1534
    %v1563 = vsel %vm1551, %v1561, %v1535
    %v1564 = vsel %vm1552, %v1561, %v1536
    %v1565 = vsel %vm1553, %v1561, %v1537
    %s1566 = sld [smem:[#allocation4 + $0x135]]
    %v1567 = vstv %s1566
    %v1568 = vsel %vm1550, %v1567, %v1540
    %v1569 = vsel %vm1551, %v1567, %v1541
    %v1570 = vsel %vm1552, %v1567, %v1542
    %v1571 = vsel %vm1553, %v1567, %v1543
    %s1572 = sld [smem:[#allocation4 + $0x1b5]]
    %v1573 = vstv %s1572
    %v1574 = vsel %vm1550, %v1573, %v1546
    %v1575 = vsel %vm1551, %v1573, %v1547
    %v1576 = vsel %vm1552, %v1573, %v1548
    %v1577 = vsel %vm1553, %v1573, %v1549
    %vm1578 = vcmp.eq.s32.totalorder %v65, 54
    %vm1579 = vcmp.eq.s32.totalorder %v66, 54
    %vm1580 = vcmp.eq.s32.totalorder %v67, 54
    %vm1581 = vcmp.eq.s32.totalorder %v68, 54
    %s1582 = sld [smem:[#allocation4 + $0x36]]
    %v1583 = vstv %s1582
    %v1584 = vsel %vm1578, %v1583, %v1556
    %v1585 = vsel %vm1579, %v1583, %v1557
    %v1586 = vsel %vm1580, %v1583, %v1558
    %v1587 = vsel %vm1581, %v1583, %v1559
    %s1588 = sld [smem:[#allocation4 + $0xb6]]
    %v1589 = vstv %s1588
    %v1590 = vsel %vm1578, %v1589, %v1562
    %v1591 = vsel %vm1579, %v1589, %v1563
    %v1592 = vsel %vm1580, %v1589, %v1564
    %v1593 = vsel %vm1581, %v1589, %v1565
    %s1594 = sld [smem:[#allocation4 + $0x136]]
    %v1595 = vstv %s1594
    %v1596 = vsel %vm1578, %v1595, %v1568
    %v1597 = vsel %vm1579, %v1595, %v1569
    %v1598 = vsel %vm1580, %v1595, %v1570
    %v1599 = vsel %vm1581, %v1595, %v1571
    %s1600 = sld [smem:[#allocation4 + $0x1b6]]
    %v1601 = vstv %s1600
    %v1602 = vsel %vm1578, %v1601, %v1574
    %v1603 = vsel %vm1579, %v1601, %v1575
    %v1604 = vsel %vm1580, %v1601, %v1576
    %v1605 = vsel %vm1581, %v1601, %v1577
    %vm1606 = vcmp.eq.s32.totalorder %v65, 55
    %vm1607 = vcmp.eq.s32.totalorder %v66, 55
    %vm1608 = vcmp.eq.s32.totalorder %v67, 55
    %vm1609 = vcmp.eq.s32.totalorder %v68, 55
    %s1610 = sld [smem:[#allocation4 + $0x37]]
    %v1611 = vstv %s1610
    %v1612 = vsel %vm1606, %v1611, %v1584
    %v1613 = vsel %vm1607, %v1611, %v1585
    %v1614 = vsel %vm1608, %v1611, %v1586
    %v1615 = vsel %vm1609, %v1611, %v1587
    %s1616 = sld [smem:[#allocation4 + $0xb7]]
    %v1617 = vstv %s1616
    %v1618 = vsel %vm1606, %v1617, %v1590
    %v1619 = vsel %vm1607, %v1617, %v1591
    %v1620 = vsel %vm1608, %v1617, %v1592
    %v1621 = vsel %vm1609, %v1617, %v1593
    %s1622 = sld [smem:[#allocation4 + $0x137]]
    %v1623 = vstv %s1622
    %v1624 = vsel %vm1606, %v1623, %v1596
    %v1625 = vsel %vm1607, %v1623, %v1597
    %v1626 = vsel %vm1608, %v1623, %v1598
    %v1627 = vsel %vm1609, %v1623, %v1599
    %s1628 = sld [smem:[#allocation4 + $0x1b7]]
    %v1629 = vstv %s1628
    %v1630 = vsel %vm1606, %v1629, %v1602
    %v1631 = vsel %vm1607, %v1629, %v1603
    %v1632 = vsel %vm1608, %v1629, %v1604
    %v1633 = vsel %vm1609, %v1629, %v1605
    %vm1634 = vcmp.eq.s32.totalorder %v65, 56
    %vm1635 = vcmp.eq.s32.totalorder %v66, 56
    %vm1636 = vcmp.eq.s32.totalorder %v67, 56
    %vm1637 = vcmp.eq.s32.totalorder %v68, 56
    %s1638 = sld [smem:[#allocation4 + $0x38]]
    %v1639 = vstv %s1638
    %v1640 = vsel %vm1634, %v1639, %v1612
    %v1641 = vsel %vm1635, %v1639, %v1613
    %v1642 = vsel %vm1636, %v1639, %v1614
    %v1643 = vsel %vm1637, %v1639, %v1615
    %s1644 = sld [smem:[#allocation4 + $0xb8]]
    %v1645 = vstv %s1644
    %v1646 = vsel %vm1634, %v1645, %v1618
    %v1647 = vsel %vm1635, %v1645, %v1619
    %v1648 = vsel %vm1636, %v1645, %v1620
    %v1649 = vsel %vm1637, %v1645, %v1621
    %s1650 = sld [smem:[#allocation4 + $0x138]]
    %v1651 = vstv %s1650
    %v1652 = vsel %vm1634, %v1651, %v1624
    %v1653 = vsel %vm1635, %v1651, %v1625
    %v1654 = vsel %vm1636, %v1651, %v1626
    %v1655 = vsel %vm1637, %v1651, %v1627
    %s1656 = sld [smem:[#allocation4 + $0x1b8]]
    %v1657 = vstv %s1656
    %v1658 = vsel %vm1634, %v1657, %v1630
    %v1659 = vsel %vm1635, %v1657, %v1631
    %v1660 = vsel %vm1636, %v1657, %v1632
    %v1661 = vsel %vm1637, %v1657, %v1633
    %vm1662 = vcmp.eq.s32.totalorder %v65, 57
    %vm1663 = vcmp.eq.s32.totalorder %v66, 57
    %vm1664 = vcmp.eq.s32.totalorder %v67, 57
    %vm1665 = vcmp.eq.s32.totalorder %v68, 57
    %s1666 = sld [smem:[#allocation4 + $0x39]]
    %v1667 = vstv %s1666
    %v1668 = vsel %vm1662, %v1667, %v1640
    %v1669 = vsel %vm1663, %v1667, %v1641
    %v1670 = vsel %vm1664, %v1667, %v1642
    %v1671 = vsel %vm1665, %v1667, %v1643
    %s1672 = sld [smem:[#allocation4 + $0xb9]]
    %v1673 = vstv %s1672
    %v1674 = vsel %vm1662, %v1673, %v1646
    %v1675 = vsel %vm1663, %v1673, %v1647
    %v1676 = vsel %vm1664, %v1673, %v1648
    %v1677 = vsel %vm1665, %v1673, %v1649
    %s1678 = sld [smem:[#allocation4 + $0x139]]
    %v1679 = vstv %s1678
    %v1680 = vsel %vm1662, %v1679, %v1652
    %v1681 = vsel %vm1663, %v1679, %v1653
    %v1682 = vsel %vm1664, %v1679, %v1654
    %v1683 = vsel %vm1665, %v1679, %v1655
    %s1684 = sld [smem:[#allocation4 + $0x1b9]]
    %v1685 = vstv %s1684
    %v1686 = vsel %vm1662, %v1685, %v1658
    %v1687 = vsel %vm1663, %v1685, %v1659
    %v1688 = vsel %vm1664, %v1685, %v1660
    %v1689 = vsel %vm1665, %v1685, %v1661
    %vm1690 = vcmp.eq.s32.totalorder %v65, 58
    %vm1691 = vcmp.eq.s32.totalorder %v66, 58
    %vm1692 = vcmp.eq.s32.totalorder %v67, 58
    %vm1693 = vcmp.eq.s32.totalorder %v68, 58
    %s1694 = sld [smem:[#allocation4 + $0x3a]]
    %v1695 = vstv %s1694
    %v1696 = vsel %vm1690, %v1695, %v1668
    %v1697 = vsel %vm1691, %v1695, %v1669
    %v1698 = vsel %vm1692, %v1695, %v1670
    %v1699 = vsel %vm1693, %v1695, %v1671
    %s1700 = sld [smem:[#allocation4 + $0xba]]
    %v1701 = vstv %s1700
    %v1702 = vsel %vm1690, %v1701, %v1674
    %v1703 = vsel %vm1691, %v1701, %v1675
    %v1704 = vsel %vm1692, %v1701, %v1676
    %v1705 = vsel %vm1693, %v1701, %v1677
    %s1706 = sld [smem:[#allocation4 + $0x13a]]
    %v1707 = vstv %s1706
    %v1708 = vsel %vm1690, %v1707, %v1680
    %v1709 = vsel %vm1691, %v1707, %v1681
    %v1710 = vsel %vm1692, %v1707, %v1682
    %v1711 = vsel %vm1693, %v1707, %v1683
    %s1712 = sld [smem:[#allocation4 + $0x1ba]]
    %v1713 = vstv %s1712
    %v1714 = vsel %vm1690, %v1713, %v1686
    %v1715 = vsel %vm1691, %v1713, %v1687
    %v1716 = vsel %vm1692, %v1713, %v1688
    %v1717 = vsel %vm1693, %v1713, %v1689
    %vm1718 = vcmp.eq.s32.totalorder %v65, 59
    %vm1719 = vcmp.eq.s32.totalorder %v66, 59
    %vm1720 = vcmp.eq.s32.totalorder %v67, 59
    %vm1721 = vcmp.eq.s32.totalorder %v68, 59
    %s1722 = sld [smem:[#allocation4 + $0x3b]]
    %v1723 = vstv %s1722
    %v1724 = vsel %vm1718, %v1723, %v1696
    %v1725 = vsel %vm1719, %v1723, %v1697
    %v1726 = vsel %vm1720, %v1723, %v1698
    %v1727 = vsel %vm1721, %v1723, %v1699
    %s1728 = sld [smem:[#allocation4 + $0xbb]]
    %v1729 = vstv %s1728
    %v1730 = vsel %vm1718, %v1729, %v1702
    %v1731 = vsel %vm1719, %v1729, %v1703
    %v1732 = vsel %vm1720, %v1729, %v1704
    %v1733 = vsel %vm1721, %v1729, %v1705
    %s1734 = sld [smem:[#allocation4 + $0x13b]]
    %v1735 = vstv %s1734
    %v1736 = vsel %vm1718, %v1735, %v1708
    %v1737 = vsel %vm1719, %v1735, %v1709
    %v1738 = vsel %vm1720, %v1735, %v1710
    %v1739 = vsel %vm1721, %v1735, %v1711
    %s1740 = sld [smem:[#allocation4 + $0x1bb]]
    %v1741 = vstv %s1740
    %v1742 = vsel %vm1718, %v1741, %v1714
    %v1743 = vsel %vm1719, %v1741, %v1715
    %v1744 = vsel %vm1720, %v1741, %v1716
    %v1745 = vsel %vm1721, %v1741, %v1717
    %vm1746 = vcmp.eq.s32.totalorder %v65, 60
    %vm1747 = vcmp.eq.s32.totalorder %v66, 60
    %vm1748 = vcmp.eq.s32.totalorder %v67, 60
    %vm1749 = vcmp.eq.s32.totalorder %v68, 60
    %s1750 = sld [smem:[#allocation4 + $0x3c]]
    %v1751 = vstv %s1750
    %v1752 = vsel %vm1746, %v1751, %v1724
    %v1753 = vsel %vm1747, %v1751, %v1725
    %v1754 = vsel %vm1748, %v1751, %v1726
    %v1755 = vsel %vm1749, %v1751, %v1727
    %s1756 = sld [smem:[#allocation4 + $0xbc]]
    %v1757 = vstv %s1756
    %v1758 = vsel %vm1746, %v1757, %v1730
    %v1759 = vsel %vm1747, %v1757, %v1731
    %v1760 = vsel %vm1748, %v1757, %v1732
    %v1761 = vsel %vm1749, %v1757, %v1733
    %s1762 = sld [smem:[#allocation4 + $0x13c]]
    %v1763 = vstv %s1762
    %v1764 = vsel %vm1746, %v1763, %v1736
    %v1765 = vsel %vm1747, %v1763, %v1737
    %v1766 = vsel %vm1748, %v1763, %v1738
    %v1767 = vsel %vm1749, %v1763, %v1739
    %s1768 = sld [smem:[#allocation4 + $0x1bc]]
    %v1769 = vstv %s1768
    %v1770 = vsel %vm1746, %v1769, %v1742
    %v1771 = vsel %vm1747, %v1769, %v1743
    %v1772 = vsel %vm1748, %v1769, %v1744
    %v1773 = vsel %vm1749, %v1769, %v1745
    %vm1774 = vcmp.eq.s32.totalorder %v65, 61
    %vm1775 = vcmp.eq.s32.totalorder %v66, 61
    %vm1776 = vcmp.eq.s32.totalorder %v67, 61
    %vm1777 = vcmp.eq.s32.totalorder %v68, 61
    %s1778 = sld [smem:[#allocation4 + $0x3d]]
    %v1779 = vstv %s1778
    %v1780 = vsel %vm1774, %v1779, %v1752
    %v1781 = vsel %vm1775, %v1779, %v1753
    %v1782 = vsel %vm1776, %v1779, %v1754
    %v1783 = vsel %vm1777, %v1779, %v1755
    %s1784 = sld [smem:[#allocation4 + $0xbd]]
    %v1785 = vstv %s1784
    %v1786 = vsel %vm1774, %v1785, %v1758
    %v1787 = vsel %vm1775, %v1785, %v1759
    %v1788 = vsel %vm1776, %v1785, %v1760
    %v1789 = vsel %vm1777, %v1785, %v1761
    %s1790 = sld [smem:[#allocation4 + $0x13d]]
    %v1791 = vstv %s1790
    %v1792 = vsel %vm1774, %v1791, %v1764
    %v1793 = vsel %vm1775, %v1791, %v1765
    %v1794 = vsel %vm1776, %v1791, %v1766
    %v1795 = vsel %vm1777, %v1791, %v1767
    %s1796 = sld [smem:[#allocation4 + $0x1bd]]
    %v1797 = vstv %s1796
    %v1798 = vsel %vm1774, %v1797, %v1770
    %v1799 = vsel %vm1775, %v1797, %v1771
    %v1800 = vsel %vm1776, %v1797, %v1772
    %v1801 = vsel %vm1777, %v1797, %v1773
    %vm1802 = vcmp.eq.s32.totalorder %v65, 62
    %vm1803 = vcmp.eq.s32.totalorder %v66, 62
    %vm1804 = vcmp.eq.s32.totalorder %v67, 62
    %vm1805 = vcmp.eq.s32.totalorder %v68, 62
    %s1806 = sld [smem:[#allocation4 + $0x3e]]
    %v1807 = vstv %s1806
    %v1808 = vsel %vm1802, %v1807, %v1780
    %v1809 = vsel %vm1803, %v1807, %v1781
    %v1810 = vsel %vm1804, %v1807, %v1782
    %v1811 = vsel %vm1805, %v1807, %v1783
    %s1812 = sld [smem:[#allocation4 + $0xbe]]
    %v1813 = vstv %s1812
    %v1814 = vsel %vm1802, %v1813, %v1786
    %v1815 = vsel %vm1803, %v1813, %v1787
    %v1816 = vsel %vm1804, %v1813, %v1788
    %v1817 = vsel %vm1805, %v1813, %v1789
    %s1818 = sld [smem:[#allocation4 + $0x13e]]
    %v1819 = vstv %s1818
    %v1820 = vsel %vm1802, %v1819, %v1792
    %v1821 = vsel %vm1803, %v1819, %v1793
    %v1822 = vsel %vm1804, %v1819, %v1794
    %v1823 = vsel %vm1805, %v1819, %v1795
    %s1824 = sld [smem:[#allocation4 + $0x1be]]
    %v1825 = vstv %s1824
    %v1826 = vsel %vm1802, %v1825, %v1798
    %v1827 = vsel %vm1803, %v1825, %v1799
    %v1828 = vsel %vm1804, %v1825, %v1800
    %v1829 = vsel %vm1805, %v1825, %v1801
    %v1830 = vmul.f32 %v1814, %v82
    %v1831 = vmul.f32 %v1815, %v83
    %v1832 = vmul.f32 %v1816, %v84
    %v1833 = vmul.f32 %v1817, %v85
    %v1834 = vadd.f32 %v1808, %v1830
    %v1835 = vadd.f32 %v1809, %v1831
    %v1836 = vadd.f32 %v1810, %v1832
    %v1837 = vadd.f32 %v1811, %v1833
    %v1838 = vmul.f32 %v1826, %v82
    %v1839 = vmul.f32 %v1827, %v83
    %v1840 = vmul.f32 %v1828, %v84
    %v1841 = vmul.f32 %v1829, %v85
    %v1842 = vadd.f32 %v1820, %v1838
    %v1843 = vadd.f32 %v1821, %v1839
    %v1844 = vadd.f32 %v1822, %v1840
    %v1845 = vadd.f32 %v1823, %v1841
    %v1846 = vrcp.pop %v1834
    %v1847 = vmul.f32 %v1842, %v1846
    %v1848 = vrcp.pop %v1835
    %v1849 = vmul.f32 %v1843, %v1848
    %v1850 = vrcp.pop %v1836
    %v1851 = vmul.f32 %v1844, %v1850
    %v1852 = vrcp.pop %v1837
    %v1853 = vmul.f32 %v1845, %v1852
    %v1854 = vmul.f32 %v1847, %v43
    %v1855 = vmul.f32 %v1849, %v44
    %v1856 = vmul.f32 %v1851, %v45
    %v1857 = vmul.f32 %v1853, %v46
    %v1858 = vsub.f32 0.0, %v1834
    %v1859 = vsub.f32 0.0, %v1835
    %v1860 = vsub.f32 0.0, %v1836
    %v1861 = vsub.f32 0.0, %v1837
    %v1862 = vstv %s39
    %v1863 = vmul.f32 %v1858, %v1862
    %v1864 = vmul.f32 %v1859, %v1862
    %v1865 = vmul.f32 %v1860, %v1862
    %v1866 = vmul.f32 %v1861, %v1862
    %v1867 = vmul.f32 %v1863, 1.442695
    %v1868 = vpow.pop %v1867
    %v1869 = vmul.f32 %v1864, 1.442695
    %v1870 = vpow.pop %v1869
    %v1871 = vmul.f32 %v1865, 1.442695
    %v1872 = vpow.pop %v1871
    %v1873 = vmul.f32 %v1866, 1.442695
    %v1874 = vpow.pop %v1873
    %v1875 = vsub.f32 1.0, %v1868
    %v1876 = vsub.f32 1.0, %v1870
    %v1877 = vsub.f32 1.0, %v1872
    %v1878 = vsub.f32 1.0, %v1874
    %v1879 = vmul.f32 %v1854, %v1875
    %v1880 = vmul.f32 %v1855, %v1876
    %v1881 = vmul.f32 %v1856, %v1877
    %v1882 = vmul.f32 %v1857, %v1878
    %1883 = vst [vmem:[%s3] sm:$0xff] %v1879
    %1884 = vst [vmem:[%s3 + $0x8] sm:$0xff] %v1880
    %1885 = vst [vmem:[%s3 + $0x10] sm:$0xff] %v1881
    %1886 = vst [vmem:[%s3 + $0x18] sm:$0xff] %v1882
    // Predicated region
    $region22: #{scintillator_response.1} parent=1 // pred_check
      _
    $region23: #{scintillator_response.1} parent=1 // pred_check_branch
      %1888 = sbr.rel (0) target = $region25
    $region24: #{scintillator_response.1} parent=1 // pred_region
      _
    $region25: #{scintillator_response.1} parent=1 // pred_fallthru
      _
    // Predicated region
    $region26: #{scintillator_response.1} parent=1 // pred_check
      _
    $region27: #{scintillator_response.1} parent=1 // pred_check_branch
      %1890 = sbr.rel (0) target = $region29
    $region28: #{scintillator_response.1} parent=1 // pred_region
      _
    $region29: #{scintillator_response.1} parent=1 // pred_fallthru
      _
    %1891 = vsyncpa [#allocation3], 1
    %1892 = vsyncpa [#allocation5], 1

</llo_original>
